<compile_context>
chip_gen: v6e
topology: v6e:2x2x1
jax: 0.10.0
libtpu: 0.0.40
codegen_flags: <defaults>
</compile_context>

<pallas_src>
import functools

import jax
import jax.numpy as jnp
from jax import lax
from jax.experimental import pallas as pl
from jax.experimental.pallas import tpu as pltpu


def _round_up(x, m):
    return ((x + m - 1) // m) * m


# ----------------------------- Pallas kernel ---------------------------------

def _fused_conv_lrelu_kernel(xs_ref, w_ref, b_ref, o_ref, *, nb, m_rows, shifts):
    """Fused conv(k=4,s=2,p=1) + bias + LeakyReLU(0.2) on space-to-depth input.

    xs_ref : (nb, S, 4*Cin)       bf16  row-flattened, zero-padded s2d images
    w_ref  : (4, 4*Cin, tn)       bf16  one (4*Cin, tn) weight per 2x2 tap
    b_ref  : (1, tn)              f32
    o_ref  : (nb, m_rows, tn)     bf16  rows p = ho*Ws + wo (wo == Ws-1 is a throwaway column)
    """
    bias = b_ref[...]                                     # (1, tn) f32, hoisted out of the loop
    for ii in range(nb):                                  # static unroll over images in the block
        acc = None
        for t, s in enumerate(shifts):                    # 4 taps: (bh, bw) -> shift bh*Ws + bw
            lhs = xs_ref[ii, pl.ds(s, m_rows), :]         # (m_rows, 4*Cin) bf16, VMEM slice
            d = jnp.dot(lhs, w_ref[t, :, :],
                        preferred_element_type=jnp.float32)
            acc = d if acc is None else acc + d
        y = acc + bias                                    # f32
        o_ref[ii, :, :] = jnp.where(y > 0.0, y, 0.2 * y).astype(o_ref.dtype)


# ----------------------------- Conv layer wrapper ------------------------------

def _pick_nb(n, s_rows, c4, m_rows, cout_p, cap=16, budget_bytes=8 << 20):
    """Images per grid block: bounded by a VMEM budget and an unroll cap; must divide n."""
    per_img = 2 * 2 * (s_rows * c4 + m_rows * cout_p)     # bf16, double-buffered in + out
    nb = max(1, min(n, cap, budget_bytes // max(per_img, 1)))
    while n % nb:
        nb -= 1
    return nb


def conv4s2p1_lrelu(x, w4, bias_p, cout):
    """leaky_relu(conv2d(x, w, b, k=4, s=2, p=1), 0.2) with im2col fused into the kernel.

    x      : (N, H, W, Cin) bf16 NHWC (H, W even)
    w4     : (4, 4*Cin, Cout_p) bf16   packed weights (tap-major), Cout_p = round_up(cout, 128)
    bias_p : (1, Cout_p) f32
    -> (N, H//2, W//2, cout) bf16
    """
    N, H, W, Cin = x.shape
    assert H % 2 == 0 and W % 2 == 0, (H, W)
    Ho, Wo = H // 2, W // 2
    Hs, Ws = Ho + 1, Wo + 1
    C4 = 4 * Cin
    assert w4.shape[0] == 4 and w4.shape[1] == C4, w4.shape
    cout_p = w4.shape[-1]
    m_rows = Ho * Ws                                      # valid rows ho*Ws+wo, wo<Wo; wo==Wo is junk
    S = _round_up(Hs * Ws + 1, 8)                         # +1 row so every tap slice stays in-bounds

    # Pad by 1 and space-to-depth (block 2): k=4,s=2,p=1 conv -> k=2,s=1 conv on (Hs, Ws, 4*Cin),
    # then flatten rows so the kernel only needs 2-D shifted slices.  All in bf16, ~1x traffic.
    xp = jnp.pad(x, ((0, 0), (1, 1), (1, 1), (0, 0)))
    xs = xp.reshape(N, Hs, 2, Ws, 2, Cin).transpose(0, 1, 3, 2, 4, 5).reshape(N, Hs * Ws, C4)
    xs = jnp.pad(xs, ((0, 0), (0, S - Hs * Ws), (0, 0)))

    tn = 256 if cout_p % 256 == 0 else 128                # lane-dense, >=2 cout blocks for megacore
    nb = _pick_nb(N, S, C4, m_rows, cout_p)
    grid = (N // nb, cout_p // tn)

    kernel = functools.partial(_fused_conv_lrelu_kernel, nb=nb, m_rows=m_rows,
                               shifts=(0, 1, Ws, Ws + 1))
    out = pl.pallas_call(
        kernel,
        out_shape=jax.ShapeDtypeStruct((N, m_rows, cout_p), jnp.bfloat16),
        grid_spec=pltpu.PrefetchScalarGridSpec(
            num_scalar_prefetch=0,
            grid=grid,
            in_specs=[
                pl.BlockSpec((nb, S, C4), lambda i, j: (i, 0, 0)),   # constant in j -> no re-DMA
                pl.BlockSpec((4, C4, tn), lambda i, j: (0, 0, j)),
                pl.BlockSpec((1, tn), lambda i, j: (0, j)),
            ],
            out_specs=pl.BlockSpec((nb, m_rows, tn), lambda i, j: (i, 0, j)),
        ),
        compiler_params=pltpu.CompilerParams(
            dimension_semantics=("parallel", "parallel"),
            vmem_limit_bytes=48 << 20,   # fits under v7x's 64 MiB physical; v5e/v6e have 128 MiB
        ),
    )(xs, w4, bias_p)

    # Drop the throwaway column (wo == Wo) and the zero-padded output channels; reshape is free.
    return out.reshape(N, Ho, Ws, cout_p)[:, :, :Wo, :cout]


# ----------------------------- Parameter init / packing ------------------------

def _spectral_normalize(w, n_power_iter=5):
    """Deterministic stand-in for torch.nn.utils.spectral_norm: W / sigma_max(W_mat)."""
    # TODO(synk): torch keeps persistent random u/v and does 1 power iteration per forward;
    #             this deterministic init-time normalization is numerically close but not identical.
    cout = w.shape[0]
    w_mat = w.reshape(cout, -1)
    v = jnp.ones((w_mat.shape[1],), jnp.float32)
    v = v / jnp.linalg.norm(v)
    u = w_mat @ v
    for _ in range(n_power_iter):
        u = w_mat @ v
        u = u / (jnp.linalg.norm(u) + 1e-12)
        v = w_mat.T @ u
        v = v / (jnp.linalg.norm(v) + 1e-12)
    sigma = u @ (w_mat @ v)
    return w / sigma


def init_params(key, d=8):
    """Conv stack 3->d->2d->4d->8d, all k=4,s=2,p=1. Returns raw (OIHW weight, bias) pairs."""
    dims = [(3, d), (d, 2 * d), (2 * d, 4 * d), (4 * d, 8 * d)]
    params = []
    for (cin, cout) in dims:
        key, kw_, kb_ = jax.random.split(key, 3)
        w = 0.02 * jax.random.normal(kw_, (cout, cin, 4, 4), jnp.float32)
        b = 0.02 * jax.random.normal(kb_, (cout,), jnp.float32)
        params.append((_spectral_normalize(w), b))
    return params


def pack_params(raw_params):
    """One-time repack: OIHW f32 -> (4, 4*Cin, Cout_p) bf16 tap-major weights + (1, Cout_p) f32 bias."""
    packed, couts = [], []
    for (w, b) in raw_params:
        cout, cin, kh, kw = w.shape
        assert kh == 4 and kw == 4
        cout_p = _round_up(cout, 128)
        # OIHW -> (kh, kw, ci, co) -> (bh, dh, bw, dw, ci, co) -> (bh, bw, dh, dw, ci, co)
        # -> (t=2*bh+bw, c4=(2*dh+dw)*Cin+ci, co): matches the space-to-depth channel order.
        w4 = (w.transpose(2, 3, 1, 0)
               .reshape(2, 2, 2, 2, cin, cout)
               .transpose(0, 2, 1, 3, 4, 5)
               .reshape(4, 4 * cin, cout))
        w4 = jnp.pad(w4, ((0, 0), (0, 0), (0, cout_p - cout))).astype(jnp.bfloat16)
        bp = jnp.pad(b.astype(jnp.float32), (0, cout_p - cout)).reshape(1, cout_p)
        packed.append((w4, bp))
        couts.append(cout)
    return tuple(packed), tuple(couts)


# ----------------------------- Forward pass ------------------------------------

@functools.partial(jax.jit, static_argnums=(2,))
def feature_extractor_forward(x_nchw, packed_params, couts):
    x = jnp.transpose(x_nchw, (0, 2, 3, 1)).astype(jnp.bfloat16)   # NCHW->NHWC + bf16, once
    for (w4, bp), cout in zip(packed_params, couts):
        x = conv4s2p1_lrelu(x, w4, bp, cout)
    return jnp.transpose(x, (0, 3, 1, 2)).astype(jnp.float32)      # NHWC->NCHW, once


# ----------------------------- Reference check ---------------------------------

def _ref_forward(x_nchw, raw_params):
    # Same numerics as the kernel path: bf16 operands/activations, f32 accumulation + bias + lrelu.
    x = x_nchw.astype(jnp.bfloat16)
    for (w, b) in raw_params:
        y = lax.conv_general_dilated(
            x, w.astype(jnp.bfloat16),
            window_strides=(2, 2), padding=((1, 1), (1, 1)),
            dimension_numbers=('NCHW', 'OIHW', 'NCHW'),
            preferred_element_type=jnp.float32)
        y = y + b.reshape(1, -1, 1, 1)
        x = jnp.where(y > 0, y, 0.2 * y).astype(jnp.bfloat16)
    return x.astype(jnp.float32)


if __name__ == "__main__":
    key = jax.random.PRNGKey(0)
    kx, kp = jax.random.split(key)

    d = 8                                                     # scaled-down d=128
    x = jax.random.normal(kx, (2, 3, 16, 16), jnp.float32)    # NCHW, small CIFAR-like
    raw_params = init_params(kp, d=d)
    packed_params, couts = pack_params(raw_params)

    out = feature_extractor_forward(x, packed_params, couts)
    out = jax.block_until_ready(out)

    ref = _ref_forward(x, raw_params)
    assert out.shape == (2, 8 * d, 1, 1), out.shape
    err = float(jnp.max(jnp.abs(out - ref)))
    assert jnp.allclose(out, ref, atol=2e-2, rtol=2e-2), f"mismatch vs XLA conv reference, max|diff|={err}"

    print("KERNEL_OK")
</pallas_src>

<mosaic_0001>
module attributes {stable_mosaic.version = 11 : i64} {
  func.func @_fused_conv_lrelu_kernel(%arg0: i32, %arg1: i32, %arg2: memref<2x88x12xbf16, #tpu.memory_space<vmem>>, %arg3: memref<4x12x128xbf16, #tpu.memory_space<vmem>>, %arg4: memref<1x128xf32, #tpu.memory_space<vmem>>, %arg5: memref<2x72x128xbf16, #tpu.memory_space<vmem>>) attributes {dimension_semantics = [#tpu.dimension_semantics<parallel>, #tpu.dimension_semantics<parallel>], iteration_bounds = array<i64: 1, 1>, scalar_prefetch = 0 : i64, scratch_operands = 0 : i64, tpu.core_type = #tpu.core_type<tc>, window_params = [{transform_indices = @transform_0, window_bounds = array<i64: 2, 88, 12>}, {transform_indices = @transform_1, window_bounds = array<i64: 4, 12, 128>}, {transform_indices = @transform_2, window_bounds = array<i64: 1, 128>}, {transform_indices = @transform_3, window_bounds = array<i64: 2, 72, 128>}]} {
    %c0 = arith.constant 0 : index
    %c0_0 = arith.constant 0 : index
    %0 = vector.load %arg4[%c0, %c0_0] : memref<1x128xf32, #tpu.memory_space<vmem>>, vector<1x128xf32>
    %c0_1 = arith.constant 0 : index
    %c0_2 = arith.constant 0 : index
    %c0_3 = arith.constant 0 : index
    %1 = vector.load %arg2[%c0_1, %c0_2, %c0_3] : memref<2x88x12xbf16, #tpu.memory_space<vmem>>, vector<1x72x12xbf16>
    %2 = vector.shape_cast %1 : vector<1x72x12xbf16> to vector<72x12xbf16>
    %c0_4 = arith.constant 0 : index
    %c0_5 = arith.constant 0 : index
    %c0_6 = arith.constant 0 : index
    %3 = vector.load %arg3[%c0_4, %c0_5, %c0_6] : memref<4x12x128xbf16, #tpu.memory_space<vmem>>, vector<1x12x128xbf16>
    %4 = vector.shape_cast %3 : vector<1x12x128xbf16> to vector<12x128xbf16>
    %cst = arith.constant dense<0.000000e+00> : vector<72x128xf32>
    %5 = tpu.matmul %2, %4, %cst {dimension_numbers = #tpu.dot_dimension_numbers<[1], [0], [0], [1], [0, 0, 1, 1], [], []>} : vector<72x12xbf16>, vector<12x128xbf16>, vector<72x128xf32> -> vector<72x128xf32>
    %c0_7 = arith.constant 0 : index
    %c1 = arith.constant 1 : index
    %c0_8 = arith.constant 0 : index
    %6 = vector.load %arg2[%c0_7, %c1, %c0_8] : memref<2x88x12xbf16, #tpu.memory_space<vmem>>, vector<1x72x12xbf16>
    %7 = vector.shape_cast %6 : vector<1x72x12xbf16> to vector<72x12xbf16>
    %c1_9 = arith.constant 1 : index
    %c0_10 = arith.constant 0 : index
    %c0_11 = arith.constant 0 : index
    %8 = vector.load %arg3[%c1_9, %c0_10, %c0_11] : memref<4x12x128xbf16, #tpu.memory_space<vmem>>, vector<1x12x128xbf16>
    %9 = vector.shape_cast %8 : vector<1x12x128xbf16> to vector<12x128xbf16>
    %cst_12 = arith.constant dense<0.000000e+00> : vector<72x128xf32>
    %10 = tpu.matmul %7, %9, %cst_12 {dimension_numbers = #tpu.dot_dimension_numbers<[1], [0], [0], [1], [0, 0, 1, 1], [], []>} : vector<72x12xbf16>, vector<12x128xbf16>, vector<72x128xf32> -> vector<72x128xf32>
    %11 = arith.addf %5, %10 : vector<72x128xf32>
    %c0_13 = arith.constant 0 : index
    %c9 = arith.constant 9 : index
    %c0_14 = arith.constant 0 : index
    %12 = vector.load %arg2[%c0_13, %c9, %c0_14] : memref<2x88x12xbf16, #tpu.memory_space<vmem>>, vector<1x72x12xbf16>
    %13 = vector.shape_cast %12 : vector<1x72x12xbf16> to vector<72x12xbf16>
    %c2 = arith.constant 2 : index
    %c0_15 = arith.constant 0 : index
    %c0_16 = arith.constant 0 : index
    %14 = vector.load %arg3[%c2, %c0_15, %c0_16] : memref<4x12x128xbf16, #tpu.memory_space<vmem>>, vector<1x12x128xbf16>
    %15 = vector.shape_cast %14 : vector<1x12x128xbf16> to vector<12x128xbf16>
    %cst_17 = arith.constant dense<0.000000e+00> : vector<72x128xf32>
    %16 = tpu.matmul %13, %15, %cst_17 {dimension_numbers = #tpu.dot_dimension_numbers<[1], [0], [0], [1], [0, 0, 1, 1], [], []>} : vector<72x12xbf16>, vector<12x128xbf16>, vector<72x128xf32> -> vector<72x128xf32>
    %17 = arith.addf %11, %16 : vector<72x128xf32>
    %c0_18 = arith.constant 0 : index
    %c10 = arith.constant 10 : index
    %c0_19 = arith.constant 0 : index
    %18 = vector.load %arg2[%c0_18, %c10, %c0_19] : memref<2x88x12xbf16, #tpu.memory_space<vmem>>, vector<1x72x12xbf16>
    %19 = vector.shape_cast %18 : vector<1x72x12xbf16> to vector<72x12xbf16>
    %c3 = arith.constant 3 : index
    %c0_20 = arith.constant 0 : index
    %c0_21 = arith.constant 0 : index
    %20 = vector.load %arg3[%c3, %c0_20, %c0_21] : memref<4x12x128xbf16, #tpu.memory_space<vmem>>, vector<1x12x128xbf16>
    %21 = vector.shape_cast %20 : vector<1x12x128xbf16> to vector<12x128xbf16>
    %cst_22 = arith.constant dense<0.000000e+00> : vector<72x128xf32>
    %22 = tpu.matmul %19, %21, %cst_22 {dimension_numbers = #tpu.dot_dimension_numbers<[1], [0], [0], [1], [0, 0, 1, 1], [], []>} : vector<72x12xbf16>, vector<12x128xbf16>, vector<72x128xf32> -> vector<72x128xf32>
    %23 = arith.addf %17, %22 : vector<72x128xf32>
    %24 = vector.broadcast %0 : vector<1x128xf32> to vector<72x128xf32>
    %25 = arith.addf %23, %24 : vector<72x128xf32>
    %cst_23 = arith.constant 0.000000e+00 : f32
    %26 = vector.broadcast %cst_23 : f32 to vector<72x128xf32>
    %27 = arith.cmpf ogt, %25, %26 : vector<72x128xf32>
    %cst_24 = arith.constant 2.000000e-01 : f32
    %28 = vector.broadcast %cst_24 : f32 to vector<72x128xf32>
    %29 = arith.mulf %28, %25 : vector<72x128xf32>
    %30 = arith.select %27, %25, %29 : vector<72x128xi1>, vector<72x128xf32>
    %31 = arith.truncf %30 : vector<72x128xf32> to vector<72x128xbf16>
    %c0_25 = arith.constant 0 : index
    %c0_26 = arith.constant 0 : index
    %c0_27 = arith.constant 0 : index
    %32 = vector.load %arg5[%c0_25, %c0_26, %c0_27] : memref<2x72x128xbf16, #tpu.memory_space<vmem>>, vector<1x72x128xbf16>
    %33 = vector.shape_cast %32 : vector<1x72x128xbf16> to vector<72x128xbf16>
    %34 = vector.shape_cast %31 : vector<72x128xbf16> to vector<1x72x128xbf16>
    tpu.vector_store %arg5[%c0_25, %c0_26, %c0_27], %34 {strides = array<i32>} : memref<2x72x128xbf16, #tpu.memory_space<vmem>>, vector<1x72x128xbf16>,
    %c1_28 = arith.constant 1 : index
    %c0_29 = arith.constant 0 : index
    %c0_30 = arith.constant 0 : index
    %35 = vector.load %arg2[%c1_28, %c0_29, %c0_30] : memref<2x88x12xbf16, #tpu.memory_space<vmem>>, vector<1x72x12xbf16>
    %36 = vector.shape_cast %35 : vector<1x72x12xbf16> to vector<72x12xbf16>
    %c0_31 = arith.constant 0 : index
    %c0_32 = arith.constant 0 : index
    %c0_33 = arith.constant 0 : index
    %37 = vector.load %arg3[%c0_31, %c0_32, %c0_33] : memref<4x12x128xbf16, #tpu.memory_space<vmem>>, vector<1x12x128xbf16>
    %38 = vector.shape_cast %37 : vector<1x12x128xbf16> to vector<12x128xbf16>
    %cst_34 = arith.constant dense<0.000000e+00> : vector<72x128xf32>
    %39 = tpu.matmul %36, %38, %cst_34 {dimension_numbers = #tpu.dot_dimension_numbers<[1], [0], [0], [1], [0, 0, 1, 1], [], []>} : vector<72x12xbf16>, vector<12x128xbf16>, vector<72x128xf32> -> vector<72x128xf32>
    %c1_35 = arith.constant 1 : index
    %c1_36 = arith.constant 1 : index
    %c0_37 = arith.constant 0 : index
    %40 = vector.load %arg2[%c1_35, %c1_36, %c0_37] : memref<2x88x12xbf16, #tpu.memory_space<vmem>>, vector<1x72x12xbf16>
    %41 = vector.shape_cast %40 : vector<1x72x12xbf16> to vector<72x12xbf16>
    %c1_38 = arith.constant 1 : index
    %c0_39 = arith.constant 0 : index
    %c0_40 = arith.constant 0 : index
    %42 = vector.load %arg3[%c1_38, %c0_39, %c0_40] : memref<4x12x128xbf16, #tpu.memory_space<vmem>>, vector<1x12x128xbf16>
    %43 = vector.shape_cast %42 : vector<1x12x128xbf16> to vector<12x128xbf16>
    %cst_41 = arith.constant dense<0.000000e+00> : vector<72x128xf32>
    %44 = tpu.matmul %41, %43, %cst_41 {dimension_numbers = #tpu.dot_dimension_numbers<[1], [0], [0], [1], [0, 0, 1, 1], [], []>} : vector<72x12xbf16>, vector<12x128xbf16>, vector<72x128xf32> -> vector<72x128xf32>
    %45 = arith.addf %39, %44 : vector<72x128xf32>
    %c1_42 = arith.constant 1 : index
    %c9_43 = arith.constant 9 : index
    %c0_44 = arith.constant 0 : index
    %46 = vector.load %arg2[%c1_42, %c9_43, %c0_44] : memref<2x88x12xbf16, #tpu.memory_space<vmem>>, vector<1x72x12xbf16>
    %47 = vector.shape_cast %46 : vector<1x72x12xbf16> to vector<72x12xbf16>
    %c2_45 = arith.constant 2 : index
    %c0_46 = arith.constant 0 : index
    %c0_47 = arith.constant 0 : index
    %48 = vector.load %arg3[%c2_45, %c0_46, %c0_47] : memref<4x12x128xbf16, #tpu.memory_space<vmem>>, vector<1x12x128xbf16>
    %49 = vector.shape_cast %48 : vector<1x12x128xbf16> to vector<12x128xbf16>
    %cst_48 = arith.constant dense<0.000000e+00> : vector<72x128xf32>
    %50 = tpu.matmul %47, %49, %cst_48 {dimension_numbers = #tpu.dot_dimension_numbers<[1], [0], [0], [1], [0, 0, 1, 1], [], []>} : vector<72x12xbf16>, vector<12x128xbf16>, vector<72x128xf32> -> vector<72x128xf32>
    %51 = arith.addf %45, %50 : vector<72x128xf32>
    %c1_49 = arith.constant 1 : index
    %c10_50 = arith.constant 10 : index
    %c0_51 = arith.constant 0 : index
    %52 = vector.load %arg2[%c1_49, %c10_50, %c0_51] : memref<2x88x12xbf16, #tpu.memory_space<vmem>>, vector<1x72x12xbf16>
    %53 = vector.shape_cast %52 : vector<1x72x12xbf16> to vector<72x12xbf16>
    %c3_52 = arith.constant 3 : index
    %c0_53 = arith.constant 0 : index
    %c0_54 = arith.constant 0 : index
    %54 = vector.load %arg3[%c3_52, %c0_53, %c0_54] : memref<4x12x128xbf16, #tpu.memory_space<vmem>>, vector<1x12x128xbf16>
    %55 = vector.shape_cast %54 : vector<1x12x128xbf16> to vector<12x128xbf16>
    %cst_55 = arith.constant dense<0.000000e+00> : vector<72x128xf32>
    %56 = tpu.matmul %53, %55, %cst_55 {dimension_numbers = #tpu.dot_dimension_numbers<[1], [0], [0], [1], [0, 0, 1, 1], [], []>} : vector<72x12xbf16>, vector<12x128xbf16>, vector<72x128xf32> -> vector<72x128xf32>
    %57 = arith.addf %51, %56 : vector<72x128xf32>
    %58 = vector.broadcast %0 : vector<1x128xf32> to vector<72x128xf32>
    %59 = arith.addf %57, %58 : vector<72x128xf32>
    %cst_56 = arith.constant 0.000000e+00 : f32
    %60 = vector.broadcast %cst_56 : f32 to vector<72x128xf32>
    %61 = arith.cmpf ogt, %59, %60 : vector<72x128xf32>
    %cst_57 = arith.constant 2.000000e-01 : f32
    %62 = vector.broadcast %cst_57 : f32 to vector<72x128xf32>
    %63 = arith.mulf %62, %59 : vector<72x128xf32>
    %64 = arith.select %61, %59, %63 : vector<72x128xi1>, vector<72x128xf32>
    %65 = arith.truncf %64 : vector<72x128xf32> to vector<72x128xbf16>
    %c1_58 = arith.constant 1 : index
    %c0_59 = arith.constant 0 : index
    %c0_60 = arith.constant 0 : index
    %66 = vector.load %arg5[%c1_58, %c0_59, %c0_60] : memref<2x72x128xbf16, #tpu.memory_space<vmem>>, vector<1x72x128xbf16>
    %67 = vector.shape_cast %66 : vector<1x72x128xbf16> to vector<72x128xbf16>
    %68 = vector.shape_cast %65 : vector<72x128xbf16> to vector<1x72x128xbf16>
    tpu.vector_store %arg5[%c1_58, %c0_59, %c0_60], %68 {strides = array<i32>} : memref<2x72x128xbf16, #tpu.memory_space<vmem>>, vector<1x72x128xbf16>,
    return
  }
  func.func @transform_0(%arg0: i32, %arg1: i32) -> (i32, i32, i32) {
    %c0_i32 = arith.constant 0 : i32
    %c0_i32_0 = arith.constant 0 : i32
    %c0_i32_1 = arith.constant 0 : i32
    return %arg0, %c0_i32, %c0_i32_0 : i32, i32, i32
  }
  func.func @transform_1(%arg0: i32, %arg1: i32) -> (i32, i32, i32) {
    %c0_i32 = arith.constant 0 : i32
    %c0_i32_0 = arith.constant 0 : i32
    %c0_i32_1 = arith.constant 0 : i32
    return %c0_i32, %c0_i32_0, %arg1 : i32, i32, i32
  }
  func.func @transform_2(%arg0: i32, %arg1: i32) -> (i32, i32) {
    %c0_i32 = arith.constant 0 : i32
    %c0_i32_0 = arith.constant 0 : i32
    return %c0_i32, %arg1 : i32, i32
  }
  func.func @transform_3(%arg0: i32, %arg1: i32) -> (i32, i32, i32) {
    %c0_i32 = arith.constant 0 : i32
    %c0_i32_0 = arith.constant 0 : i32
    return %arg0, %c0_i32, %arg1 : i32, i32, i32
  }
}

module attributes {stable_mosaic.version = 11 : i64} {
  func.func @_fused_conv_lrelu_kernel(%arg0: i32, %arg1: i32, %arg2: memref<2x32x32xbf16, #tpu.memory_space<vmem>>, %arg3: memref<4x32x128xbf16, #tpu.memory_space<vmem>>, %arg4: memref<1x128xf32, #tpu.memory_space<vmem>>, %arg5: memref<2x20x128xbf16, #tpu.memory_space<vmem>>) attributes {dimension_semantics = [#tpu.dimension_semantics<parallel>, #tpu.dimension_semantics<parallel>], iteration_bounds = array<i64: 1, 1>, scalar_prefetch = 0 : i64, scratch_operands = 0 : i64, tpu.core_type = #tpu.core_type<tc>, window_params = [{transform_indices = @transform_0, window_bounds = array<i64: 2, 32, 32>}, {transform_indices = @transform_1, window_bounds = array<i64: 4, 32, 128>}, {transform_indices = @transform_2, window_bounds = array<i64: 1, 128>}, {transform_indices = @transform_3, window_bounds = array<i64: 2, 20, 128>}]} {
    %c0 = arith.constant 0 : index
    %c0_0 = arith.constant 0 : index
    %0 = vector.load %arg4[%c0, %c0_0] : memref<1x128xf32, #tpu.memory_space<vmem>>, vector<1x128xf32>
    %c0_1 = arith.constant 0 : index
    %c0_2 = arith.constant 0 : index
    %c0_3 = arith.constant 0 : index
    %1 = vector.load %arg2[%c0_1, %c0_2, %c0_3] : memref<2x32x32xbf16, #tpu.memory_space<vmem>>, vector<1x20x32xbf16>
    %2 = vector.shape_cast %1 : vector<1x20x32xbf16> to vector<20x32xbf16>
    %c0_4 = arith.constant 0 : index
    %c0_5 = arith.constant 0 : index
    %c0_6 = arith.constant 0 : index
    %3 = vector.load %arg3[%c0_4, %c0_5, %c0_6] : memref<4x32x128xbf16, #tpu.memory_space<vmem>>, vector<1x32x128xbf16>
    %4 = vector.shape_cast %3 : vector<1x32x128xbf16> to vector<32x128xbf16>
    %cst = arith.constant dense<0.000000e+00> : vector<20x128xf32>
    %5 = tpu.matmul %2, %4, %cst {dimension_numbers = #tpu.dot_dimension_numbers<[1], [0], [0], [1], [0, 0, 1, 1], [], []>} : vector<20x32xbf16>, vector<32x128xbf16>, vector<20x128xf32> -> vector<20x128xf32>
    %c0_7 = arith.constant 0 : index
    %c1 = arith.constant 1 : index
    %c0_8 = arith.constant 0 : index
    %6 = vector.load %arg2[%c0_7, %c1, %c0_8] : memref<2x32x32xbf16, #tpu.memory_space<vmem>>, vector<1x20x32xbf16>
    %7 = vector.shape_cast %6 : vector<1x20x32xbf16> to vector<20x32xbf16>
    %c1_9 = arith.constant 1 : index
    %c0_10 = arith.constant 0 : index
    %c0_11 = arith.constant 0 : index
    %8 = vector.load %arg3[%c1_9, %c0_10, %c0_11] : memref<4x32x128xbf16, #tpu.memory_space<vmem>>, vector<1x32x128xbf16>
    %9 = vector.shape_cast %8 : vector<1x32x128xbf16> to vector<32x128xbf16>
    %cst_12 = arith.constant dense<0.000000e+00> : vector<20x128xf32>
    %10 = tpu.matmul %7, %9, %cst_12 {dimension_numbers = #tpu.dot_dimension_numbers<[1], [0], [0], [1], [0, 0, 1, 1], [], []>} : vector<20x32xbf16>, vector<32x128xbf16>, vector<20x128xf32> -> vector<20x128xf32>
    %11 = arith.addf %5, %10 : vector<20x128xf32>
    %c0_13 = arith.constant 0 : index
    %c5 = arith.constant 5 : index
    %c0_14 = arith.constant 0 : index
    %12 = vector.load %arg2[%c0_13, %c5, %c0_14] : memref<2x32x32xbf16, #tpu.memory_space<vmem>>, vector<1x20x32xbf16>
    %13 = vector.shape_cast %12 : vector<1x20x32xbf16> to vector<20x32xbf16>
    %c2 = arith.constant 2 : index
    %c0_15 = arith.constant 0 : index
    %c0_16 = arith.constant 0 : index
    %14 = vector.load %arg3[%c2, %c0_15, %c0_16] : memref<4x32x128xbf16, #tpu.memory_space<vmem>>, vector<1x32x128xbf16>
    %15 = vector.shape_cast %14 : vector<1x32x128xbf16> to vector<32x128xbf16>
    %cst_17 = arith.constant dense<0.000000e+00> : vector<20x128xf32>
    %16 = tpu.matmul %13, %15, %cst_17 {dimension_numbers = #tpu.dot_dimension_numbers<[1], [0], [0], [1], [0, 0, 1, 1], [], []>} : vector<20x32xbf16>, vector<32x128xbf16>, vector<20x128xf32> -> vector<20x128xf32>
    %17 = arith.addf %11, %16 : vector<20x128xf32>
    %c0_18 = arith.constant 0 : index
    %c6 = arith.constant 6 : index
    %c0_19 = arith.constant 0 : index
    %18 = vector.load %arg2[%c0_18, %c6, %c0_19] : memref<2x32x32xbf16, #tpu.memory_space<vmem>>, vector<1x20x32xbf16>
    %19 = vector.shape_cast %18 : vector<1x20x32xbf16> to vector<20x32xbf16>
    %c3 = arith.constant 3 : index
    %c0_20 = arith.constant 0 : index
    %c0_21 = arith.constant 0 : index
    %20 = vector.load %arg3[%c3, %c0_20, %c0_21] : memref<4x32x128xbf16, #tpu.memory_space<vmem>>, vector<1x32x128xbf16>
    %21 = vector.shape_cast %20 : vector<1x32x128xbf16> to vector<32x128xbf16>
    %cst_22 = arith.constant dense<0.000000e+00> : vector<20x128xf32>
    %22 = tpu.matmul %19, %21, %cst_22 {dimension_numbers = #tpu.dot_dimension_numbers<[1], [0], [0], [1], [0, 0, 1, 1], [], []>} : vector<20x32xbf16>, vector<32x128xbf16>, vector<20x128xf32> -> vector<20x128xf32>
    %23 = arith.addf %17, %22 : vector<20x128xf32>
    %24 = vector.broadcast %0 : vector<1x128xf32> to vector<20x128xf32>
    %25 = arith.addf %23, %24 : vector<20x128xf32>
    %cst_23 = arith.constant 0.000000e+00 : f32
    %26 = vector.broadcast %cst_23 : f32 to vector<20x128xf32>
    %27 = arith.cmpf ogt, %25, %26 : vector<20x128xf32>
    %cst_24 = arith.constant 2.000000e-01 : f32
    %28 = vector.broadcast %cst_24 : f32 to vector<20x128xf32>
    %29 = arith.mulf %28, %25 : vector<20x128xf32>
    %30 = arith.select %27, %25, %29 : vector<20x128xi1>, vector<20x128xf32>
    %31 = arith.truncf %30 : vector<20x128xf32> to vector<20x128xbf16>
    %c0_25 = arith.constant 0 : index
    %c0_26 = arith.constant 0 : index
    %c0_27 = arith.constant 0 : index
    %32 = vector.load %arg5[%c0_25, %c0_26, %c0_27] : memref<2x20x128xbf16, #tpu.memory_space<vmem>>, vector<1x20x128xbf16>
    %33 = vector.shape_cast %32 : vector<1x20x128xbf16> to vector<20x128xbf16>
    %34 = vector.shape_cast %31 : vector<20x128xbf16> to vector<1x20x128xbf16>
    tpu.vector_store %arg5[%c0_25, %c0_26, %c0_27], %34 {strides = array<i32>} : memref<2x20x128xbf16, #tpu.memory_space<vmem>>, vector<1x20x128xbf16>,
    %c1_28 = arith.constant 1 : index
    %c0_29 = arith.constant 0 : index
    %c0_30 = arith.constant 0 : index
    %35 = vector.load %arg2[%c1_28, %c0_29, %c0_30] : memref<2x32x32xbf16, #tpu.memory_space<vmem>>, vector<1x20x32xbf16>
    %36 = vector.shape_cast %35 : vector<1x20x32xbf16> to vector<20x32xbf16>
    %c0_31 = arith.constant 0 : index
    %c0_32 = arith.constant 0 : index
    %c0_33 = arith.constant 0 : index
    %37 = vector.load %arg3[%c0_31, %c0_32, %c0_33] : memref<4x32x128xbf16, #tpu.memory_space<vmem>>, vector<1x32x128xbf16>
    %38 = vector.shape_cast %37 : vector<1x32x128xbf16> to vector<32x128xbf16>
    %cst_34 = arith.constant dense<0.000000e+00> : vector<20x128xf32>
    %39 = tpu.matmul %36, %38, %cst_34 {dimension_numbers = #tpu.dot_dimension_numbers<[1], [0], [0], [1], [0, 0, 1, 1], [], []>} : vector<20x32xbf16>, vector<32x128xbf16>, vector<20x128xf32> -> vector<20x128xf32>
    %c1_35 = arith.constant 1 : index
    %c1_36 = arith.constant 1 : index
    %c0_37 = arith.constant 0 : index
    %40 = vector.load %arg2[%c1_35, %c1_36, %c0_37] : memref<2x32x32xbf16, #tpu.memory_space<vmem>>, vector<1x20x32xbf16>
    %41 = vector.shape_cast %40 : vector<1x20x32xbf16> to vector<20x32xbf16>
    %c1_38 = arith.constant 1 : index
    %c0_39 = arith.constant 0 : index
    %c0_40 = arith.constant 0 : index
    %42 = vector.load %arg3[%c1_38, %c0_39, %c0_40] : memref<4x32x128xbf16, #tpu.memory_space<vmem>>, vector<1x32x128xbf16>
    %43 = vector.shape_cast %42 : vector<1x32x128xbf16> to vector<32x128xbf16>
    %cst_41 = arith.constant dense<0.000000e+00> : vector<20x128xf32>
    %44 = tpu.matmul %41, %43, %cst_41 {dimension_numbers = #tpu.dot_dimension_numbers<[1], [0], [0], [1], [0, 0, 1, 1], [], []>} : vector<20x32xbf16>, vector<32x128xbf16>, vector<20x128xf32> -> vector<20x128xf32>
    %45 = arith.addf %39, %44 : vector<20x128xf32>
    %c1_42 = arith.constant 1 : index
    %c5_43 = arith.constant 5 : index
    %c0_44 = arith.constant 0 : index
    %46 = vector.load %arg2[%c1_42, %c5_43, %c0_44] : memref<2x32x32xbf16, #tpu.memory_space<vmem>>, vector<1x20x32xbf16>
    %47 = vector.shape_cast %46 : vector<1x20x32xbf16> to vector<20x32xbf16>
    %c2_45 = arith.constant 2 : index
    %c0_46 = arith.constant 0 : index
    %c0_47 = arith.constant 0 : index
    %48 = vector.load %arg3[%c2_45, %c0_46, %c0_47] : memref<4x32x128xbf16, #tpu.memory_space<vmem>>, vector<1x32x128xbf16>
    %49 = vector.shape_cast %48 : vector<1x32x128xbf16> to vector<32x128xbf16>
    %cst_48 = arith.constant dense<0.000000e+00> : vector<20x128xf32>
    %50 = tpu.matmul %47, %49, %cst_48 {dimension_numbers = #tpu.dot_dimension_numbers<[1], [0], [0], [1], [0, 0, 1, 1], [], []>} : vector<20x32xbf16>, vector<32x128xbf16>, vector<20x128xf32> -> vector<20x128xf32>
    %51 = arith.addf %45, %50 : vector<20x128xf32>
    %c1_49 = arith.constant 1 : index
    %c6_50 = arith.constant 6 : index
    %c0_51 = arith.constant 0 : index
    %52 = vector.load %arg2[%c1_49, %c6_50, %c0_51] : memref<2x32x32xbf16, #tpu.memory_space<vmem>>, vector<1x20x32xbf16>
    %53 = vector.shape_cast %52 : vector<1x20x32xbf16> to vector<20x32xbf16>
    %c3_52 = arith.constant 3 : index
    %c0_53 = arith.constant 0 : index
    %c0_54 = arith.constant 0 : index
    %54 = vector.load %arg3[%c3_52, %c0_53, %c0_54] : memref<4x32x128xbf16, #tpu.memory_space<vmem>>, vector<1x32x128xbf16>
    %55 = vector.shape_cast %54 : vector<1x32x128xbf16> to vector<32x128xbf16>
    %cst_55 = arith.constant dense<0.000000e+00> : vector<20x128xf32>
    %56 = tpu.matmul %53, %55, %cst_55 {dimension_numbers = #tpu.dot_dimension_numbers<[1], [0], [0], [1], [0, 0, 1, 1], [], []>} : vector<20x32xbf16>, vector<32x128xbf16>, vector<20x128xf32> -> vector<20x128xf32>
    %57 = arith.addf %51, %56 : vector<20x128xf32>
    %58 = vector.broadcast %0 : vector<1x128xf32> to vector<20x128xf32>
    %59 = arith.addf %57, %58 : vector<20x128xf32>
    %cst_56 = arith.constant 0.000000e+00 : f32
    %60 = vector.broadcast %cst_56 : f32 to vector<20x128xf32>
    %61 = arith.cmpf ogt, %59, %60 : vector<20x128xf32>
    %cst_57 = arith.constant 2.000000e-01 : f32
    %62 = vector.broadcast %cst_57 : f32 to vector<20x128xf32>
    %63 = arith.mulf %62, %59 : vector<20x128xf32>
    %64 = arith.select %61, %59, %63 : vector<20x128xi1>, vector<20x128xf32>
    %65 = arith.truncf %64 : vector<20x128xf32> to vector<20x128xbf16>
    %c1_58 = arith.constant 1 : index
    %c0_59 = arith.constant 0 : index
    %c0_60 = arith.constant 0 : index
    %66 = vector.load %arg5[%c1_58, %c0_59, %c0_60] : memref<2x20x128xbf16, #tpu.memory_space<vmem>>, vector<1x20x128xbf16>
    %67 = vector.shape_cast %66 : vector<1x20x128xbf16> to vector<20x128xbf16>
    %68 = vector.shape_cast %65 : vector<20x128xbf16> to vector<1x20x128xbf16>
    tpu.vector_store %arg5[%c1_58, %c0_59, %c0_60], %68 {strides = array<i32>} : memref<2x20x128xbf16, #tpu.memory_space<vmem>>, vector<1x20x128xbf16>,
    return
  }
  func.func @transform_0(%arg0: i32, %arg1: i32) -> (i32, i32, i32) {
    %c0_i32 = arith.constant 0 : i32
    %c0_i32_0 = arith.constant 0 : i32
    %c0_i32_1 = arith.constant 0 : i32
    return %arg0, %c0_i32, %c0_i32_0 : i32, i32, i32
  }
  func.func @transform_1(%arg0: i32, %arg1: i32) -> (i32, i32, i32) {
    %c0_i32 = arith.constant 0 : i32
    %c0_i32_0 = arith.constant 0 : i32
    %c0_i32_1 = arith.constant 0 : i32
    return %c0_i32, %c0_i32_0, %arg1 : i32, i32, i32
  }
  func.func @transform_2(%arg0: i32, %arg1: i32) -> (i32, i32) {
    %c0_i32 = arith.constant 0 : i32
    %c0_i32_0 = arith.constant 0 : i32
    return %c0_i32, %arg1 : i32, i32
  }
  func.func @transform_3(%arg0: i32, %arg1: i32) -> (i32, i32, i32) {
    %c0_i32 = arith.constant 0 : i32
    %c0_i32_0 = arith.constant 0 : i32
    return %arg0, %c0_i32, %arg1 : i32, i32, i32
  }
}

module attributes {stable_mosaic.version = 11 : i64} {
  func.func @_fused_conv_lrelu_kernel(%arg0: i32, %arg1: i32, %arg2: memref<2x16x64xbf16, #tpu.memory_space<vmem>>, %arg3: memref<4x64x128xbf16, #tpu.memory_space<vmem>>, %arg4: memref<1x128xf32, #tpu.memory_space<vmem>>, %arg5: memref<2x6x128xbf16, #tpu.memory_space<vmem>>) attributes {dimension_semantics = [#tpu.dimension_semantics<parallel>, #tpu.dimension_semantics<parallel>], iteration_bounds = array<i64: 1, 1>, scalar_prefetch = 0 : i64, scratch_operands = 0 : i64, tpu.core_type = #tpu.core_type<tc>, window_params = [{transform_indices = @transform_0, window_bounds = array<i64: 2, 16, 64>}, {transform_indices = @transform_1, window_bounds = array<i64: 4, 64, 128>}, {transform_indices = @transform_2, window_bounds = array<i64: 1, 128>}, {transform_indices = @transform_3, window_bounds = array<i64: 2, 6, 128>}]} {
    %c0 = arith.constant 0 : index
    %c0_0 = arith.constant 0 : index
    %0 = vector.load %arg4[%c0, %c0_0] : memref<1x128xf32, #tpu.memory_space<vmem>>, vector<1x128xf32>
    %c0_1 = arith.constant 0 : index
    %c0_2 = arith.constant 0 : index
    %c0_3 = arith.constant 0 : index
    %1 = vector.load %arg2[%c0_1, %c0_2, %c0_3] : memref<2x16x64xbf16, #tpu.memory_space<vmem>>, vector<1x6x64xbf16>
    %2 = vector.shape_cast %1 : vector<1x6x64xbf16> to vector<6x64xbf16>
    %c0_4 = arith.constant 0 : index
    %c0_5 = arith.constant 0 : index
    %c0_6 = arith.constant 0 : index
    %3 = vector.load %arg3[%c0_4, %c0_5, %c0_6] : memref<4x64x128xbf16, #tpu.memory_space<vmem>>, vector<1x64x128xbf16>
    %4 = vector.shape_cast %3 : vector<1x64x128xbf16> to vector<64x128xbf16>
    %cst = arith.constant dense<0.000000e+00> : vector<6x128xf32>
    %5 = tpu.matmul %2, %4, %cst {dimension_numbers = #tpu.dot_dimension_numbers<[1], [0], [0], [1], [0, 0, 1, 1], [], []>} : vector<6x64xbf16>, vector<64x128xbf16>, vector<6x128xf32> -> vector<6x128xf32>
    %c0_7 = arith.constant 0 : index
    %c1 = arith.constant 1 : index
    %c0_8 = arith.constant 0 : index
    %6 = vector.load %arg2[%c0_7, %c1, %c0_8] : memref<2x16x64xbf16, #tpu.memory_space<vmem>>, vector<1x6x64xbf16>
    %7 = vector.shape_cast %6 : vector<1x6x64xbf16> to vector<6x64xbf16>
    %c1_9 = arith.constant 1 : index
    %c0_10 = arith.constant 0 : index
    %c0_11 = arith.constant 0 : index
    %8 = vector.load %arg3[%c1_9, %c0_10, %c0_11] : memref<4x64x128xbf16, #tpu.memory_space<vmem>>, vector<1x64x128xbf16>
    %9 = vector.shape_cast %8 : vector<1x64x128xbf16> to vector<64x128xbf16>
    %cst_12 = arith.constant dense<0.000000e+00> : vector<6x128xf32>
    %10 = tpu.matmul %7, %9, %cst_12 {dimension_numbers = #tpu.dot_dimension_numbers<[1], [0], [0], [1], [0, 0, 1, 1], [], []>} : vector<6x64xbf16>, vector<64x128xbf16>, vector<6x128xf32> -> vector<6x128xf32>
    %11 = arith.addf %5, %10 : vector<6x128xf32>
    %c0_13 = arith.constant 0 : index
    %c3 = arith.constant 3 : index
    %c0_14 = arith.constant 0 : index
    %12 = vector.load %arg2[%c0_13, %c3, %c0_14] : memref<2x16x64xbf16, #tpu.memory_space<vmem>>, vector<1x6x64xbf16>
    %13 = vector.shape_cast %12 : vector<1x6x64xbf16> to vector<6x64xbf16>
    %c2 = arith.constant 2 : index
    %c0_15 = arith.constant 0 : index
    %c0_16 = arith.constant 0 : index
    %14 = vector.load %arg3[%c2, %c0_15, %c0_16] : memref<4x64x128xbf16, #tpu.memory_space<vmem>>, vector<1x64x128xbf16>
    %15 = vector.shape_cast %14 : vector<1x64x128xbf16> to vector<64x128xbf16>
    %cst_17 = arith.constant dense<0.000000e+00> : vector<6x128xf32>
    %16 = tpu.matmul %13, %15, %cst_17 {dimension_numbers = #tpu.dot_dimension_numbers<[1], [0], [0], [1], [0, 0, 1, 1], [], []>} : vector<6x64xbf16>, vector<64x128xbf16>, vector<6x128xf32> -> vector<6x128xf32>
    %17 = arith.addf %11, %16 : vector<6x128xf32>
    %c0_18 = arith.constant 0 : index
    %c4 = arith.constant 4 : index
    %c0_19 = arith.constant 0 : index
    %18 = vector.load %arg2[%c0_18, %c4, %c0_19] : memref<2x16x64xbf16, #tpu.memory_space<vmem>>, vector<1x6x64xbf16>
    %19 = vector.shape_cast %18 : vector<1x6x64xbf16> to vector<6x64xbf16>
    %c3_20 = arith.constant 3 : index
    %c0_21 = arith.constant 0 : index
    %c0_22 = arith.constant 0 : index
    %20 = vector.load %arg3[%c3_20, %c0_21, %c0_22] : memref<4x64x128xbf16, #tpu.memory_space<vmem>>, vector<1x64x128xbf16>
    %21 = vector.shape_cast %20 : vector<1x64x128xbf16> to vector<64x128xbf16>
    %cst_23 = arith.constant dense<0.000000e+00> : vector<6x128xf32>
    %22 = tpu.matmul %19, %21, %cst_23 {dimension_numbers = #tpu.dot_dimension_numbers<[1], [0], [0], [1], [0, 0, 1, 1], [], []>} : vector<6x64xbf16>, vector<64x128xbf16>, vector<6x128xf32> -> vector<6x128xf32>
    %23 = arith.addf %17, %22 : vector<6x128xf32>
    %24 = vector.broadcast %0 : vector<1x128xf32> to vector<6x128xf32>
    %25 = arith.addf %23, %24 : vector<6x128xf32>
    %cst_24 = arith.constant 0.000000e+00 : f32
    %26 = vector.broadcast %cst_24 : f32 to vector<6x128xf32>
    %27 = arith.cmpf ogt, %25, %26 : vector<6x128xf32>
    %cst_25 = arith.constant 2.000000e-01 : f32
    %28 = vector.broadcast %cst_25 : f32 to vector<6x128xf32>
    %29 = arith.mulf %28, %25 : vector<6x128xf32>
    %30 = arith.select %27, %25, %29 : vector<6x128xi1>, vector<6x128xf32>
    %31 = arith.truncf %30 : vector<6x128xf32> to vector<6x128xbf16>
    %c0_26 = arith.constant 0 : index
    %c0_27 = arith.constant 0 : index
    %c0_28 = arith.constant 0 : index
    %32 = vector.load %arg5[%c0_26, %c0_27, %c0_28] : memref<2x6x128xbf16, #tpu.memory_space<vmem>>, vector<1x6x128xbf16>
    %33 = vector.shape_cast %32 : vector<1x6x128xbf16> to vector<6x128xbf16>
    %34 = vector.shape_cast %31 : vector<6x128xbf16> to vector<1x6x128xbf16>
    tpu.vector_store %arg5[%c0_26, %c0_27, %c0_28], %34 {strides = array<i32>} : memref<2x6x128xbf16, #tpu.memory_space<vmem>>, vector<1x6x128xbf16>,
    %c1_29 = arith.constant 1 : index
    %c0_30 = arith.constant 0 : index
    %c0_31 = arith.constant 0 : index
    %35 = vector.load %arg2[%c1_29, %c0_30, %c0_31] : memref<2x16x64xbf16, #tpu.memory_space<vmem>>, vector<1x6x64xbf16>
    %36 = vector.shape_cast %35 : vector<1x6x64xbf16> to vector<6x64xbf16>
    %c0_32 = arith.constant 0 : index
    %c0_33 = arith.constant 0 : index
    %c0_34 = arith.constant 0 : index
    %37 = vector.load %arg3[%c0_32, %c0_33, %c0_34] : memref<4x64x128xbf16, #tpu.memory_space<vmem>>, vector<1x64x128xbf16>
    %38 = vector.shape_cast %37 : vector<1x64x128xbf16> to vector<64x128xbf16>
    %cst_35 = arith.constant dense<0.000000e+00> : vector<6x128xf32>
    %39 = tpu.matmul %36, %38, %cst_35 {dimension_numbers = #tpu.dot_dimension_numbers<[1], [0], [0], [1], [0, 0, 1, 1], [], []>} : vector<6x64xbf16>, vector<64x128xbf16>, vector<6x128xf32> -> vector<6x128xf32>
    %c1_36 = arith.constant 1 : index
    %c1_37 = arith.constant 1 : index
    %c0_38 = arith.constant 0 : index
    %40 = vector.load %arg2[%c1_36, %c1_37, %c0_38] : memref<2x16x64xbf16, #tpu.memory_space<vmem>>, vector<1x6x64xbf16>
    %41 = vector.shape_cast %40 : vector<1x6x64xbf16> to vector<6x64xbf16>
    %c1_39 = arith.constant 1 : index
    %c0_40 = arith.constant 0 : index
    %c0_41 = arith.constant 0 : index
    %42 = vector.load %arg3[%c1_39, %c0_40, %c0_41] : memref<4x64x128xbf16, #tpu.memory_space<vmem>>, vector<1x64x128xbf16>
    %43 = vector.shape_cast %42 : vector<1x64x128xbf16> to vector<64x128xbf16>
    %cst_42 = arith.constant dense<0.000000e+00> : vector<6x128xf32>
    %44 = tpu.matmul %41, %43, %cst_42 {dimension_numbers = #tpu.dot_dimension_numbers<[1], [0], [0], [1], [0, 0, 1, 1], [], []>} : vector<6x64xbf16>, vector<64x128xbf16>, vector<6x128xf32> -> vector<6x128xf32>
    %45 = arith.addf %39, %44 : vector<6x128xf32>
    %c1_43 = arith.constant 1 : index
    %c3_44 = arith.constant 3 : index
    %c0_45 = arith.constant 0 : index
    %46 = vector.load %arg2[%c1_43, %c3_44, %c0_45] : memref<2x16x64xbf16, #tpu.memory_space<vmem>>, vector<1x6x64xbf16>
    %47 = vector.shape_cast %46 : vector<1x6x64xbf16> to vector<6x64xbf16>
    %c2_46 = arith.constant 2 : index
    %c0_47 = arith.constant 0 : index
    %c0_48 = arith.constant 0 : index
    %48 = vector.load %arg3[%c2_46, %c0_47, %c0_48] : memref<4x64x128xbf16, #tpu.memory_space<vmem>>, vector<1x64x128xbf16>
    %49 = vector.shape_cast %48 : vector<1x64x128xbf16> to vector<64x128xbf16>
    %cst_49 = arith.constant dense<0.000000e+00> : vector<6x128xf32>
    %50 = tpu.matmul %47, %49, %cst_49 {dimension_numbers = #tpu.dot_dimension_numbers<[1], [0], [0], [1], [0, 0, 1, 1], [], []>} : vector<6x64xbf16>, vector<64x128xbf16>, vector<6x128xf32> -> vector<6x128xf32>
    %51 = arith.addf %45, %50 : vector<6x128xf32>
    %c1_50 = arith.constant 1 : index
    %c4_51 = arith.constant 4 : index
    %c0_52 = arith.constant 0 : index
    %52 = vector.load %arg2[%c1_50, %c4_51, %c0_52] : memref<2x16x64xbf16, #tpu.memory_space<vmem>>, vector<1x6x64xbf16>
    %53 = vector.shape_cast %52 : vector<1x6x64xbf16> to vector<6x64xbf16>
    %c3_53 = arith.constant 3 : index
    %c0_54 = arith.constant 0 : index
    %c0_55 = arith.constant 0 : index
    %54 = vector.load %arg3[%c3_53, %c0_54, %c0_55] : memref<4x64x128xbf16, #tpu.memory_space<vmem>>, vector<1x64x128xbf16>
    %55 = vector.shape_cast %54 : vector<1x64x128xbf16> to vector<64x128xbf16>
    %cst_56 = arith.constant dense<0.000000e+00> : vector<6x128xf32>
    %56 = tpu.matmul %53, %55, %cst_56 {dimension_numbers = #tpu.dot_dimension_numbers<[1], [0], [0], [1], [0, 0, 1, 1], [], []>} : vector<6x64xbf16>, vector<64x128xbf16>, vector<6x128xf32> -> vector<6x128xf32>
    %57 = arith.addf %51, %56 : vector<6x128xf32>
    %58 = vector.broadcast %0 : vector<1x128xf32> to vector<6x128xf32>
    %59 = arith.addf %57, %58 : vector<6x128xf32>
    %cst_57 = arith.constant 0.000000e+00 : f32
    %60 = vector.broadcast %cst_57 : f32 to vector<6x128xf32>
    %61 = arith.cmpf ogt, %59, %60 : vector<6x128xf32>
    %cst_58 = arith.constant 2.000000e-01 : f32
    %62 = vector.broadcast %cst_58 : f32 to vector<6x128xf32>
    %63 = arith.mulf %62, %59 : vector<6x128xf32>
    %64 = arith.select %61, %59, %63 : vector<6x128xi1>, vector<6x128xf32>
    %65 = arith.truncf %64 : vector<6x128xf32> to vector<6x128xbf16>
    %c1_59 = arith.constant 1 : index
    %c0_60 = arith.constant 0 : index
    %c0_61 = arith.constant 0 : index
    %66 = vector.load %arg5[%c1_59, %c0_60, %c0_61] : memref<2x6x128xbf16, #tpu.memory_space<vmem>>, vector<1x6x128xbf16>
    %67 = vector.shape_cast %66 : vector<1x6x128xbf16> to vector<6x128xbf16>
    %68 = vector.shape_cast %65 : vector<6x128xbf16> to vector<1x6x128xbf16>
    tpu.vector_store %arg5[%c1_59, %c0_60, %c0_61], %68 {strides = array<i32>} : memref<2x6x128xbf16, #tpu.memory_space<vmem>>, vector<1x6x128xbf16>,
    return
  }
  func.func @transform_0(%arg0: i32, %arg1: i32) -> (i32, i32, i32) {
    %c0_i32 = arith.constant 0 : i32
    %c0_i32_0 = arith.constant 0 : i32
    %c0_i32_1 = arith.constant 0 : i32
    return %arg0, %c0_i32, %c0_i32_0 : i32, i32, i32
  }
  func.func @transform_1(%arg0: i32, %arg1: i32) -> (i32, i32, i32) {
    %c0_i32 = arith.constant 0 : i32
    %c0_i32_0 = arith.constant 0 : i32
    %c0_i32_1 = arith.constant 0 : i32
    return %c0_i32, %c0_i32_0, %arg1 : i32, i32, i32
  }
  func.func @transform_2(%arg0: i32, %arg1: i32) -> (i32, i32) {
    %c0_i32 = arith.constant 0 : i32
    %c0_i32_0 = arith.constant 0 : i32
    return %c0_i32, %arg1 : i32, i32
  }
  func.func @transform_3(%arg0: i32, %arg1: i32) -> (i32, i32, i32) {
    %c0_i32 = arith.constant 0 : i32
    %c0_i32_0 = arith.constant 0 : i32
    return %arg0, %c0_i32, %arg1 : i32, i32, i32
  }
}

module attributes {stable_mosaic.version = 11 : i64} {
  func.func @_fused_conv_lrelu_kernel(%arg0: i32, %arg1: i32, %arg2: memref<2x8x128xbf16, #tpu.memory_space<vmem>>, %arg3: memref<4x128x128xbf16, #tpu.memory_space<vmem>>, %arg4: memref<1x128xf32, #tpu.memory_space<vmem>>, %arg5: memref<2x2x128xbf16, #tpu.memory_space<vmem>>) attributes {dimension_semantics = [#tpu.dimension_semantics<parallel>, #tpu.dimension_semantics<parallel>], iteration_bounds = array<i64: 1, 1>, scalar_prefetch = 0 : i64, scratch_operands = 0 : i64, tpu.core_type = #tpu.core_type<tc>, window_params = [{transform_indices = @transform_0, window_bounds = array<i64: 2, 8, 128>}, {transform_indices = @transform_1, window_bounds = array<i64: 4, 128, 128>}, {transform_indices = @transform_2, window_bounds = array<i64: 1, 128>}, {transform_indices = @transform_3, window_bounds = array<i64: 2, 2, 128>}]} {
    %c0 = arith.constant 0 : index
    %c0_0 = arith.constant 0 : index
    %0 = vector.load %arg4[%c0, %c0_0] : memref<1x128xf32, #tpu.memory_space<vmem>>, vector<1x128xf32>
    %c0_1 = arith.constant 0 : index
    %c0_2 = arith.constant 0 : index
    %c0_3 = arith.constant 0 : index
    %1 = vector.load %arg2[%c0_1, %c0_2, %c0_3] : memref<2x8x128xbf16, #tpu.memory_space<vmem>>, vector<1x2x128xbf16>
    %2 = vector.shape_cast %1 : vector<1x2x128xbf16> to vector<2x128xbf16>
    %c0_4 = arith.constant 0 : index
    %c0_5 = arith.constant 0 : index
    %c0_6 = arith.constant 0 : index
    %3 = vector.load %arg3[%c0_4, %c0_5, %c0_6] : memref<4x128x128xbf16, #tpu.memory_space<vmem>>, vector<1x128x128xbf16>
    %4 = vector.shape_cast %3 : vector<1x128x128xbf16> to vector<128x128xbf16>
    %cst = arith.constant dense<0.000000e+00> : vector<2x128xf32>
    %5 = tpu.matmul %2, %4, %cst {dimension_numbers = #tpu.dot_dimension_numbers<[1], [0], [0], [1], [0, 0, 1, 1], [], []>} : vector<2x128xbf16>, vector<128x128xbf16>, vector<2x128xf32> -> vector<2x128xf32>
    %c0_7 = arith.constant 0 : index
    %c1 = arith.constant 1 : index
    %c0_8 = arith.constant 0 : index
    %6 = vector.load %arg2[%c0_7, %c1, %c0_8] : memref<2x8x128xbf16, #tpu.memory_space<vmem>>, vector<1x2x128xbf16>
    %7 = vector.shape_cast %6 : vector<1x2x128xbf16> to vector<2x128xbf16>
    %c1_9 = arith.constant 1 : index
    %c0_10 = arith.constant 0 : index
    %c0_11 = arith.constant 0 : index
    %8 = vector.load %arg3[%c1_9, %c0_10, %c0_11] : memref<4x128x128xbf16, #tpu.memory_space<vmem>>, vector<1x128x128xbf16>
    %9 = vector.shape_cast %8 : vector<1x128x128xbf16> to vector<128x128xbf16>
    %cst_12 = arith.constant dense<0.000000e+00> : vector<2x128xf32>
    %10 = tpu.matmul %7, %9, %cst_12 {dimension_numbers = #tpu.dot_dimension_numbers<[1], [0], [0], [1], [0, 0, 1, 1], [], []>} : vector<2x128xbf16>, vector<128x128xbf16>, vector<2x128xf32> -> vector<2x128xf32>
    %11 = arith.addf %5, %10 : vector<2x128xf32>
    %c0_13 = arith.constant 0 : index
    %c2 = arith.constant 2 : index
    %c0_14 = arith.constant 0 : index
    %12 = vector.load %arg2[%c0_13, %c2, %c0_14] : memref<2x8x128xbf16, #tpu.memory_space<vmem>>, vector<1x2x128xbf16>
    %13 = vector.shape_cast %12 : vector<1x2x128xbf16> to vector<2x128xbf16>
    %c2_15 = arith.constant 2 : index
    %c0_16 = arith.constant 0 : index
    %c0_17 = arith.constant 0 : index
    %14 = vector.load %arg3[%c2_15, %c0_16, %c0_17] : memref<4x128x128xbf16, #tpu.memory_space<vmem>>, vector<1x128x128xbf16>
    %15 = vector.shape_cast %14 : vector<1x128x128xbf16> to vector<128x128xbf16>
    %cst_18 = arith.constant dense<0.000000e+00> : vector<2x128xf32>
    %16 = tpu.matmul %13, %15, %cst_18 {dimension_numbers = #tpu.dot_dimension_numbers<[1], [0], [0], [1], [0, 0, 1, 1], [], []>} : vector<2x128xbf16>, vector<128x128xbf16>, vector<2x128xf32> -> vector<2x128xf32>
    %17 = arith.addf %11, %16 : vector<2x128xf32>
    %c0_19 = arith.constant 0 : index
    %c3 = arith.constant 3 : index
    %c0_20 = arith.constant 0 : index
    %18 = vector.load %arg2[%c0_19, %c3, %c0_20] : memref<2x8x128xbf16, #tpu.memory_space<vmem>>, vector<1x2x128xbf16>
    %19 = vector.shape_cast %18 : vector<1x2x128xbf16> to vector<2x128xbf16>
    %c3_21 = arith.constant 3 : index
    %c0_22 = arith.constant 0 : index
    %c0_23 = arith.constant 0 : index
    %20 = vector.load %arg3[%c3_21, %c0_22, %c0_23] : memref<4x128x128xbf16, #tpu.memory_space<vmem>>, vector<1x128x128xbf16>
    %21 = vector.shape_cast %20 : vector<1x128x128xbf16> to vector<128x128xbf16>
    %cst_24 = arith.constant dense<0.000000e+00> : vector<2x128xf32>
    %22 = tpu.matmul %19, %21, %cst_24 {dimension_numbers = #tpu.dot_dimension_numbers<[1], [0], [0], [1], [0, 0, 1, 1], [], []>} : vector<2x128xbf16>, vector<128x128xbf16>, vector<2x128xf32> -> vector<2x128xf32>
    %23 = arith.addf %17, %22 : vector<2x128xf32>
    %24 = vector.broadcast %0 : vector<1x128xf32> to vector<2x128xf32>
    %25 = arith.addf %23, %24 : vector<2x128xf32>
    %cst_25 = arith.constant 0.000000e+00 : f32
    %26 = vector.broadcast %cst_25 : f32 to vector<2x128xf32>
    %27 = arith.cmpf ogt, %25, %26 : vector<2x128xf32>
    %cst_26 = arith.constant 2.000000e-01 : f32
    %28 = vector.broadcast %cst_26 : f32 to vector<2x128xf32>
    %29 = arith.mulf %28, %25 : vector<2x128xf32>
    %30 = arith.select %27, %25, %29 : vector<2x128xi1>, vector<2x128xf32>
    %31 = arith.truncf %30 : vector<2x128xf32> to vector<2x128xbf16>
    %c0_27 = arith.constant 0 : index
    %c0_28 = arith.constant 0 : index
    %c0_29 = arith.constant 0 : index
    %32 = vector.load %arg5[%c0_27, %c0_28, %c0_29] : memref<2x2x128xbf16, #tpu.memory_space<vmem>>, vector<1x2x128xbf16>
    %33 = vector.shape_cast %32 : vector<1x2x128xbf16> to vector<2x128xbf16>
    %34 = vector.shape_cast %31 : vector<2x128xbf16> to vector<1x2x128xbf16>
    tpu.vector_store %arg5[%c0_27, %c0_28, %c0_29], %34 {strides = array<i32>} : memref<2x2x128xbf16, #tpu.memory_space<vmem>>, vector<1x2x128xbf16>,
    %c1_30 = arith.constant 1 : index
    %c0_31 = arith.constant 0 : index
    %c0_32 = arith.constant 0 : index
    %35 = vector.load %arg2[%c1_30, %c0_31, %c0_32] : memref<2x8x128xbf16, #tpu.memory_space<vmem>>, vector<1x2x128xbf16>
    %36 = vector.shape_cast %35 : vector<1x2x128xbf16> to vector<2x128xbf16>
    %c0_33 = arith.constant 0 : index
    %c0_34 = arith.constant 0 : index
    %c0_35 = arith.constant 0 : index
    %37 = vector.load %arg3[%c0_33, %c0_34, %c0_35] : memref<4x128x128xbf16, #tpu.memory_space<vmem>>, vector<1x128x128xbf16>
    %38 = vector.shape_cast %37 : vector<1x128x128xbf16> to vector<128x128xbf16>
    %cst_36 = arith.constant dense<0.000000e+00> : vector<2x128xf32>
    %39 = tpu.matmul %36, %38, %cst_36 {dimension_numbers = #tpu.dot_dimension_numbers<[1], [0], [0], [1], [0, 0, 1, 1], [], []>} : vector<2x128xbf16>, vector<128x128xbf16>, vector<2x128xf32> -> vector<2x128xf32>
    %c1_37 = arith.constant 1 : index
    %c1_38 = arith.constant 1 : index
    %c0_39 = arith.constant 0 : index
    %40 = vector.load %arg2[%c1_37, %c1_38, %c0_39] : memref<2x8x128xbf16, #tpu.memory_space<vmem>>, vector<1x2x128xbf16>
    %41 = vector.shape_cast %40 : vector<1x2x128xbf16> to vector<2x128xbf16>
    %c1_40 = arith.constant 1 : index
    %c0_41 = arith.constant 0 : index
    %c0_42 = arith.constant 0 : index
    %42 = vector.load %arg3[%c1_40, %c0_41, %c0_42] : memref<4x128x128xbf16, #tpu.memory_space<vmem>>, vector<1x128x128xbf16>
    %43 = vector.shape_cast %42 : vector<1x128x128xbf16> to vector<128x128xbf16>
    %cst_43 = arith.constant dense<0.000000e+00> : vector<2x128xf32>
    %44 = tpu.matmul %41, %43, %cst_43 {dimension_numbers = #tpu.dot_dimension_numbers<[1], [0], [0], [1], [0, 0, 1, 1], [], []>} : vector<2x128xbf16>, vector<128x128xbf16>, vector<2x128xf32> -> vector<2x128xf32>
    %45 = arith.addf %39, %44 : vector<2x128xf32>
    %c1_44 = arith.constant 1 : index
    %c2_45 = arith.constant 2 : index
    %c0_46 = arith.constant 0 : index
    %46 = vector.load %arg2[%c1_44, %c2_45, %c0_46] : memref<2x8x128xbf16, #tpu.memory_space<vmem>>, vector<1x2x128xbf16>
    %47 = vector.shape_cast %46 : vector<1x2x128xbf16> to vector<2x128xbf16>
    %c2_47 = arith.constant 2 : index
    %c0_48 = arith.constant 0 : index
    %c0_49 = arith.constant 0 : index
    %48 = vector.load %arg3[%c2_47, %c0_48, %c0_49] : memref<4x128x128xbf16, #tpu.memory_space<vmem>>, vector<1x128x128xbf16>
    %49 = vector.shape_cast %48 : vector<1x128x128xbf16> to vector<128x128xbf16>
    %cst_50 = arith.constant dense<0.000000e+00> : vector<2x128xf32>
    %50 = tpu.matmul %47, %49, %cst_50 {dimension_numbers = #tpu.dot_dimension_numbers<[1], [0], [0], [1], [0, 0, 1, 1], [], []>} : vector<2x128xbf16>, vector<128x128xbf16>, vector<2x128xf32> -> vector<2x128xf32>
    %51 = arith.addf %45, %50 : vector<2x128xf32>
    %c1_51 = arith.constant 1 : index
    %c3_52 = arith.constant 3 : index
    %c0_53 = arith.constant 0 : index
    %52 = vector.load %arg2[%c1_51, %c3_52, %c0_53] : memref<2x8x128xbf16, #tpu.memory_space<vmem>>, vector<1x2x128xbf16>
    %53 = vector.shape_cast %52 : vector<1x2x128xbf16> to vector<2x128xbf16>
    %c3_54 = arith.constant 3 : index
    %c0_55 = arith.constant 0 : index
    %c0_56 = arith.constant 0 : index
    %54 = vector.load %arg3[%c3_54, %c0_55, %c0_56] : memref<4x128x128xbf16, #tpu.memory_space<vmem>>, vector<1x128x128xbf16>
    %55 = vector.shape_cast %54 : vector<1x128x128xbf16> to vector<128x128xbf16>
    %cst_57 = arith.constant dense<0.000000e+00> : vector<2x128xf32>
    %56 = tpu.matmul %53, %55, %cst_57 {dimension_numbers = #tpu.dot_dimension_numbers<[1], [0], [0], [1], [0, 0, 1, 1], [], []>} : vector<2x128xbf16>, vector<128x128xbf16>, vector<2x128xf32> -> vector<2x128xf32>
    %57 = arith.addf %51, %56 : vector<2x128xf32>
    %58 = vector.broadcast %0 : vector<1x128xf32> to vector<2x128xf32>
    %59 = arith.addf %57, %58 : vector<2x128xf32>
    %cst_58 = arith.constant 0.000000e+00 : f32
    %60 = vector.broadcast %cst_58 : f32 to vector<2x128xf32>
    %61 = arith.cmpf ogt, %59, %60 : vector<2x128xf32>
    %cst_59 = arith.constant 2.000000e-01 : f32
    %62 = vector.broadcast %cst_59 : f32 to vector<2x128xf32>
    %63 = arith.mulf %62, %59 : vector<2x128xf32>
    %64 = arith.select %61, %59, %63 : vector<2x128xi1>, vector<2x128xf32>
    %65 = arith.truncf %64 : vector<2x128xf32> to vector<2x128xbf16>
    %c1_60 = arith.constant 1 : index
    %c0_61 = arith.constant 0 : index
    %c0_62 = arith.constant 0 : index
    %66 = vector.load %arg5[%c1_60, %c0_61, %c0_62] : memref<2x2x128xbf16, #tpu.memory_space<vmem>>, vector<1x2x128xbf16>
    %67 = vector.shape_cast %66 : vector<1x2x128xbf16> to vector<2x128xbf16>
    %68 = vector.shape_cast %65 : vector<2x128xbf16> to vector<1x2x128xbf16>
    tpu.vector_store %arg5[%c1_60, %c0_61, %c0_62], %68 {strides = array<i32>} : memref<2x2x128xbf16, #tpu.memory_space<vmem>>, vector<1x2x128xbf16>,
    return
  }
  func.func @transform_0(%arg0: i32, %arg1: i32) -> (i32, i32, i32) {
    %c0_i32 = arith.constant 0 : i32
    %c0_i32_0 = arith.constant 0 : i32
    %c0_i32_1 = arith.constant 0 : i32
    return %arg0, %c0_i32, %c0_i32_0 : i32, i32, i32
  }
  func.func @transform_1(%arg0: i32, %arg1: i32) -> (i32, i32, i32) {
    %c0_i32 = arith.constant 0 : i32
    %c0_i32_0 = arith.constant 0 : i32
    %c0_i32_1 = arith.constant 0 : i32
    return %c0_i32, %c0_i32_0, %arg1 : i32, i32, i32
  }
  func.func @transform_2(%arg0: i32, %arg1: i32) -> (i32, i32) {
    %c0_i32 = arith.constant 0 : i32
    %c0_i32_0 = arith.constant 0 : i32
    return %c0_i32, %arg1 : i32, i32
  }
  func.func @transform_3(%arg0: i32, %arg1: i32) -> (i32, i32, i32) {
    %c0_i32 = arith.constant 0 : i32
    %c0_i32_0 = arith.constant 0 : i32
    return %arg0, %c0_i32, %arg1 : i32, i32, i32
  }
}

</mosaic_0001>

<llo_original>
// kernel: feature_extractor_forward.5
$region0: #{feature_extractor_forward.5}
  #allocation0 [shape = 'u32[]', space=smem, size = 0x4, offset = 0x4, fixed_abs, tag = 'smem constant byte address 0x4 - core index']
  #allocation1 [shape = 'u32[144,128]{1,0:T(1,128)}', space=vmem, size = 0x12000, scoped, tag = 'internal scratch']
  %s0 = inlined_call_operand.vmem [shape: bf16[2,32,32], index: 0, kind: input, shape index: {}]
  %s1 = inlined_call_operand.vmem [shape: bf16[4,32,128], index: 1, kind: input, shape index: {}]
  %s2 = inlined_call_operand.vmem [shape: f32[1,128], index: 2, kind: input, shape index: {}]
  %s3 = inlined_call_operand.vmem [shape: bf16[2,20,128], index: 3, kind: output, shape index: {}]
  %s4 = sld [smem:[#allocation0]]
  $region22: #{feature_extractor_forward.5} parent=0
    _
  %s6 = ssub.s32 1, %s4
  %s7 = scalar_select 0, %s6, %s4
  // Predicated region
  $region2: #{feature_extractor_forward.5} parent=0 // pred_check
    _
  $region3: #{feature_extractor_forward.5} parent=0 // pred_check_branch
    %9 = sbr.rel (0) target = $region5
  $region4: #{feature_extractor_forward.5} parent=0 // pred_region
    _
  $region5: #{feature_extractor_forward.5} parent=0 // pred_fallthru
    _
  // Predicated region
  $region6: #{feature_extractor_forward.5} parent=0 // pred_check
    _
  $region7: #{feature_extractor_forward.5} parent=0 // pred_check_branch
    %11 = sbr.rel (0) target = $region9
  $region8: #{feature_extractor_forward.5} parent=0 // pred_region
    _
  $region9: #{feature_extractor_forward.5} parent=0 // pred_fallthru
    _
  // Predicated region
  $region10: #{feature_extractor_forward.5} parent=0 // pred_check
    _
  $region11: #{feature_extractor_forward.5} parent=0 // pred_check_branch
    %13 = sbr.rel (0) target = $region13
  $region12: #{feature_extractor_forward.5} parent=0 // pred_region
    _
  $region13: #{feature_extractor_forward.5} parent=0 // pred_fallthru
    _
  %v15 = vld [vmem:[%s2] sm:$0x1]
  %v16 = vld [vmem:[%s0] sm:$0xf]
  %v17 = vld [vmem:[%s0 + $0x4] sm:$0xf]
  %v18 = vld [vmem:[%s0 + $0x8] sm:$0x3]
  %v19 = vld [vmem:[%s1] sm:$0xf]
  %v20 = vld [vmem:[%s1 + $0x4] sm:$0xf]
  %v21 = vld [vmem:[%s1 + $0x8] sm:$0xf]
  %v22 = vld [vmem:[%s1 + $0xc] sm:$0xf]
  %v23 = vld [vmem:[%s0 + $0x8] sm:$0x7]
  %s24 = scalar_lea.vmem %s1, 16
  %v25 = vld [vmem:[%s24] sm:$0xf]
  %v26 = vld [vmem:[%s24 + $0x4] sm:$0xf]
  %v27 = vld [vmem:[%s24 + $0x8] sm:$0xf]
  %v28 = vld [vmem:[%s24 + $0xc] sm:$0xf]
  %v32 = vunpack.c.l.b16 %v16
  %v33 = vunpack.c.l.b16 %v17
  %v34 = vunpack.c.l.b16 %v23
  %v35 = vpack.c.b16 %v33, %v32
  %v36 = vpack.c.b16 %v34, %v34
  %vm37 = vsmask.f32 7424
  %v39 = vshrl.u32 %v35, 16
  %v41 = vshll.u32 %v35, 16
  %v43 = vrot.slane %v41, 1
  %v44 = vor.u32 %v39, %v43
  %v46 = vshll.u32 %v36, 16
  %v48 = vrot.slane %v46, 1
  %v49 = vsel %vm37, %v44, %v48
  %v50 = vshrl.u32 %v36, 16
  %v52 = vor.u32 %v50, %v48
  %v57 = vunpack.c.l.b16 %v25
  %v58 = vunpack.c.l.b16 %v26
  %v59 = vunpack.c.l.b16 %v27
  %v60 = vunpack.c.l.b16 %v28
  %v61 = vpack.c.b16 %v58, %v57
  %v62 = vpack.c.b16 %v60, %v59
  %vm65 = vcmask 261120
  %v67 = vsel %vm65, %v49, 0
  %v70 = vsel %vm65, %v52, 0
  %72 = vmatprep.subr.bf16.mxu0 0
  %73 = vmatpush1.bf16.msra.mxu0 0
  %74 = vmatprep.subr.bf16.mxu0 0
  %75 = vmatpush1.bf16.msra.mxu0 0
  %76 = vmatprep.subr.bf16.mxu0 0
  %77 = vmatpush1.bf16.msra.mxu0 0
  %78 = vmatprep.subr.bf16.mxu0 0
  %79 = vmatpush1.bf16.msra.mxu0 0
  %80 = vmatprep.subr.bf16.mxu0 0
  %81 = vmatpush1.bf16.msra.mxu0 0
  %82 = vmatprep.subr.bf16.mxu0 0
  %83 = vmatpush1.bf16.msra.mxu0 0
  %84 = vmatprep.subr.bf16.mxu0 0
  %85 = vmatpush1.bf16.msra.mxu0 %v62
  %86 = vmatprep.subr.bf16.mxu0 0
  %87 = vmatpush1.bf16.msra.mxu0 %v61
  %88 = vmatprep.subr.bf16.mxu0 0
  %89 = vmatpush2.bf16.msra.mxu0 0
  %90 = vmatprep.subr.bf16.mxu0 0
  %91 = vmatpush2.bf16.msra.mxu0 0
  %92 = vmatprep.subr.bf16.mxu0 0
  %93 = vmatpush2.bf16.msra.mxu0 0
  %94 = vmatprep.subr.bf16.mxu0 0
  %95 = vmatpush2.bf16.msra.mxu0 0
  %96 = vmatprep.subr.bf16.mxu0 0
  %97 = vmatpush2.bf16.msra.mxu0 0
  %98 = vmatprep.subr.bf16.mxu0 0
  %99 = vmatpush2.bf16.msra.mxu0 0
  %100 = vmatprep.subr.bf16.mxu0 0
  %101 = vmatpush2.bf16.msra.mxu0 0
  %102 = vmatprep.subr.bf16.mxu0 0
  %103 = vmatpush2.bf16.msra.mxu0 0
  %104 = vmatprep.mubr.bf16.mxu0 0
  %105 = vmatmul.mubr.bf16.gmra.mxu0 %v67
  %v106 = vpop.f32.mrf.mxu0
  %v107 = vadd.f32 0.0, %v106
  %v108 = vpop.f32.mrf.mxu0
  %v109 = vpop.f32.mrf.mxu0
  %v110 = vadd.f32 0.0, %v109
  %v111 = vpop.f32.mrf.mxu0
  %112 = vmatprep.mubr.bf16.mxu0 0
  %113 = vmatmul.mubr.bf16.gmra.mxu0 %v70
  %v114 = vpop.f32.mrf.mxu0
  %v115 = vadd.f32 0.0, %v114
  %v116 = vpop.f32.mrf.mxu0
  %v117 = vpop.f32.mrf.mxu0
  %v118 = vpop.f32.mrf.mxu0
  %119 = vdwg.mxu0
  %v121 = vunpack.c.l.b16 %v18
  %v122 = vpack.c.b16 %v121, %v121
  %v127 = vunpack.c.l.b16 %v19
  %v128 = vunpack.c.l.b16 %v20
  %v129 = vunpack.c.l.b16 %v21
  %v130 = vunpack.c.l.b16 %v22
  %v131 = vpack.c.b16 %v128, %v127
  %v132 = vpack.c.b16 %v130, %v129
  %v135 = vsel %vm65, %v35, 0
  %v138 = vsel %vm65, %v122, 0
  %140 = vmatprep.subr.bf16.mxu0 0
  %141 = vmatpush1.bf16.msra.mxu0 0
  %142 = vmatprep.subr.bf16.mxu0 0
  %143 = vmatpush1.bf16.msra.mxu0 0
  %144 = vmatprep.subr.bf16.mxu0 0
  %145 = vmatpush1.bf16.msra.mxu0 0
  %146 = vmatprep.subr.bf16.mxu0 0
  %147 = vmatpush1.bf16.msra.mxu0 0
  %148 = vmatprep.subr.bf16.mxu0 0
  %149 = vmatpush1.bf16.msra.mxu0 0
  %150 = vmatprep.subr.bf16.mxu0 0
  %151 = vmatpush1.bf16.msra.mxu0 0
  %152 = vmatprep.subr.bf16.mxu0 0
  %153 = vmatpush1.bf16.msra.mxu0 %v132
  %154 = vmatprep.subr.bf16.mxu0 0
  %155 = vmatpush1.bf16.msra.mxu0 %v131
  %156 = vmatprep.subr.bf16.mxu0 0
  %157 = vmatpush2.bf16.msra.mxu0 0
  %158 = vmatprep.subr.bf16.mxu0 0
  %159 = vmatpush2.bf16.msra.mxu0 0
  %160 = vmatprep.subr.bf16.mxu0 0
  %161 = vmatpush2.bf16.msra.mxu0 0
  %162 = vmatprep.subr.bf16.mxu0 0
  %163 = vmatpush2.bf16.msra.mxu0 0
  %164 = vmatprep.subr.bf16.mxu0 0
  %165 = vmatpush2.bf16.msra.mxu0 0
  %166 = vmatprep.subr.bf16.mxu0 0
  %167 = vmatpush2.bf16.msra.mxu0 0
  %168 = vmatprep.subr.bf16.mxu0 0
  %169 = vmatpush2.bf16.msra.mxu0 0
  %170 = vmatprep.subr.bf16.mxu0 0
  %171 = vmatpush2.bf16.msra.mxu0 0
  %172 = vmatprep.mubr.bf16.mxu0 0
  %173 = vmatmul.mubr.bf16.gmra.mxu0 %v135
  %v174 = vpop.f32.mrf.mxu0
  %v175 = vadd.f32 %v107, %v174
  %v176 = vpop.f32.mrf.mxu0
  %v177 = vpop.f32.mrf.mxu0
  %v178 = vadd.f32 %v110, %v177
  %v179 = vpop.f32.mrf.mxu0
  %180 = vmatprep.mubr.bf16.mxu0 0
  %181 = vmatmul.mubr.bf16.gmra.mxu0 %v138
  %v182 = vpop.f32.mrf.mxu0
  %v183 = vadd.f32 %v115, %v182
  %v184 = vpop.f32.mrf.mxu0
  %v185 = vpop.f32.mrf.mxu0
  %v186 = vpop.f32.mrf.mxu0
  %187 = vdwg.mxu0
  %v188 = vld [vmem:[%s0] sm:$0xc]
  %v189 = vld [vmem:[%s0 + $0x4] sm:$0xf]
  %v190 = vld [vmem:[%s0 + $0x8] sm:$0xf]
  %v191 = vld [vmem:[%s0 + $0xc] sm:$0x1]
  %s192 = scalar_lea.vmem %s1, 32
  %v193 = vld [vmem:[%s192] sm:$0xf]
  %v194 = vld [vmem:[%s192 + $0x4] sm:$0xf]
  %v195 = vld [vmem:[%s192 + $0x8] sm:$0xf]
  %v196 = vld [vmem:[%s192 + $0xc] sm:$0xf]
  %v201 = vunpack.c.l.b16 %v188
  %v202 = vunpack.c.l.b16 %v189
  %v203 = vunpack.c.l.b16 %v190
  %v204 = vunpack.c.l.b16 %v191
  %v205 = vpack.c.b16 %v202, %v201
  %v206 = vpack.c.b16 %v204, %v203
  %vm207 = vsmask.f32 5376
  %v209 = vshrl.u32 %v205, 16
  %v211 = vrot.slane %v209, 2
  %v212 = vshll.u32 %v205, 16
  %v214 = vrot.slane %v212, 3
  %v215 = vor.u32 %v211, %v214
  %v217 = vshrl.u32 %v206, 16
  %v219 = vrot.slane %v217, 2
  %v220 = vshll.u32 %v206, 16
  %v222 = vrot.slane %v220, 3
  %v223 = vor.u32 %v219, %v222
  %v224 = vsel %vm207, %v215, %v223
  %v229 = vunpack.c.l.b16 %v193
  %v230 = vunpack.c.l.b16 %v194
  %v231 = vunpack.c.l.b16 %v195
  %v232 = vunpack.c.l.b16 %v196
  %v233 = vpack.c.b16 %v230, %v229
  %v234 = vpack.c.b16 %v232, %v231
  %v238 = vsel %vm65, %v224, 0
  %v241 = vsel %vm65, %v223, 0
  %243 = vmatprep.subr.bf16.mxu0 0
  %244 = vmatpush1.bf16.msra.mxu0 0
  %245 = vmatprep.subr.bf16.mxu0 0
  %246 = vmatpush1.bf16.msra.mxu0 0
  %247 = vmatprep.subr.bf16.mxu0 0
  %248 = vmatpush1.bf16.msra.mxu0 0
  %249 = vmatprep.subr.bf16.mxu0 0
  %250 = vmatpush1.bf16.msra.mxu0 0
  %251 = vmatprep.subr.bf16.mxu0 0
  %252 = vmatpush1.bf16.msra.mxu0 0
  %253 = vmatprep.subr.bf16.mxu0 0
  %254 = vmatpush1.bf16.msra.mxu0 0
  %255 = vmatprep.subr.bf16.mxu0 0
  %256 = vmatpush1.bf16.msra.mxu0 %v234
  %257 = vmatprep.subr.bf16.mxu0 0
  %258 = vmatpush1.bf16.msra.mxu0 %v233
  %259 = vmatprep.subr.bf16.mxu0 0
  %260 = vmatpush2.bf16.msra.mxu0 0
  %261 = vmatprep.subr.bf16.mxu0 0
  %262 = vmatpush2.bf16.msra.mxu0 0
  %263 = vmatprep.subr.bf16.mxu0 0
  %264 = vmatpush2.bf16.msra.mxu0 0
  %265 = vmatprep.subr.bf16.mxu0 0
  %266 = vmatpush2.bf16.msra.mxu0 0
  %267 = vmatprep.subr.bf16.mxu0 0
  %268 = vmatpush2.bf16.msra.mxu0 0
  %269 = vmatprep.subr.bf16.mxu0 0
  %270 = vmatpush2.bf16.msra.mxu0 0
  %271 = vmatprep.subr.bf16.mxu0 0
  %272 = vmatpush2.bf16.msra.mxu0 0
  %273 = vmatprep.subr.bf16.mxu0 0
  %274 = vmatpush2.bf16.msra.mxu0 0
  %275 = vmatprep.mubr.bf16.mxu0 0
  %276 = vmatmul.mubr.bf16.gmra.mxu0 %v238
  %v277 = vpop.f32.mrf.mxu0
  %v278 = vadd.f32 0.0, %v277
  %v279 = vpop.f32.mrf.mxu0
  %v280 = vpop.f32.mrf.mxu0
  %v281 = vadd.f32 0.0, %v280
  %v282 = vpop.f32.mrf.mxu0
  %283 = vmatprep.mubr.bf16.mxu0 0
  %284 = vmatmul.mubr.bf16.gmra.mxu0 %v241
  %v285 = vpop.f32.mrf.mxu0
  %v286 = vadd.f32 0.0, %v285
  %v287 = vpop.f32.mrf.mxu0
  %v288 = vpop.f32.mrf.mxu0
  %v289 = vpop.f32.mrf.mxu0
  %290 = vdwg.mxu0
  %v291 = vadd.f32 %v175, %v278
  %v292 = vadd.f32 %v178, %v281
  %v293 = vadd.f32 %v183, %v286
  %v294 = vld [vmem:[%s0] sm:$0x8]
  %s295 = scalar_lea.vmem %s1, 48
  %v296 = vld [vmem:[%s295] sm:$0xf]
  %v297 = vld [vmem:[%s295 + $0x4] sm:$0xf]
  %v298 = vld [vmem:[%s295 + $0x8] sm:$0xf]
  %v299 = vld [vmem:[%s295 + $0xc] sm:$0xf]
  %v301 = vunpack.c.l.b16 %v294
  %v302 = vpack.c.b16 %v202, %v301
  %vm303 = vcmask 1044480
  %v304 = vrot.slane %v302, 3
  %v305 = vrot.slane %v206, 3
  %v306 = vsel %vm303, %v304, %v305
  %v311 = vunpack.c.l.b16 %v296
  %v312 = vunpack.c.l.b16 %v297
  %v313 = vunpack.c.l.b16 %v298
  %v314 = vunpack.c.l.b16 %v299
  %v315 = vpack.c.b16 %v312, %v311
  %v316 = vpack.c.b16 %v314, %v313
  %v320 = vsel %vm65, %v306, 0
  %v323 = vsel %vm65, %v305, 0
  %325 = vmatprep.subr.bf16.mxu0 0
  %326 = vmatpush1.bf16.msra.mxu0 0
  %327 = vmatprep.subr.bf16.mxu0 0
  %328 = vmatpush1.bf16.msra.mxu0 0
  %329 = vmatprep.subr.bf16.mxu0 0
  %330 = vmatpush1.bf16.msra.mxu0 0
  %331 = vmatprep.subr.bf16.mxu0 0
  %332 = vmatpush1.bf16.msra.mxu0 0
  %333 = vmatprep.subr.bf16.mxu0 0
  %334 = vmatpush1.bf16.msra.mxu0 0
  %335 = vmatprep.subr.bf16.mxu0 0
  %336 = vmatpush1.bf16.msra.mxu0 0
  %337 = vmatprep.subr.bf16.mxu0 0
  %338 = vmatpush1.bf16.msra.mxu0 %v316
  %339 = vmatprep.subr.bf16.mxu0 0
  %340 = vmatpush1.bf16.msra.mxu0 %v315
  %341 = vmatprep.subr.bf16.mxu0 0
  %342 = vmatpush2.bf16.msra.mxu0 0
  %343 = vmatprep.subr.bf16.mxu0 0
  %344 = vmatpush2.bf16.msra.mxu0 0
  %345 = vmatprep.subr.bf16.mxu0 0
  %346 = vmatpush2.bf16.msra.mxu0 0
  %347 = vmatprep.subr.bf16.mxu0 0
  %348 = vmatpush2.bf16.msra.mxu0 0
  %349 = vmatprep.subr.bf16.mxu0 0
  %350 = vmatpush2.bf16.msra.mxu0 0
  %351 = vmatprep.subr.bf16.mxu0 0
  %352 = vmatpush2.bf16.msra.mxu0 0
  %353 = vmatprep.subr.bf16.mxu0 0
  %354 = vmatpush2.bf16.msra.mxu0 0
  %355 = vmatprep.subr.bf16.mxu0 0
  %356 = vmatpush2.bf16.msra.mxu0 0
  %357 = vmatprep.mubr.bf16.mxu0 0
  %358 = vmatmul.mubr.bf16.gmra.mxu0 %v320
  %v359 = vpop.f32.mrf.mxu0
  %v360 = vadd.f32 0.0, %v359
  %v361 = vpop.f32.mrf.mxu0
  %v362 = vpop.f32.mrf.mxu0
  %v363 = vadd.f32 0.0, %v362
  %v364 = vpop.f32.mrf.mxu0
  %365 = vmatprep.mubr.bf16.mxu0 0
  %366 = vmatmul.mubr.bf16.gmra.mxu0 %v323
  %v367 = vpop.f32.mrf.mxu0
  %v368 = vadd.f32 0.0, %v367
  %v369 = vpop.f32.mrf.mxu0
  %v370 = vpop.f32.mrf.mxu0
  %v371 = vpop.f32.mrf.mxu0
  %372 = vdwg.mxu0
  %v373 = vadd.f32 %v291, %v360
  %v374 = vadd.f32 %v292, %v363
  %v375 = vadd.f32 %v293, %v368
  %v377 = vlaneseq
  %v378 = vshrl.u32 %v377, 7
  %v379 = vsub.s32 0, %v378
  %v380 = vrot.slane %v15, %v379
  %v382 = vadd.f32 %v373, %v380
  %v383 = vadd.f32 %v374, %v380
  %v384 = vadd.f32 %v375, %v380
  %vm385 = vcmp.gt.f32.partialorder %v382, 0.0
  %vm386 = vcmp.gt.f32.partialorder %v383, 0.0
  %vm387 = vcmp.gt.f32.partialorder %v384, 0.0
  %v388 = vmul.f32 %v382, 0.2
  %v389 = vmul.f32 %v383, 0.2
  %v390 = vmul.f32 %v384, 0.2
  %v391 = vsel %vm385, %v382, %v388
  %v392 = vsel %vm386, %v383, %v389
  %v393 = vsel %vm387, %v384, %v390
  %v394 = vpack.c.bf16 %v392, %v391
  %v395 = vpack.c.bf16 %v393, %v393
  %v398 = vunpack.c.l.b16 %v394
  %v399 = vunpack.c.h.b16 %v394
  %v400 = vunpack.c.l.b16 %v395
  %v401 = vpack.c.b16 %v398, %v398
  %v402 = vpack.c.b16 %v399, %v399
  %v403 = vpack.c.b16 %v400, %v400
  %407 = vst [vmem:[%s3] sm:$0xf] %v401
  %408 = vst [vmem:[%s3 + $0x4] sm:$0xf] %v402
  %409 = vst [vmem:[%s3 + $0x8] sm:$0x3] %v403
  %s410 = scalar_lea.vmem %s0, 16
  %v411 = vld [vmem:[%s410] sm:$0xf]
  %v412 = vld [vmem:[%s410 + $0x4] sm:$0xf]
  %v413 = vld [vmem:[%s410 + $0x8] sm:$0x3]
  %v414 = vld [vmem:[%s1] sm:$0xf]
  %v415 = vld [vmem:[%s1 + $0x4] sm:$0xf]
  %v416 = vld [vmem:[%s1 + $0x8] sm:$0xf]
  %v417 = vld [vmem:[%s1 + $0xc] sm:$0xf]
  %v418 = vld [vmem:[%s410 + $0x8] sm:$0x7]
  %v419 = vld [vmem:[%s24] sm:$0xf]
  %v420 = vld [vmem:[%s24 + $0x4] sm:$0xf]
  %v421 = vld [vmem:[%s24 + $0x8] sm:$0xf]
  %v422 = vld [vmem:[%s24 + $0xc] sm:$0xf]
  %v426 = vunpack.c.l.b16 %v411
  %v427 = vunpack.c.l.b16 %v412
  %v428 = vunpack.c.l.b16 %v418
  %v429 = vpack.c.b16 %v427, %v426
  %v430 = vpack.c.b16 %v428, %v428
  %v432 = vshrl.u32 %v429, 16
  %v434 = vshll.u32 %v429, 16
  %v436 = vrot.slane %v434, 1
  %v437 = vor.u32 %v432, %v436
  %v439 = vshll.u32 %v430, 16
  %v441 = vrot.slane %v439, 1
  %v442 = vsel %vm37, %v437, %v441
  %v443 = vshrl.u32 %v430, 16
  %v445 = vor.u32 %v443, %v441
  %v450 = vunpack.c.l.b16 %v419
  %v451 = vunpack.c.l.b16 %v420
  %v452 = vunpack.c.l.b16 %v421
  %v453 = vunpack.c.l.b16 %v422
  %v454 = vpack.c.b16 %v451, %v450
  %v455 = vpack.c.b16 %v453, %v452
  %v459 = vsel %vm65, %v442, 0
  %v462 = vsel %vm65, %v445, 0
  %464 = vmatprep.subr.bf16.mxu0 0
  %465 = vmatpush1.bf16.msra.mxu0 0
  %466 = vmatprep.subr.bf16.mxu0 0
  %467 = vmatpush1.bf16.msra.mxu0 0
  %468 = vmatprep.subr.bf16.mxu0 0
  %469 = vmatpush1.bf16.msra.mxu0 0
  %470 = vmatprep.subr.bf16.mxu0 0
  %471 = vmatpush1.bf16.msra.mxu0 0
  %472 = vmatprep.subr.bf16.mxu0 0
  %473 = vmatpush1.bf16.msra.mxu0 0
  %474 = vmatprep.subr.bf16.mxu0 0
  %475 = vmatpush1.bf16.msra.mxu0 0
  %476 = vmatprep.subr.bf16.mxu0 0
  %477 = vmatpush1.bf16.msra.mxu0 %v455
  %478 = vmatprep.subr.bf16.mxu0 0
  %479 = vmatpush1.bf16.msra.mxu0 %v454
  %480 = vmatprep.subr.bf16.mxu0 0
  %481 = vmatpush2.bf16.msra.mxu0 0
  %482 = vmatprep.subr.bf16.mxu0 0
  %483 = vmatpush2.bf16.msra.mxu0 0
  %484 = vmatprep.subr.bf16.mxu0 0
  %485 = vmatpush2.bf16.msra.mxu0 0
  %486 = vmatprep.subr.bf16.mxu0 0
  %487 = vmatpush2.bf16.msra.mxu0 0
  %488 = vmatprep.subr.bf16.mxu0 0
  %489 = vmatpush2.bf16.msra.mxu0 0
  %490 = vmatprep.subr.bf16.mxu0 0
  %491 = vmatpush2.bf16.msra.mxu0 0
  %492 = vmatprep.subr.bf16.mxu0 0
  %493 = vmatpush2.bf16.msra.mxu0 0
  %494 = vmatprep.subr.bf16.mxu0 0
  %495 = vmatpush2.bf16.msra.mxu0 0
  %496 = vmatprep.mubr.bf16.mxu0 0
  %497 = vmatmul.mubr.bf16.gmra.mxu0 %v459
  %v498 = vpop.f32.mrf.mxu0
  %v499 = vadd.f32 0.0, %v498
  %v500 = vpop.f32.mrf.mxu0
  %v501 = vpop.f32.mrf.mxu0
  %v502 = vadd.f32 0.0, %v501
  %v503 = vpop.f32.mrf.mxu0
  %504 = vmatprep.mubr.bf16.mxu0 0
  %505 = vmatmul.mubr.bf16.gmra.mxu0 %v462
  %v506 = vpop.f32.mrf.mxu0
  %v507 = vadd.f32 0.0, %v506
  %v508 = vpop.f32.mrf.mxu0
  %v509 = vpop.f32.mrf.mxu0
  %v510 = vpop.f32.mrf.mxu0
  %511 = vdwg.mxu0
  %v513 = vunpack.c.l.b16 %v413
  %v514 = vpack.c.b16 %v513, %v513
  %v519 = vunpack.c.l.b16 %v414
  %v520 = vunpack.c.l.b16 %v415
  %v521 = vunpack.c.l.b16 %v416
  %v522 = vunpack.c.l.b16 %v417
  %v523 = vpack.c.b16 %v520, %v519
  %v524 = vpack.c.b16 %v522, %v521
  %v527 = vsel %vm65, %v429, 0
  %v530 = vsel %vm65, %v514, 0
  %532 = vmatprep.subr.bf16.mxu0 0
  %533 = vmatpush1.bf16.msra.mxu0 0
  %534 = vmatprep.subr.bf16.mxu0 0
  %535 = vmatpush1.bf16.msra.mxu0 0
  %536 = vmatprep.subr.bf16.mxu0 0
  %537 = vmatpush1.bf16.msra.mxu0 0
  %538 = vmatprep.subr.bf16.mxu0 0
  %539 = vmatpush1.bf16.msra.mxu0 0
  %540 = vmatprep.subr.bf16.mxu0 0
  %541 = vmatpush1.bf16.msra.mxu0 0
  %542 = vmatprep.subr.bf16.mxu0 0
  %543 = vmatpush1.bf16.msra.mxu0 0
  %544 = vmatprep.subr.bf16.mxu0 0
  %545 = vmatpush1.bf16.msra.mxu0 %v524
  %546 = vmatprep.subr.bf16.mxu0 0
  %547 = vmatpush1.bf16.msra.mxu0 %v523
  %548 = vmatprep.subr.bf16.mxu0 0
  %549 = vmatpush2.bf16.msra.mxu0 0
  %550 = vmatprep.subr.bf16.mxu0 0
  %551 = vmatpush2.bf16.msra.mxu0 0
  %552 = vmatprep.subr.bf16.mxu0 0
  %553 = vmatpush2.bf16.msra.mxu0 0
  %554 = vmatprep.subr.bf16.mxu0 0
  %555 = vmatpush2.bf16.msra.mxu0 0
  %556 = vmatprep.subr.bf16.mxu0 0
  %557 = vmatpush2.bf16.msra.mxu0 0
  %558 = vmatprep.subr.bf16.mxu0 0
  %559 = vmatpush2.bf16.msra.mxu0 0
  %560 = vmatprep.subr.bf16.mxu0 0
  %561 = vmatpush2.bf16.msra.mxu0 0
  %562 = vmatprep.subr.bf16.mxu0 0
  %563 = vmatpush2.bf16.msra.mxu0 0
  %564 = vmatprep.mubr.bf16.mxu0 0
  %565 = vmatmul.mubr.bf16.gmra.mxu0 %v527
  %v566 = vpop.f32.mrf.mxu0
  %v567 = vadd.f32 %v499, %v566
  %v568 = vpop.f32.mrf.mxu0
  %v569 = vpop.f32.mrf.mxu0
  %v570 = vadd.f32 %v502, %v569
  %v571 = vpop.f32.mrf.mxu0
  %572 = vmatprep.mubr.bf16.mxu0 0
  %573 = vmatmul.mubr.bf16.gmra.mxu0 %v530
  %v574 = vpop.f32.mrf.mxu0
  %v575 = vadd.f32 %v507, %v574
  %v576 = vpop.f32.mrf.mxu0
  %v577 = vpop.f32.mrf.mxu0
  %v578 = vpop.f32.mrf.mxu0
  %579 = vdwg.mxu0
  %v580 = vld [vmem:[%s410] sm:$0xc]
  %v581 = vld [vmem:[%s410 + $0x4] sm:$0xf]
  %v582 = vld [vmem:[%s410 + $0x8] sm:$0xf]
  %v583 = vld [vmem:[%s410 + $0xc] sm:$0x1]
  %v584 = vld [vmem:[%s192] sm:$0xf]
  %v585 = vld [vmem:[%s192 + $0x4] sm:$0xf]
  %v586 = vld [vmem:[%s192 + $0x8] sm:$0xf]
  %v587 = vld [vmem:[%s192 + $0xc] sm:$0xf]
  %v592 = vunpack.c.l.b16 %v580
  %v593 = vunpack.c.l.b16 %v581
  %v594 = vunpack.c.l.b16 %v582
  %v595 = vunpack.c.l.b16 %v583
  %v596 = vpack.c.b16 %v593, %v592
  %v597 = vpack.c.b16 %v595, %v594
  %v599 = vshrl.u32 %v596, 16
  %v601 = vrot.slane %v599, 2
  %v602 = vshll.u32 %v596, 16
  %v604 = vrot.slane %v602, 3
  %v605 = vor.u32 %v601, %v604
  %v607 = vshrl.u32 %v597, 16
  %v609 = vrot.slane %v607, 2
  %v610 = vshll.u32 %v597, 16
  %v612 = vrot.slane %v610, 3
  %v613 = vor.u32 %v609, %v612
  %v614 = vsel %vm207, %v605, %v613
  %v619 = vunpack.c.l.b16 %v584
  %v620 = vunpack.c.l.b16 %v585
  %v621 = vunpack.c.l.b16 %v586
  %v622 = vunpack.c.l.b16 %v587
  %v623 = vpack.c.b16 %v620, %v619
  %v624 = vpack.c.b16 %v622, %v621
  %v628 = vsel %vm65, %v614, 0
  %v631 = vsel %vm65, %v613, 0
  %633 = vmatprep.subr.bf16.mxu0 0
  %634 = vmatpush1.bf16.msra.mxu0 0
  %635 = vmatprep.subr.bf16.mxu0 0
  %636 = vmatpush1.bf16.msra.mxu0 0
  %637 = vmatprep.subr.bf16.mxu0 0
  %638 = vmatpush1.bf16.msra.mxu0 0
  %639 = vmatprep.subr.bf16.mxu0 0
  %640 = vmatpush1.bf16.msra.mxu0 0
  %641 = vmatprep.subr.bf16.mxu0 0
  %642 = vmatpush1.bf16.msra.mxu0 0
  %643 = vmatprep.subr.bf16.mxu0 0
  %644 = vmatpush1.bf16.msra.mxu0 0
  %645 = vmatprep.subr.bf16.mxu0 0
  %646 = vmatpush1.bf16.msra.mxu0 %v624
  %647 = vmatprep.subr.bf16.mxu0 0
  %648 = vmatpush1.bf16.msra.mxu0 %v623
  %649 = vmatprep.subr.bf16.mxu0 0
  %650 = vmatpush2.bf16.msra.mxu0 0
  %651 = vmatprep.subr.bf16.mxu0 0
  %652 = vmatpush2.bf16.msra.mxu0 0
  %653 = vmatprep.subr.bf16.mxu0 0
  %654 = vmatpush2.bf16.msra.mxu0 0
  %655 = vmatprep.subr.bf16.mxu0 0
  %656 = vmatpush2.bf16.msra.mxu0 0
  %657 = vmatprep.subr.bf16.mxu0 0
  %658 = vmatpush2.bf16.msra.mxu0 0
  %659 = vmatprep.subr.bf16.mxu0 0
  %660 = vmatpush2.bf16.msra.mxu0 0
  %661 = vmatprep.subr.bf16.mxu0 0
  %662 = vmatpush2.bf16.msra.mxu0 0
  %663 = vmatprep.subr.bf16.mxu0 0
  %664 = vmatpush2.bf16.msra.mxu0 0
  %665 = vmatprep.mubr.bf16.mxu0 0
  %666 = vmatmul.mubr.bf16.gmra.mxu0 %v628
  %v667 = vpop.f32.mrf.mxu0
  %v668 = vadd.f32 0.0, %v667
  %v669 = vpop.f32.mrf.mxu0
  %v670 = vpop.f32.mrf.mxu0
  %v671 = vadd.f32 0.0, %v670
  %v672 = vpop.f32.mrf.mxu0
  %673 = vmatprep.mubr.bf16.mxu0 0
  %674 = vmatmul.mubr.bf16.gmra.mxu0 %v631
  %v675 = vpop.f32.mrf.mxu0
  %v676 = vadd.f32 0.0, %v675
  %v677 = vpop.f32.mrf.mxu0
  %v678 = vpop.f32.mrf.mxu0
  %v679 = vpop.f32.mrf.mxu0
  %680 = vdwg.mxu0
  %v681 = vadd.f32 %v567, %v668
  %v682 = vadd.f32 %v570, %v671
  %v683 = vadd.f32 %v575, %v676
  %v684 = vld [vmem:[%s410] sm:$0x8]
  %v685 = vld [vmem:[%s295] sm:$0xf]
  %v686 = vld [vmem:[%s295 + $0x4] sm:$0xf]
  %v687 = vld [vmem:[%s295 + $0x8] sm:$0xf]
  %v688 = vld [vmem:[%s295 + $0xc] sm:$0xf]
  %v690 = vunpack.c.l.b16 %v684
  %v691 = vpack.c.b16 %v593, %v690
  %v692 = vrot.slane %v691, 3
  %v693 = vrot.slane %v597, 3
  %v694 = vsel %vm303, %v692, %v693
  %v699 = vunpack.c.l.b16 %v685
  %v700 = vunpack.c.l.b16 %v686
  %v701 = vunpack.c.l.b16 %v687
  %v702 = vunpack.c.l.b16 %v688
  %v703 = vpack.c.b16 %v700, %v699
  %v704 = vpack.c.b16 %v702, %v701
  %v708 = vsel %vm65, %v694, 0
  %v711 = vsel %vm65, %v693, 0
  %713 = vmatprep.subr.bf16.mxu0 0
  %714 = vmatpush1.bf16.msra.mxu0 0
  %715 = vmatprep.subr.bf16.mxu0 0
  %716 = vmatpush1.bf16.msra.mxu0 0
  %717 = vmatprep.subr.bf16.mxu0 0
  %718 = vmatpush1.bf16.msra.mxu0 0
  %719 = vmatprep.subr.bf16.mxu0 0
  %720 = vmatpush1.bf16.msra.mxu0 0
  %721 = vmatprep.subr.bf16.mxu0 0
  %722 = vmatpush1.bf16.msra.mxu0 0
  %723 = vmatprep.subr.bf16.mxu0 0
  %724 = vmatpush1.bf16.msra.mxu0 0
  %725 = vmatprep.subr.bf16.mxu0 0
  %726 = vmatpush1.bf16.msra.mxu0 %v704
  %727 = vmatprep.subr.bf16.mxu0 0
  %728 = vmatpush1.bf16.msra.mxu0 %v703
  %729 = vmatprep.subr.bf16.mxu0 0
  %730 = vmatpush2.bf16.msra.mxu0 0
  %731 = vmatprep.subr.bf16.mxu0 0
  %732 = vmatpush2.bf16.msra.mxu0 0
  %733 = vmatprep.subr.bf16.mxu0 0
  %734 = vmatpush2.bf16.msra.mxu0 0
  %735 = vmatprep.subr.bf16.mxu0 0
  %736 = vmatpush2.bf16.msra.mxu0 0
  %737 = vmatprep.subr.bf16.mxu0 0
  %738 = vmatpush2.bf16.msra.mxu0 0
  %739 = vmatprep.subr.bf16.mxu0 0
  %740 = vmatpush2.bf16.msra.mxu0 0
  %741 = vmatprep.subr.bf16.mxu0 0
  %742 = vmatpush2.bf16.msra.mxu0 0
  %743 = vmatprep.subr.bf16.mxu0 0
  %744 = vmatpush2.bf16.msra.mxu0 0
  %745 = vmatprep.mubr.bf16.mxu0 0
  %746 = vmatmul.mubr.bf16.gmra.mxu0 %v708
  %v747 = vpop.f32.mrf.mxu0
  %v748 = vadd.f32 0.0, %v747
  %v749 = vpop.f32.mrf.mxu0
  %v750 = vpop.f32.mrf.mxu0
  %v751 = vadd.f32 0.0, %v750
  %v752 = vpop.f32.mrf.mxu0
  %753 = vmatprep.mubr.bf16.mxu0 0
  %754 = vmatmul.mubr.bf16.gmra.mxu0 %v711
  %v755 = vpop.f32.mrf.mxu0
  %v756 = vadd.f32 0.0, %v755
  %v757 = vpop.f32.mrf.mxu0
  %v758 = vpop.f32.mrf.mxu0
  %v759 = vpop.f32.mrf.mxu0
  %760 = vdwg.mxu0
  %v761 = vadd.f32 %v681, %v748
  %v762 = vadd.f32 %v682, %v751
  %v763 = vadd.f32 %v683, %v756
  %v764 = vadd.f32 %v761, %v380
  %v765 = vadd.f32 %v762, %v380
  %v766 = vadd.f32 %v763, %v380
  %vm767 = vcmp.gt.f32.partialorder %v764, 0.0
  %vm768 = vcmp.gt.f32.partialorder %v765, 0.0
  %vm769 = vcmp.gt.f32.partialorder %v766, 0.0
  %v770 = vmul.f32 %v764, 0.2
  %v771 = vmul.f32 %v765, 0.2
  %v772 = vmul.f32 %v766, 0.2
  %v773 = vsel %vm767, %v764, %v770
  %v774 = vsel %vm768, %v765, %v771
  %v775 = vsel %vm769, %v766, %v772
  %v776 = vpack.c.bf16 %v774, %v773
  %v777 = vpack.c.bf16 %v775, %v775
  %v780 = vunpack.c.l.b16 %v776
  %v781 = vunpack.c.h.b16 %v776
  %v782 = vunpack.c.l.b16 %v777
  %v783 = vpack.c.b16 %v780, %v780
  %v784 = vpack.c.b16 %v781, %v781
  %v785 = vpack.c.b16 %v782, %v782
  %s789 = scalar_lea.vmem %s3, 12
  %790 = vst [vmem:[%s789] sm:$0xf] %v783
  %791 = vst [vmem:[%s789 + $0x4] sm:$0xf] %v784
  %792 = vst [vmem:[%s789 + $0x8] sm:$0x3] %v785
  // Predicated region
  $region14: #{feature_extractor_forward.5} parent=0 // pred_check
    _
  $region15: #{feature_extractor_forward.5} parent=0 // pred_check_branch
    %794 = sbr.rel (0) target = $region17
  $region16: #{feature_extractor_forward.5} parent=0 // pred_region
    _
  $region17: #{feature_extractor_forward.5} parent=0 // pred_fallthru
    _
  // Predicated region
  $region18: #{feature_extractor_forward.5} parent=0 // pred_check
    _
  $region19: #{feature_extractor_forward.5} parent=0 // pred_check_branch
    %796 = sbr.rel (0) target = $region21
  $region20: #{feature_extractor_forward.5} parent=0 // pred_region
    _
  $region21: #{feature_extractor_forward.5} parent=0 // pred_fallthru
    _

// kernel: feature_extractor_forward.4
$region0: #{feature_extractor_forward.4}
  #allocation0 [shape = 'u32[]', space=smem, size = 0x4, offset = 0x4, fixed_abs, tag = 'smem constant byte address 0x4 - core index']
  #allocation1 [shape = 'u32[144,128]{1,0:T(1,128)}', space=vmem, size = 0x12000, scoped, tag = 'internal scratch']
  %s0 = inlined_call_operand.vmem [shape: bf16[2,88,12], index: 0, kind: input, shape index: {}]
  %s1 = inlined_call_operand.vmem [shape: bf16[4,12,128], index: 1, kind: input, shape index: {}]
  %s2 = inlined_call_operand.vmem [shape: f32[1,128], index: 2, kind: input, shape index: {}]
  %s3 = inlined_call_operand.vmem [shape: bf16[2,72,128], index: 3, kind: output, shape index: {}]
  %s4 = sld [smem:[#allocation0]]
  $region22: #{feature_extractor_forward.4} parent=0
    _
  %s6 = ssub.s32 1, %s4
  %s7 = scalar_select 0, %s6, %s4
  // Predicated region
  $region2: #{feature_extractor_forward.4} parent=0 // pred_check
    _
  $region3: #{feature_extractor_forward.4} parent=0 // pred_check_branch
    %9 = sbr.rel (0) target = $region5
  $region4: #{feature_extractor_forward.4} parent=0 // pred_region
    _
  $region5: #{feature_extractor_forward.4} parent=0 // pred_fallthru
    _
  // Predicated region
  $region6: #{feature_extractor_forward.4} parent=0 // pred_check
    _
  $region7: #{feature_extractor_forward.4} parent=0 // pred_check_branch
    %11 = sbr.rel (0) target = $region9
  $region8: #{feature_extractor_forward.4} parent=0 // pred_region
    _
  $region9: #{feature_extractor_forward.4} parent=0 // pred_fallthru
    _
  // Predicated region
  $region10: #{feature_extractor_forward.4} parent=0 // pred_check
    _
  $region11: #{feature_extractor_forward.4} parent=0 // pred_check_branch
    %13 = sbr.rel (0) target = $region13
  $region12: #{feature_extractor_forward.4} parent=0 // pred_region
    _
  $region13: #{feature_extractor_forward.4} parent=0 // pred_fallthru
    _
  %v15 = vld [vmem:[%s2] sm:$0x1]
  %v16 = vld [vmem:[%s0] sm:$0xf]
  %v17 = vld [vmem:[%s0 + $0x4] sm:$0xf]
  %v18 = vld [vmem:[%s0 + $0x8] sm:$0xf]
  %v19 = vld [vmem:[%s0 + $0xc] sm:$0xf]
  %v20 = vld [vmem:[%s0 + $0x10] sm:$0xf]
  %v21 = vld [vmem:[%s0 + $0x14] sm:$0xf]
  %v22 = vld [vmem:[%s0 + $0x18] sm:$0xf]
  %v23 = vld [vmem:[%s0 + $0x1c] sm:$0xf]
  %v24 = vld [vmem:[%s0 + $0x20] sm:$0xf]
  %v25 = vld [vmem:[%s1] sm:$0xf]
  %v26 = vld [vmem:[%s1 + $0x4] sm:$0x3]
  %v27 = vld [vmem:[%s0 + $0x24] sm:$0x1]
  %s28 = scalar_lea.vmem %s1, 8
  %v29 = vld [vmem:[%s28] sm:$0xf]
  %v30 = vld [vmem:[%s28 + $0x4] sm:$0x3]
  %v41 = vunpack.c.l.b16 %v16
  %v42 = vunpack.c.l.b16 %v17
  %v43 = vunpack.c.l.b16 %v18
  %v44 = vunpack.c.l.b16 %v19
  %v45 = vunpack.c.l.b16 %v20
  %v46 = vunpack.c.l.b16 %v21
  %v47 = vunpack.c.l.b16 %v22
  %v48 = vunpack.c.l.b16 %v23
  %v49 = vunpack.c.l.b16 %v24
  %v50 = vunpack.c.l.b16 %v27
  %v51 = vpack.c.b16 %v42, %v41
  %v52 = vpack.c.b16 %v44, %v43
  %v53 = vpack.c.b16 %v46, %v45
  %v54 = vpack.c.b16 %v48, %v47
  %v55 = vpack.c.b16 %v50, %v49
  %vm56 = vsmask.f32 7424
  %v58 = vshrl.u32 %v51, 16
  %v60 = vshll.u32 %v51, 16
  %v62 = vrot.slane %v60, 1
  %v63 = vor.u32 %v58, %v62
  %v65 = vshll.u32 %v52, 16
  %v67 = vrot.slane %v65, 1
  %v68 = vsel %vm56, %v63, %v67
  %v69 = vshrl.u32 %v52, 16
  %v71 = vor.u32 %v69, %v67
  %v73 = vshll.u32 %v53, 16
  %v75 = vrot.slane %v73, 1
  %v76 = vsel %vm56, %v71, %v75
  %v77 = vshrl.u32 %v53, 16
  %v79 = vor.u32 %v77, %v75
  %v81 = vshll.u32 %v54, 16
  %v83 = vrot.slane %v81, 1
  %v84 = vsel %vm56, %v79, %v83
  %v85 = vshrl.u32 %v54, 16
  %v87 = vor.u32 %v85, %v83
  %v89 = vshll.u32 %v55, 16
  %v91 = vrot.slane %v89, 1
  %v92 = vsel %vm56, %v87, %v91
  %v93 = vshrl.u32 %v55, 16
  %v95 = vor.u32 %v93, %v91
  %v98 = vunpack.c.l.b16 %v29
  %v99 = vunpack.c.l.b16 %v30
  %v100 = vpack.c.b16 %v99, %v98
  %vm101 = vcmask 97280
  %v103 = vsel %vm101, %v68, 0
  %v106 = vsel %vm101, %v76, 0
  %v109 = vsel %vm101, %v84, 0
  %v112 = vsel %vm101, %v92, 0
  %v115 = vsel %vm101, %v95, 0
  %vm117 = vcmask 1045504
  %v119 = vsel %vm117, %v100, 0
  %121 = vmatprep.subr.bf16.mxu0 0
  %122 = vmatpush1.bf16.msra.mxu0 0
  %123 = vmatprep.subr.bf16.mxu0 0
  %124 = vmatpush1.bf16.msra.mxu0 0
  %125 = vmatprep.subr.bf16.mxu0 0
  %126 = vmatpush1.bf16.msra.mxu0 0
  %127 = vmatprep.subr.bf16.mxu0 0
  %128 = vmatpush1.bf16.msra.mxu0 0
  %129 = vmatprep.subr.bf16.mxu0 0
  %130 = vmatpush1.bf16.msra.mxu0 0
  %131 = vmatprep.subr.bf16.mxu0 0
  %132 = vmatpush1.bf16.msra.mxu0 0
  %133 = vmatprep.subr.bf16.mxu0 0
  %134 = vmatpush1.bf16.msra.mxu0 0
  %135 = vmatprep.subr.bf16.mxu0 0
  %136 = vmatpush1.bf16.msra.mxu0 %v119
  %137 = vmatprep.subr.bf16.mxu0 0
  %138 = vmatpush2.bf16.msra.mxu0 0
  %139 = vmatprep.subr.bf16.mxu0 0
  %140 = vmatpush2.bf16.msra.mxu0 0
  %141 = vmatprep.subr.bf16.mxu0 0
  %142 = vmatpush2.bf16.msra.mxu0 0
  %143 = vmatprep.subr.bf16.mxu0 0
  %144 = vmatpush2.bf16.msra.mxu0 0
  %145 = vmatprep.subr.bf16.mxu0 0
  %146 = vmatpush2.bf16.msra.mxu0 0
  %147 = vmatprep.subr.bf16.mxu0 0
  %148 = vmatpush2.bf16.msra.mxu0 0
  %149 = vmatprep.subr.bf16.mxu0 0
  %150 = vmatpush2.bf16.msra.mxu0 0
  %151 = vmatprep.subr.bf16.mxu0 0
  %152 = vmatpush2.bf16.msra.mxu0 0
  %153 = vmatprep.mubr.bf16.mxu0 0
  %154 = vmatmul.mubr.bf16.gmra.mxu0 %v103
  %v155 = vpop.f32.mrf.mxu0
  %v156 = vadd.f32 0.0, %v155
  %v157 = vpop.f32.mrf.mxu0
  %v158 = vpop.f32.mrf.mxu0
  %v159 = vadd.f32 0.0, %v158
  %v160 = vpop.f32.mrf.mxu0
  %161 = vmatprep.mubr.bf16.mxu0 0
  %162 = vmatmul.mubr.bf16.gmra.mxu0 %v106
  %v163 = vpop.f32.mrf.mxu0
  %v164 = vadd.f32 0.0, %v163
  %v165 = vpop.f32.mrf.mxu0
  %v166 = vpop.f32.mrf.mxu0
  %v167 = vadd.f32 0.0, %v166
  %v168 = vpop.f32.mrf.mxu0
  %169 = vmatprep.mubr.bf16.mxu0 0
  %170 = vmatmul.mubr.bf16.gmra.mxu0 %v109
  %v171 = vpop.f32.mrf.mxu0
  %v172 = vadd.f32 0.0, %v171
  %v173 = vpop.f32.mrf.mxu0
  %v174 = vpop.f32.mrf.mxu0
  %v175 = vadd.f32 0.0, %v174
  %v176 = vpop.f32.mrf.mxu0
  %177 = vmatprep.mubr.bf16.mxu0 0
  %178 = vmatmul.mubr.bf16.gmra.mxu0 %v112
  %v179 = vpop.f32.mrf.mxu0
  %v180 = vadd.f32 0.0, %v179
  %v181 = vpop.f32.mrf.mxu0
  %v182 = vpop.f32.mrf.mxu0
  %v183 = vadd.f32 0.0, %v182
  %v184 = vpop.f32.mrf.mxu0
  %185 = vmatprep.mubr.bf16.mxu0 0
  %186 = vmatmul.mubr.bf16.gmra.mxu0 %v115
  %v187 = vpop.f32.mrf.mxu0
  %v188 = vadd.f32 0.0, %v187
  %v189 = vpop.f32.mrf.mxu0
  %v190 = vpop.f32.mrf.mxu0
  %v191 = vpop.f32.mrf.mxu0
  %192 = vdwg.mxu0
  %v193 = vpack.c.b16 %v49, %v49
  %v196 = vunpack.c.l.b16 %v25
  %v197 = vunpack.c.l.b16 %v26
  %v198 = vpack.c.b16 %v197, %v196
  %v199 = vsel %vm101, %v51, 0
  %v201 = vsel %vm101, %v52, 0
  %v203 = vsel %vm101, %v53, 0
  %v205 = vsel %vm101, %v54, 0
  %v208 = vsel %vm101, %v193, 0
  %v211 = vsel %vm117, %v198, 0
  %213 = vmatprep.subr.bf16.mxu0 0
  %214 = vmatpush1.bf16.msra.mxu0 0
  %215 = vmatprep.subr.bf16.mxu0 0
  %216 = vmatpush1.bf16.msra.mxu0 0
  %217 = vmatprep.subr.bf16.mxu0 0
  %218 = vmatpush1.bf16.msra.mxu0 0
  %219 = vmatprep.subr.bf16.mxu0 0
  %220 = vmatpush1.bf16.msra.mxu0 0
  %221 = vmatprep.subr.bf16.mxu0 0
  %222 = vmatpush1.bf16.msra.mxu0 0
  %223 = vmatprep.subr.bf16.mxu0 0
  %224 = vmatpush1.bf16.msra.mxu0 0
  %225 = vmatprep.subr.bf16.mxu0 0
  %226 = vmatpush1.bf16.msra.mxu0 0
  %227 = vmatprep.subr.bf16.mxu0 0
  %228 = vmatpush1.bf16.msra.mxu0 %v211
  %229 = vmatprep.subr.bf16.mxu0 0
  %230 = vmatpush2.bf16.msra.mxu0 0
  %231 = vmatprep.subr.bf16.mxu0 0
  %232 = vmatpush2.bf16.msra.mxu0 0
  %233 = vmatprep.subr.bf16.mxu0 0
  %234 = vmatpush2.bf16.msra.mxu0 0
  %235 = vmatprep.subr.bf16.mxu0 0
  %236 = vmatpush2.bf16.msra.mxu0 0
  %237 = vmatprep.subr.bf16.mxu0 0
  %238 = vmatpush2.bf16.msra.mxu0 0
  %239 = vmatprep.subr.bf16.mxu0 0
  %240 = vmatpush2.bf16.msra.mxu0 0
  %241 = vmatprep.subr.bf16.mxu0 0
  %242 = vmatpush2.bf16.msra.mxu0 0
  %243 = vmatprep.subr.bf16.mxu0 0
  %244 = vmatpush2.bf16.msra.mxu0 0
  %245 = vmatprep.mubr.bf16.mxu0 0
  %246 = vmatmul.mubr.bf16.gmra.mxu0 %v199
  %v247 = vpop.f32.mrf.mxu0
  %v248 = vadd.f32 %v156, %v247
  %v249 = vpop.f32.mrf.mxu0
  %v250 = vpop.f32.mrf.mxu0
  %v251 = vadd.f32 %v159, %v250
  %v252 = vpop.f32.mrf.mxu0
  %253 = vmatprep.mubr.bf16.mxu0 0
  %254 = vmatmul.mubr.bf16.gmra.mxu0 %v201
  %v255 = vpop.f32.mrf.mxu0
  %v256 = vadd.f32 %v164, %v255
  %v257 = vpop.f32.mrf.mxu0
  %v258 = vpop.f32.mrf.mxu0
  %v259 = vadd.f32 %v167, %v258
  %v260 = vpop.f32.mrf.mxu0
  %261 = vmatprep.mubr.bf16.mxu0 0
  %262 = vmatmul.mubr.bf16.gmra.mxu0 %v203
  %v263 = vpop.f32.mrf.mxu0
  %v264 = vadd.f32 %v172, %v263
  %v265 = vpop.f32.mrf.mxu0
  %v266 = vpop.f32.mrf.mxu0
  %v267 = vadd.f32 %v175, %v266
  %v268 = vpop.f32.mrf.mxu0
  %269 = vmatprep.mubr.bf16.mxu0 0
  %270 = vmatmul.mubr.bf16.gmra.mxu0 %v205
  %v271 = vpop.f32.mrf.mxu0
  %v272 = vadd.f32 %v180, %v271
  %v273 = vpop.f32.mrf.mxu0
  %v274 = vpop.f32.mrf.mxu0
  %v275 = vadd.f32 %v183, %v274
  %v276 = vpop.f32.mrf.mxu0
  %277 = vmatprep.mubr.bf16.mxu0 0
  %278 = vmatmul.mubr.bf16.gmra.mxu0 %v208
  %v279 = vpop.f32.mrf.mxu0
  %v280 = vadd.f32 %v188, %v279
  %v281 = vpop.f32.mrf.mxu0
  %v282 = vpop.f32.mrf.mxu0
  %v283 = vpop.f32.mrf.mxu0
  %284 = vdwg.mxu0
  %v285 = vld [vmem:[%s0 + $0x4] sm:$0xf]
  %v286 = vld [vmem:[%s0 + $0x8] sm:$0xf]
  %v287 = vld [vmem:[%s0 + $0xc] sm:$0xf]
  %v288 = vld [vmem:[%s0 + $0x10] sm:$0xf]
  %v289 = vld [vmem:[%s0 + $0x14] sm:$0xf]
  %v290 = vld [vmem:[%s0 + $0x18] sm:$0xf]
  %v291 = vld [vmem:[%s0 + $0x1c] sm:$0xf]
  %v292 = vld [vmem:[%s0 + $0x20] sm:$0xf]
  %v293 = vld [vmem:[%s0 + $0x24] sm:$0xf]
  %v294 = vld [vmem:[%s0 + $0x28] sm:$0x1]
  %s295 = scalar_lea.vmem %s1, 16
  %v296 = vld [vmem:[%s295] sm:$0xf]
  %v297 = vld [vmem:[%s295 + $0x4] sm:$0x3]
  %v308 = vunpack.c.l.b16 %v285
  %v309 = vunpack.c.l.b16 %v286
  %v310 = vunpack.c.l.b16 %v287
  %v311 = vunpack.c.l.b16 %v288
  %v312 = vunpack.c.l.b16 %v289
  %v313 = vunpack.c.l.b16 %v290
  %v314 = vunpack.c.l.b16 %v291
  %v315 = vunpack.c.l.b16 %v292
  %v316 = vunpack.c.l.b16 %v293
  %v317 = vunpack.c.l.b16 %v294
  %v318 = vpack.c.b16 %v309, %v308
  %v319 = vpack.c.b16 %v311, %v310
  %v320 = vpack.c.b16 %v313, %v312
  %v321 = vpack.c.b16 %v315, %v314
  %v322 = vpack.c.b16 %v317, %v316
  %v324 = vshrl.u32 %v318, 16
  %v326 = vshll.u32 %v318, 16
  %v328 = vrot.slane %v326, 1
  %v329 = vor.u32 %v324, %v328
  %v331 = vshll.u32 %v319, 16
  %v333 = vrot.slane %v331, 1
  %v334 = vsel %vm56, %v329, %v333
  %v335 = vshrl.u32 %v319, 16
  %v337 = vor.u32 %v335, %v333
  %v339 = vshll.u32 %v320, 16
  %v341 = vrot.slane %v339, 1
  %v342 = vsel %vm56, %v337, %v341
  %v343 = vshrl.u32 %v320, 16
  %v345 = vor.u32 %v343, %v341
  %v347 = vshll.u32 %v321, 16
  %v349 = vrot.slane %v347, 1
  %v350 = vsel %vm56, %v345, %v349
  %v351 = vshrl.u32 %v321, 16
  %v353 = vor.u32 %v351, %v349
  %v355 = vshll.u32 %v322, 16
  %v357 = vrot.slane %v355, 1
  %v358 = vsel %vm56, %v353, %v357
  %v359 = vshrl.u32 %v322, 16
  %v361 = vor.u32 %v359, %v357
  %v364 = vunpack.c.l.b16 %v296
  %v365 = vunpack.c.l.b16 %v297
  %v366 = vpack.c.b16 %v365, %v364
  %v368 = vsel %vm101, %v334, 0
  %v371 = vsel %vm101, %v342, 0
  %v374 = vsel %vm101, %v350, 0
  %v377 = vsel %vm101, %v358, 0
  %v380 = vsel %vm101, %v361, 0
  %v383 = vsel %vm117, %v366, 0
  %385 = vmatprep.subr.bf16.mxu0 0
  %386 = vmatpush1.bf16.msra.mxu0 0
  %387 = vmatprep.subr.bf16.mxu0 0
  %388 = vmatpush1.bf16.msra.mxu0 0
  %389 = vmatprep.subr.bf16.mxu0 0
  %390 = vmatpush1.bf16.msra.mxu0 0
  %391 = vmatprep.subr.bf16.mxu0 0
  %392 = vmatpush1.bf16.msra.mxu0 0
  %393 = vmatprep.subr.bf16.mxu0 0
  %394 = vmatpush1.bf16.msra.mxu0 0
  %395 = vmatprep.subr.bf16.mxu0 0
  %396 = vmatpush1.bf16.msra.mxu0 0
  %397 = vmatprep.subr.bf16.mxu0 0
  %398 = vmatpush1.bf16.msra.mxu0 0
  %399 = vmatprep.subr.bf16.mxu0 0
  %400 = vmatpush1.bf16.msra.mxu0 %v383
  %401 = vmatprep.subr.bf16.mxu0 0
  %402 = vmatpush2.bf16.msra.mxu0 0
  %403 = vmatprep.subr.bf16.mxu0 0
  %404 = vmatpush2.bf16.msra.mxu0 0
  %405 = vmatprep.subr.bf16.mxu0 0
  %406 = vmatpush2.bf16.msra.mxu0 0
  %407 = vmatprep.subr.bf16.mxu0 0
  %408 = vmatpush2.bf16.msra.mxu0 0
  %409 = vmatprep.subr.bf16.mxu0 0
  %410 = vmatpush2.bf16.msra.mxu0 0
  %411 = vmatprep.subr.bf16.mxu0 0
  %412 = vmatpush2.bf16.msra.mxu0 0
  %413 = vmatprep.subr.bf16.mxu0 0
  %414 = vmatpush2.bf16.msra.mxu0 0
  %415 = vmatprep.subr.bf16.mxu0 0
  %416 = vmatpush2.bf16.msra.mxu0 0
  %417 = vmatprep.mubr.bf16.mxu0 0
  %418 = vmatmul.mubr.bf16.gmra.mxu0 %v368
  %v419 = vpop.f32.mrf.mxu0
  %v420 = vadd.f32 0.0, %v419
  %v421 = vpop.f32.mrf.mxu0
  %v422 = vpop.f32.mrf.mxu0
  %v423 = vadd.f32 0.0, %v422
  %v424 = vpop.f32.mrf.mxu0
  %425 = vmatprep.mubr.bf16.mxu0 0
  %426 = vmatmul.mubr.bf16.gmra.mxu0 %v371
  %v427 = vpop.f32.mrf.mxu0
  %v428 = vadd.f32 0.0, %v427
  %v429 = vpop.f32.mrf.mxu0
  %v430 = vpop.f32.mrf.mxu0
  %v431 = vadd.f32 0.0, %v430
  %v432 = vpop.f32.mrf.mxu0
  %433 = vmatprep.mubr.bf16.mxu0 0
  %434 = vmatmul.mubr.bf16.gmra.mxu0 %v374
  %v435 = vpop.f32.mrf.mxu0
  %v436 = vadd.f32 0.0, %v435
  %v437 = vpop.f32.mrf.mxu0
  %v438 = vpop.f32.mrf.mxu0
  %v439 = vadd.f32 0.0, %v438
  %v440 = vpop.f32.mrf.mxu0
  %441 = vmatprep.mubr.bf16.mxu0 0
  %442 = vmatmul.mubr.bf16.gmra.mxu0 %v377
  %v443 = vpop.f32.mrf.mxu0
  %v444 = vadd.f32 0.0, %v443
  %v445 = vpop.f32.mrf.mxu0
  %v446 = vpop.f32.mrf.mxu0
  %v447 = vadd.f32 0.0, %v446
  %v448 = vpop.f32.mrf.mxu0
  %449 = vmatprep.mubr.bf16.mxu0 0
  %450 = vmatmul.mubr.bf16.gmra.mxu0 %v380
  %v451 = vpop.f32.mrf.mxu0
  %v452 = vadd.f32 0.0, %v451
  %v453 = vpop.f32.mrf.mxu0
  %v454 = vpop.f32.mrf.mxu0
  %v455 = vpop.f32.mrf.mxu0
  %456 = vdwg.mxu0
  %v457 = vadd.f32 %v248, %v420
  %v458 = vadd.f32 %v251, %v423
  %v459 = vadd.f32 %v256, %v428
  %v460 = vadd.f32 %v259, %v431
  %v461 = vadd.f32 %v264, %v436
  %v462 = vadd.f32 %v267, %v439
  %v463 = vadd.f32 %v272, %v444
  %v464 = vadd.f32 %v275, %v447
  %v465 = vadd.f32 %v280, %v452
  %v466 = vld [vmem:[%s0 + $0x4] sm:$0xe]
  %s467 = scalar_lea.vmem %s1, 24
  %v468 = vld [vmem:[%s467] sm:$0xf]
  %v469 = vld [vmem:[%s467 + $0x4] sm:$0x3]
  %v471 = vunpack.c.l.b16 %v466
  %v472 = vpack.c.b16 %v309, %v471
  %vm473 = vcmask 1046528
  %v474 = vrot.slane %v472, 1
  %v475 = vrot.slane %v319, 1
  %v476 = vsel %vm473, %v474, %v475
  %v477 = vrot.slane %v320, 1
  %v478 = vsel %vm473, %v475, %v477
  %v479 = vrot.slane %v321, 1
  %v480 = vsel %vm473, %v477, %v479
  %v481 = vrot.slane %v322, 1
  %v482 = vsel %vm473, %v479, %v481
  %v485 = vunpack.c.l.b16 %v468
  %v486 = vunpack.c.l.b16 %v469
  %v487 = vpack.c.b16 %v486, %v485
  %v489 = vsel %vm101, %v476, 0
  %v492 = vsel %vm101, %v478, 0
  %v495 = vsel %vm101, %v480, 0
  %v498 = vsel %vm101, %v482, 0
  %v501 = vsel %vm101, %v481, 0
  %v504 = vsel %vm117, %v487, 0
  %506 = vmatprep.subr.bf16.mxu0 0
  %507 = vmatpush1.bf16.msra.mxu0 0
  %508 = vmatprep.subr.bf16.mxu0 0
  %509 = vmatpush1.bf16.msra.mxu0 0
  %510 = vmatprep.subr.bf16.mxu0 0
  %511 = vmatpush1.bf16.msra.mxu0 0
  %512 = vmatprep.subr.bf16.mxu0 0
  %513 = vmatpush1.bf16.msra.mxu0 0
  %514 = vmatprep.subr.bf16.mxu0 0
  %515 = vmatpush1.bf16.msra.mxu0 0
  %516 = vmatprep.subr.bf16.mxu0 0
  %517 = vmatpush1.bf16.msra.mxu0 0
  %518 = vmatprep.subr.bf16.mxu0 0
  %519 = vmatpush1.bf16.msra.mxu0 0
  %520 = vmatprep.subr.bf16.mxu0 0
  %521 = vmatpush1.bf16.msra.mxu0 %v504
  %522 = vmatprep.subr.bf16.mxu0 0
  %523 = vmatpush2.bf16.msra.mxu0 0
  %524 = vmatprep.subr.bf16.mxu0 0
  %525 = vmatpush2.bf16.msra.mxu0 0
  %526 = vmatprep.subr.bf16.mxu0 0
  %527 = vmatpush2.bf16.msra.mxu0 0
  %528 = vmatprep.subr.bf16.mxu0 0
  %529 = vmatpush2.bf16.msra.mxu0 0
  %530 = vmatprep.subr.bf16.mxu0 0
  %531 = vmatpush2.bf16.msra.mxu0 0
  %532 = vmatprep.subr.bf16.mxu0 0
  %533 = vmatpush2.bf16.msra.mxu0 0
  %534 = vmatprep.subr.bf16.mxu0 0
  %535 = vmatpush2.bf16.msra.mxu0 0
  %536 = vmatprep.subr.bf16.mxu0 0
  %537 = vmatpush2.bf16.msra.mxu0 0
  %538 = vmatprep.mubr.bf16.mxu0 0
  %539 = vmatmul.mubr.bf16.gmra.mxu0 %v489
  %v540 = vpop.f32.mrf.mxu0
  %v541 = vadd.f32 0.0, %v540
  %v542 = vpop.f32.mrf.mxu0
  %v543 = vpop.f32.mrf.mxu0
  %v544 = vadd.f32 0.0, %v543
  %v545 = vpop.f32.mrf.mxu0
  %546 = vmatprep.mubr.bf16.mxu0 0
  %547 = vmatmul.mubr.bf16.gmra.mxu0 %v492
  %v548 = vpop.f32.mrf.mxu0
  %v549 = vadd.f32 0.0, %v548
  %v550 = vpop.f32.mrf.mxu0
  %v551 = vpop.f32.mrf.mxu0
  %v552 = vadd.f32 0.0, %v551
  %v553 = vpop.f32.mrf.mxu0
  %554 = vmatprep.mubr.bf16.mxu0 0
  %555 = vmatmul.mubr.bf16.gmra.mxu0 %v495
  %v556 = vpop.f32.mrf.mxu0
  %v557 = vadd.f32 0.0, %v556
  %v558 = vpop.f32.mrf.mxu0
  %v559 = vpop.f32.mrf.mxu0
  %v560 = vadd.f32 0.0, %v559
  %v561 = vpop.f32.mrf.mxu0
  %562 = vmatprep.mubr.bf16.mxu0 0
  %563 = vmatmul.mubr.bf16.gmra.mxu0 %v498
  %v564 = vpop.f32.mrf.mxu0
  %v565 = vadd.f32 0.0, %v564
  %v566 = vpop.f32.mrf.mxu0
  %v567 = vpop.f32.mrf.mxu0
  %v568 = vadd.f32 0.0, %v567
  %v569 = vpop.f32.mrf.mxu0
  %570 = vmatprep.mubr.bf16.mxu0 0
  %571 = vmatmul.mubr.bf16.gmra.mxu0 %v501
  %v572 = vpop.f32.mrf.mxu0
  %v573 = vadd.f32 0.0, %v572
  %v574 = vpop.f32.mrf.mxu0
  %v575 = vpop.f32.mrf.mxu0
  %v576 = vpop.f32.mrf.mxu0
  %577 = vdwg.mxu0
  %v578 = vadd.f32 %v457, %v541
  %v579 = vadd.f32 %v458, %v544
  %v580 = vadd.f32 %v459, %v549
  %v581 = vadd.f32 %v460, %v552
  %v582 = vadd.f32 %v461, %v557
  %v583 = vadd.f32 %v462, %v560
  %v584 = vadd.f32 %v463, %v565
  %v585 = vadd.f32 %v464, %v568
  %v586 = vadd.f32 %v465, %v573
  %v588 = vlaneseq
  %v589 = vshrl.u32 %v588, 7
  %v590 = vsub.s32 0, %v589
  %v591 = vrot.slane %v15, %v590
  %v593 = vadd.f32 %v578, %v591
  %v594 = vadd.f32 %v579, %v591
  %v595 = vadd.f32 %v580, %v591
  %v596 = vadd.f32 %v581, %v591
  %v597 = vadd.f32 %v582, %v591
  %v598 = vadd.f32 %v583, %v591
  %v599 = vadd.f32 %v584, %v591
  %v600 = vadd.f32 %v585, %v591
  %v601 = vadd.f32 %v586, %v591
  %vm602 = vcmp.gt.f32.partialorder %v593, 0.0
  %vm603 = vcmp.gt.f32.partialorder %v594, 0.0
  %vm604 = vcmp.gt.f32.partialorder %v595, 0.0
  %vm605 = vcmp.gt.f32.partialorder %v596, 0.0
  %vm606 = vcmp.gt.f32.partialorder %v597, 0.0
  %vm607 = vcmp.gt.f32.partialorder %v598, 0.0
  %vm608 = vcmp.gt.f32.partialorder %v599, 0.0
  %vm609 = vcmp.gt.f32.partialorder %v600, 0.0
  %vm610 = vcmp.gt.f32.partialorder %v601, 0.0
  %v611 = vmul.f32 %v593, 0.2
  %v612 = vmul.f32 %v594, 0.2
  %v613 = vmul.f32 %v595, 0.2
  %v614 = vmul.f32 %v596, 0.2
  %v615 = vmul.f32 %v597, 0.2
  %v616 = vmul.f32 %v598, 0.2
  %v617 = vmul.f32 %v599, 0.2
  %v618 = vmul.f32 %v600, 0.2
  %v619 = vmul.f32 %v601, 0.2
  %v620 = vsel %vm602, %v593, %v611
  %v621 = vsel %vm603, %v594, %v612
  %v622 = vsel %vm604, %v595, %v613
  %v623 = vsel %vm605, %v596, %v614
  %v624 = vsel %vm606, %v597, %v615
  %v625 = vsel %vm607, %v598, %v616
  %v626 = vsel %vm608, %v599, %v617
  %v627 = vsel %vm609, %v600, %v618
  %v628 = vsel %vm610, %v601, %v619
  %v629 = vpack.c.bf16 %v621, %v620
  %v630 = vpack.c.bf16 %v623, %v622
  %v631 = vpack.c.bf16 %v625, %v624
  %v632 = vpack.c.bf16 %v627, %v626
  %v633 = vpack.c.bf16 %v628, %v628
  %v639 = vunpack.c.l.b16 %v629
  %v640 = vunpack.c.h.b16 %v629
  %v641 = vunpack.c.l.b16 %v630
  %v642 = vunpack.c.h.b16 %v630
  %v643 = vunpack.c.l.b16 %v631
  %v644 = vunpack.c.h.b16 %v631
  %v645 = vunpack.c.l.b16 %v632
  %v646 = vunpack.c.h.b16 %v632
  %v647 = vunpack.c.l.b16 %v633
  %v648 = vpack.c.b16 %v639, %v639
  %v649 = vpack.c.b16 %v640, %v640
  %v650 = vpack.c.b16 %v641, %v641
  %v651 = vpack.c.b16 %v642, %v642
  %v652 = vpack.c.b16 %v643, %v643
  %v653 = vpack.c.b16 %v644, %v644
  %v654 = vpack.c.b16 %v645, %v645
  %v655 = vpack.c.b16 %v646, %v646
  %v656 = vpack.c.b16 %v647, %v647
  %666 = vst [vmem:[%s3] sm:$0xf] %v648
  %667 = vst [vmem:[%s3 + $0x4] sm:$0xf] %v649
  %668 = vst [vmem:[%s3 + $0x8] sm:$0xf] %v650
  %669 = vst [vmem:[%s3 + $0xc] sm:$0xf] %v651
  %670 = vst [vmem:[%s3 + $0x10] sm:$0xf] %v652
  %671 = vst [vmem:[%s3 + $0x14] sm:$0xf] %v653
  %672 = vst [vmem:[%s3 + $0x18] sm:$0xf] %v654
  %673 = vst [vmem:[%s3 + $0x1c] sm:$0xf] %v655
  %674 = vst [vmem:[%s3 + $0x20] sm:$0xf] %v656
  %s675 = scalar_lea.vmem %s0, 44
  %v676 = vld [vmem:[%s675] sm:$0xf]
  %v677 = vld [vmem:[%s675 + $0x4] sm:$0xf]
  %v678 = vld [vmem:[%s675 + $0x8] sm:$0xf]
  %v679 = vld [vmem:[%s675 + $0xc] sm:$0xf]
  %v680 = vld [vmem:[%s675 + $0x10] sm:$0xf]
  %v681 = vld [vmem:[%s675 + $0x14] sm:$0xf]
  %v682 = vld [vmem:[%s675 + $0x18] sm:$0xf]
  %v683 = vld [vmem:[%s675 + $0x1c] sm:$0xf]
  %v684 = vld [vmem:[%s675 + $0x20] sm:$0xf]
  %v685 = vld [vmem:[%s1] sm:$0xf]
  %v686 = vld [vmem:[%s1 + $0x4] sm:$0x3]
  %v687 = vld [vmem:[%s675 + $0x24] sm:$0x1]
  %v688 = vld [vmem:[%s28] sm:$0xf]
  %v689 = vld [vmem:[%s28 + $0x4] sm:$0x3]
  %v700 = vunpack.c.l.b16 %v676
  %v701 = vunpack.c.l.b16 %v677
  %v702 = vunpack.c.l.b16 %v678
  %v703 = vunpack.c.l.b16 %v679
  %v704 = vunpack.c.l.b16 %v680
  %v705 = vunpack.c.l.b16 %v681
  %v706 = vunpack.c.l.b16 %v682
  %v707 = vunpack.c.l.b16 %v683
  %v708 = vunpack.c.l.b16 %v684
  %v709 = vunpack.c.l.b16 %v687
  %v710 = vpack.c.b16 %v701, %v700
  %v711 = vpack.c.b16 %v703, %v702
  %v712 = vpack.c.b16 %v705, %v704
  %v713 = vpack.c.b16 %v707, %v706
  %v714 = vpack.c.b16 %v709, %v708
  %v716 = vshrl.u32 %v710, 16
  %v718 = vshll.u32 %v710, 16
  %v720 = vrot.slane %v718, 1
  %v721 = vor.u32 %v716, %v720
  %v723 = vshll.u32 %v711, 16
  %v725 = vrot.slane %v723, 1
  %v726 = vsel %vm56, %v721, %v725
  %v727 = vshrl.u32 %v711, 16
  %v729 = vor.u32 %v727, %v725
  %v731 = vshll.u32 %v712, 16
  %v733 = vrot.slane %v731, 1
  %v734 = vsel %vm56, %v729, %v733
  %v735 = vshrl.u32 %v712, 16
  %v737 = vor.u32 %v735, %v733
  %v739 = vshll.u32 %v713, 16
  %v741 = vrot.slane %v739, 1
  %v742 = vsel %vm56, %v737, %v741
  %v743 = vshrl.u32 %v713, 16
  %v745 = vor.u32 %v743, %v741
  %v747 = vshll.u32 %v714, 16
  %v749 = vrot.slane %v747, 1
  %v750 = vsel %vm56, %v745, %v749
  %v751 = vshrl.u32 %v714, 16
  %v753 = vor.u32 %v751, %v749
  %v756 = vunpack.c.l.b16 %v688
  %v757 = vunpack.c.l.b16 %v689
  %v758 = vpack.c.b16 %v757, %v756
  %v760 = vsel %vm101, %v726, 0
  %v763 = vsel %vm101, %v734, 0
  %v766 = vsel %vm101, %v742, 0
  %v769 = vsel %vm101, %v750, 0
  %v772 = vsel %vm101, %v753, 0
  %v775 = vsel %vm117, %v758, 0
  %777 = vmatprep.subr.bf16.mxu0 0
  %778 = vmatpush1.bf16.msra.mxu0 0
  %779 = vmatprep.subr.bf16.mxu0 0
  %780 = vmatpush1.bf16.msra.mxu0 0
  %781 = vmatprep.subr.bf16.mxu0 0
  %782 = vmatpush1.bf16.msra.mxu0 0
  %783 = vmatprep.subr.bf16.mxu0 0
  %784 = vmatpush1.bf16.msra.mxu0 0
  %785 = vmatprep.subr.bf16.mxu0 0
  %786 = vmatpush1.bf16.msra.mxu0 0
  %787 = vmatprep.subr.bf16.mxu0 0
  %788 = vmatpush1.bf16.msra.mxu0 0
  %789 = vmatprep.subr.bf16.mxu0 0
  %790 = vmatpush1.bf16.msra.mxu0 0
  %791 = vmatprep.subr.bf16.mxu0 0
  %792 = vmatpush1.bf16.msra.mxu0 %v775
  %793 = vmatprep.subr.bf16.mxu0 0
  %794 = vmatpush2.bf16.msra.mxu0 0
  %795 = vmatprep.subr.bf16.mxu0 0
  %796 = vmatpush2.bf16.msra.mxu0 0
  %797 = vmatprep.subr.bf16.mxu0 0
  %798 = vmatpush2.bf16.msra.mxu0 0
  %799 = vmatprep.subr.bf16.mxu0 0
  %800 = vmatpush2.bf16.msra.mxu0 0
  %801 = vmatprep.subr.bf16.mxu0 0
  %802 = vmatpush2.bf16.msra.mxu0 0
  %803 = vmatprep.subr.bf16.mxu0 0
  %804 = vmatpush2.bf16.msra.mxu0 0
  %805 = vmatprep.subr.bf16.mxu0 0
  %806 = vmatpush2.bf16.msra.mxu0 0
  %807 = vmatprep.subr.bf16.mxu0 0
  %808 = vmatpush2.bf16.msra.mxu0 0
  %809 = vmatprep.mubr.bf16.mxu0 0
  %810 = vmatmul.mubr.bf16.gmra.mxu0 %v760
  %v811 = vpop.f32.mrf.mxu0
  %v812 = vadd.f32 0.0, %v811
  %v813 = vpop.f32.mrf.mxu0
  %v814 = vpop.f32.mrf.mxu0
  %v815 = vadd.f32 0.0, %v814
  %v816 = vpop.f32.mrf.mxu0
  %817 = vmatprep.mubr.bf16.mxu0 0
  %818 = vmatmul.mubr.bf16.gmra.mxu0 %v763
  %v819 = vpop.f32.mrf.mxu0
  %v820 = vadd.f32 0.0, %v819
  %v821 = vpop.f32.mrf.mxu0
  %v822 = vpop.f32.mrf.mxu0
  %v823 = vadd.f32 0.0, %v822
  %v824 = vpop.f32.mrf.mxu0
  %825 = vmatprep.mubr.bf16.mxu0 0
  %826 = vmatmul.mubr.bf16.gmra.mxu0 %v766
  %v827 = vpop.f32.mrf.mxu0
  %v828 = vadd.f32 0.0, %v827
  %v829 = vpop.f32.mrf.mxu0
  %v830 = vpop.f32.mrf.mxu0
  %v831 = vadd.f32 0.0, %v830
  %v832 = vpop.f32.mrf.mxu0
  %833 = vmatprep.mubr.bf16.mxu0 0
  %834 = vmatmul.mubr.bf16.gmra.mxu0 %v769
  %v835 = vpop.f32.mrf.mxu0
  %v836 = vadd.f32 0.0, %v835
  %v837 = vpop.f32.mrf.mxu0
  %v838 = vpop.f32.mrf.mxu0
  %v839 = vadd.f32 0.0, %v838
  %v840 = vpop.f32.mrf.mxu0
  %841 = vmatprep.mubr.bf16.mxu0 0
  %842 = vmatmul.mubr.bf16.gmra.mxu0 %v772
  %v843 = vpop.f32.mrf.mxu0
  %v844 = vadd.f32 0.0, %v843
  %v845 = vpop.f32.mrf.mxu0
  %v846 = vpop.f32.mrf.mxu0
  %v847 = vpop.f32.mrf.mxu0
  %848 = vdwg.mxu0
  %v849 = vpack.c.b16 %v708, %v708
  %v852 = vunpack.c.l.b16 %v685
  %v853 = vunpack.c.l.b16 %v686
  %v854 = vpack.c.b16 %v853, %v852
  %v855 = vsel %vm101, %v710, 0
  %v857 = vsel %vm101, %v711, 0
  %v859 = vsel %vm101, %v712, 0
  %v861 = vsel %vm101, %v713, 0
  %v864 = vsel %vm101, %v849, 0
  %v867 = vsel %vm117, %v854, 0
  %869 = vmatprep.subr.bf16.mxu0 0
  %870 = vmatpush1.bf16.msra.mxu0 0
  %871 = vmatprep.subr.bf16.mxu0 0
  %872 = vmatpush1.bf16.msra.mxu0 0
  %873 = vmatprep.subr.bf16.mxu0 0
  %874 = vmatpush1.bf16.msra.mxu0 0
  %875 = vmatprep.subr.bf16.mxu0 0
  %876 = vmatpush1.bf16.msra.mxu0 0
  %877 = vmatprep.subr.bf16.mxu0 0
  %878 = vmatpush1.bf16.msra.mxu0 0
  %879 = vmatprep.subr.bf16.mxu0 0
  %880 = vmatpush1.bf16.msra.mxu0 0
  %881 = vmatprep.subr.bf16.mxu0 0
  %882 = vmatpush1.bf16.msra.mxu0 0
  %883 = vmatprep.subr.bf16.mxu0 0
  %884 = vmatpush1.bf16.msra.mxu0 %v867
  %885 = vmatprep.subr.bf16.mxu0 0
  %886 = vmatpush2.bf16.msra.mxu0 0
  %887 = vmatprep.subr.bf16.mxu0 0
  %888 = vmatpush2.bf16.msra.mxu0 0
  %889 = vmatprep.subr.bf16.mxu0 0
  %890 = vmatpush2.bf16.msra.mxu0 0
  %891 = vmatprep.subr.bf16.mxu0 0
  %892 = vmatpush2.bf16.msra.mxu0 0
  %893 = vmatprep.subr.bf16.mxu0 0
  %894 = vmatpush2.bf16.msra.mxu0 0
  %895 = vmatprep.subr.bf16.mxu0 0
  %896 = vmatpush2.bf16.msra.mxu0 0
  %897 = vmatprep.subr.bf16.mxu0 0
  %898 = vmatpush2.bf16.msra.mxu0 0
  %899 = vmatprep.subr.bf16.mxu0 0
  %900 = vmatpush2.bf16.msra.mxu0 0
  %901 = vmatprep.mubr.bf16.mxu0 0
  %902 = vmatmul.mubr.bf16.gmra.mxu0 %v855
  %v903 = vpop.f32.mrf.mxu0
  %v904 = vadd.f32 %v812, %v903
  %v905 = vpop.f32.mrf.mxu0
  %v906 = vpop.f32.mrf.mxu0
  %v907 = vadd.f32 %v815, %v906
  %v908 = vpop.f32.mrf.mxu0
  %909 = vmatprep.mubr.bf16.mxu0 0
  %910 = vmatmul.mubr.bf16.gmra.mxu0 %v857
  %v911 = vpop.f32.mrf.mxu0
  %v912 = vadd.f32 %v820, %v911
  %v913 = vpop.f32.mrf.mxu0
  %v914 = vpop.f32.mrf.mxu0
  %v915 = vadd.f32 %v823, %v914
  %v916 = vpop.f32.mrf.mxu0
  %917 = vmatprep.mubr.bf16.mxu0 0
  %918 = vmatmul.mubr.bf16.gmra.mxu0 %v859
  %v919 = vpop.f32.mrf.mxu0
  %v920 = vadd.f32 %v828, %v919
  %v921 = vpop.f32.mrf.mxu0
  %v922 = vpop.f32.mrf.mxu0
  %v923 = vadd.f32 %v831, %v922
  %v924 = vpop.f32.mrf.mxu0
  %925 = vmatprep.mubr.bf16.mxu0 0
  %926 = vmatmul.mubr.bf16.gmra.mxu0 %v861
  %v927 = vpop.f32.mrf.mxu0
  %v928 = vadd.f32 %v836, %v927
  %v929 = vpop.f32.mrf.mxu0
  %v930 = vpop.f32.mrf.mxu0
  %v931 = vadd.f32 %v839, %v930
  %v932 = vpop.f32.mrf.mxu0
  %933 = vmatprep.mubr.bf16.mxu0 0
  %934 = vmatmul.mubr.bf16.gmra.mxu0 %v864
  %v935 = vpop.f32.mrf.mxu0
  %v936 = vadd.f32 %v844, %v935
  %v937 = vpop.f32.mrf.mxu0
  %v938 = vpop.f32.mrf.mxu0
  %v939 = vpop.f32.mrf.mxu0
  %940 = vdwg.mxu0
  %v941 = vld [vmem:[%s675 + $0x4] sm:$0xf]
  %v942 = vld [vmem:[%s675 + $0x8] sm:$0xf]
  %v943 = vld [vmem:[%s675 + $0xc] sm:$0xf]
  %v944 = vld [vmem:[%s675 + $0x10] sm:$0xf]
  %v945 = vld [vmem:[%s675 + $0x14] sm:$0xf]
  %v946 = vld [vmem:[%s675 + $0x18] sm:$0xf]
  %v947 = vld [vmem:[%s675 + $0x1c] sm:$0xf]
  %v948 = vld [vmem:[%s675 + $0x20] sm:$0xf]
  %v949 = vld [vmem:[%s675 + $0x24] sm:$0xf]
  %v950 = vld [vmem:[%s675 + $0x28] sm:$0x1]
  %v951 = vld [vmem:[%s295] sm:$0xf]
  %v952 = vld [vmem:[%s295 + $0x4] sm:$0x3]
  %v963 = vunpack.c.l.b16 %v941
  %v964 = vunpack.c.l.b16 %v942
  %v965 = vunpack.c.l.b16 %v943
  %v966 = vunpack.c.l.b16 %v944
  %v967 = vunpack.c.l.b16 %v945
  %v968 = vunpack.c.l.b16 %v946
  %v969 = vunpack.c.l.b16 %v947
  %v970 = vunpack.c.l.b16 %v948
  %v971 = vunpack.c.l.b16 %v949
  %v972 = vunpack.c.l.b16 %v950
  %v973 = vpack.c.b16 %v964, %v963
  %v974 = vpack.c.b16 %v966, %v965
  %v975 = vpack.c.b16 %v968, %v967
  %v976 = vpack.c.b16 %v970, %v969
  %v977 = vpack.c.b16 %v972, %v971
  %v979 = vshrl.u32 %v973, 16
  %v981 = vshll.u32 %v973, 16
  %v983 = vrot.slane %v981, 1
  %v984 = vor.u32 %v979, %v983
  %v986 = vshll.u32 %v974, 16
  %v988 = vrot.slane %v986, 1
  %v989 = vsel %vm56, %v984, %v988
  %v990 = vshrl.u32 %v974, 16
  %v992 = vor.u32 %v990, %v988
  %v994 = vshll.u32 %v975, 16
  %v996 = vrot.slane %v994, 1
  %v997 = vsel %vm56, %v992, %v996
  %v998 = vshrl.u32 %v975, 16
  %v1000 = vor.u32 %v998, %v996
  %v1002 = vshll.u32 %v976, 16
  %v1004 = vrot.slane %v1002, 1
  %v1005 = vsel %vm56, %v1000, %v1004
  %v1006 = vshrl.u32 %v976, 16
  %v1008 = vor.u32 %v1006, %v1004
  %v1010 = vshll.u32 %v977, 16
  %v1012 = vrot.slane %v1010, 1
  %v1013 = vsel %vm56, %v1008, %v1012
  %v1014 = vshrl.u32 %v977, 16
  %v1016 = vor.u32 %v1014, %v1012
  %v1019 = vunpack.c.l.b16 %v951
  %v1020 = vunpack.c.l.b16 %v952
  %v1021 = vpack.c.b16 %v1020, %v1019
  %v1023 = vsel %vm101, %v989, 0
  %v1026 = vsel %vm101, %v997, 0
  %v1029 = vsel %vm101, %v1005, 0
  %v1032 = vsel %vm101, %v1013, 0
  %v1035 = vsel %vm101, %v1016, 0
  %v1038 = vsel %vm117, %v1021, 0
  %1040 = vmatprep.subr.bf16.mxu0 0
  %1041 = vmatpush1.bf16.msra.mxu0 0
  %1042 = vmatprep.subr.bf16.mxu0 0
  %1043 = vmatpush1.bf16.msra.mxu0 0
  %1044 = vmatprep.subr.bf16.mxu0 0
  %1045 = vmatpush1.bf16.msra.mxu0 0
  %1046 = vmatprep.subr.bf16.mxu0 0
  %1047 = vmatpush1.bf16.msra.mxu0 0
  %1048 = vmatprep.subr.bf16.mxu0 0
  %1049 = vmatpush1.bf16.msra.mxu0 0
  %1050 = vmatprep.subr.bf16.mxu0 0
  %1051 = vmatpush1.bf16.msra.mxu0 0
  %1052 = vmatprep.subr.bf16.mxu0 0
  %1053 = vmatpush1.bf16.msra.mxu0 0
  %1054 = vmatprep.subr.bf16.mxu0 0
  %1055 = vmatpush1.bf16.msra.mxu0 %v1038
  %1056 = vmatprep.subr.bf16.mxu0 0
  %1057 = vmatpush2.bf16.msra.mxu0 0
  %1058 = vmatprep.subr.bf16.mxu0 0
  %1059 = vmatpush2.bf16.msra.mxu0 0
  %1060 = vmatprep.subr.bf16.mxu0 0
  %1061 = vmatpush2.bf16.msra.mxu0 0
  %1062 = vmatprep.subr.bf16.mxu0 0
  %1063 = vmatpush2.bf16.msra.mxu0 0
  %1064 = vmatprep.subr.bf16.mxu0 0
  %1065 = vmatpush2.bf16.msra.mxu0 0
  %1066 = vmatprep.subr.bf16.mxu0 0
  %1067 = vmatpush2.bf16.msra.mxu0 0
  %1068 = vmatprep.subr.bf16.mxu0 0
  %1069 = vmatpush2.bf16.msra.mxu0 0
  %1070 = vmatprep.subr.bf16.mxu0 0
  %1071 = vmatpush2.bf16.msra.mxu0 0
  %1072 = vmatprep.mubr.bf16.mxu0 0
  %1073 = vmatmul.mubr.bf16.gmra.mxu0 %v1023
  %v1074 = vpop.f32.mrf.mxu0
  %v1075 = vadd.f32 0.0, %v1074
  %v1076 = vpop.f32.mrf.mxu0
  %v1077 = vpop.f32.mrf.mxu0
  %v1078 = vadd.f32 0.0, %v1077
  %v1079 = vpop.f32.mrf.mxu0
  %1080 = vmatprep.mubr.bf16.mxu0 0
  %1081 = vmatmul.mubr.bf16.gmra.mxu0 %v1026
  %v1082 = vpop.f32.mrf.mxu0
  %v1083 = vadd.f32 0.0, %v1082
  %v1084 = vpop.f32.mrf.mxu0
  %v1085 = vpop.f32.mrf.mxu0
  %v1086 = vadd.f32 0.0, %v1085
  %v1087 = vpop.f32.mrf.mxu0
  %1088 = vmatprep.mubr.bf16.mxu0 0
  %1089 = vmatmul.mubr.bf16.gmra.mxu0 %v1029
  %v1090 = vpop.f32.mrf.mxu0
  %v1091 = vadd.f32 0.0, %v1090
  %v1092 = vpop.f32.mrf.mxu0
  %v1093 = vpop.f32.mrf.mxu0
  %v1094 = vadd.f32 0.0, %v1093
  %v1095 = vpop.f32.mrf.mxu0
  %1096 = vmatprep.mubr.bf16.mxu0 0
  %1097 = vmatmul.mubr.bf16.gmra.mxu0 %v1032
  %v1098 = vpop.f32.mrf.mxu0
  %v1099 = vadd.f32 0.0, %v1098
  %v1100 = vpop.f32.mrf.mxu0
  %v1101 = vpop.f32.mrf.mxu0
  %v1102 = vadd.f32 0.0, %v1101
  %v1103 = vpop.f32.mrf.mxu0
  %1104 = vmatprep.mubr.bf16.mxu0 0
  %1105 = vmatmul.mubr.bf16.gmra.mxu0 %v1035
  %v1106 = vpop.f32.mrf.mxu0
  %v1107 = vadd.f32 0.0, %v1106
  %v1108 = vpop.f32.mrf.mxu0
  %v1109 = vpop.f32.mrf.mxu0
  %v1110 = vpop.f32.mrf.mxu0
  %1111 = vdwg.mxu0
  %v1112 = vadd.f32 %v904, %v1075
  %v1113 = vadd.f32 %v907, %v1078
  %v1114 = vadd.f32 %v912, %v1083
  %v1115 = vadd.f32 %v915, %v1086
  %v1116 = vadd.f32 %v920, %v1091
  %v1117 = vadd.f32 %v923, %v1094
  %v1118 = vadd.f32 %v928, %v1099
  %v1119 = vadd.f32 %v931, %v1102
  %v1120 = vadd.f32 %v936, %v1107
  %v1121 = vld [vmem:[%s675 + $0x4] sm:$0xe]
  %v1122 = vld [vmem:[%s467] sm:$0xf]
  %v1123 = vld [vmem:[%s467 + $0x4] sm:$0x3]
  %v1125 = vunpack.c.l.b16 %v1121
  %v1126 = vpack.c.b16 %v964, %v1125
  %v1127 = vrot.slane %v1126, 1
  %v1128 = vrot.slane %v974, 1
  %v1129 = vsel %vm473, %v1127, %v1128
  %v1130 = vrot.slane %v975, 1
  %v1131 = vsel %vm473, %v1128, %v1130
  %v1132 = vrot.slane %v976, 1
  %v1133 = vsel %vm473, %v1130, %v1132
  %v1134 = vrot.slane %v977, 1
  %v1135 = vsel %vm473, %v1132, %v1134
  %v1138 = vunpack.c.l.b16 %v1122
  %v1139 = vunpack.c.l.b16 %v1123
  %v1140 = vpack.c.b16 %v1139, %v1138
  %v1142 = vsel %vm101, %v1129, 0
  %v1145 = vsel %vm101, %v1131, 0
  %v1148 = vsel %vm101, %v1133, 0
  %v1151 = vsel %vm101, %v1135, 0
  %v1154 = vsel %vm101, %v1134, 0
  %v1157 = vsel %vm117, %v1140, 0
  %1159 = vmatprep.subr.bf16.mxu0 0
  %1160 = vmatpush1.bf16.msra.mxu0 0
  %1161 = vmatprep.subr.bf16.mxu0 0
  %1162 = vmatpush1.bf16.msra.mxu0 0
  %1163 = vmatprep.subr.bf16.mxu0 0
  %1164 = vmatpush1.bf16.msra.mxu0 0
  %1165 = vmatprep.subr.bf16.mxu0 0
  %1166 = vmatpush1.bf16.msra.mxu0 0
  %1167 = vmatprep.subr.bf16.mxu0 0
  %1168 = vmatpush1.bf16.msra.mxu0 0
  %1169 = vmatprep.subr.bf16.mxu0 0
  %1170 = vmatpush1.bf16.msra.mxu0 0
  %1171 = vmatprep.subr.bf16.mxu0 0
  %1172 = vmatpush1.bf16.msra.mxu0 0
  %1173 = vmatprep.subr.bf16.mxu0 0
  %1174 = vmatpush1.bf16.msra.mxu0 %v1157
  %1175 = vmatprep.subr.bf16.mxu0 0
  %1176 = vmatpush2.bf16.msra.mxu0 0
  %1177 = vmatprep.subr.bf16.mxu0 0
  %1178 = vmatpush2.bf16.msra.mxu0 0
  %1179 = vmatprep.subr.bf16.mxu0 0
  %1180 = vmatpush2.bf16.msra.mxu0 0
  %1181 = vmatprep.subr.bf16.mxu0 0
  %1182 = vmatpush2.bf16.msra.mxu0 0
  %1183 = vmatprep.subr.bf16.mxu0 0
  %1184 = vmatpush2.bf16.msra.mxu0 0
  %1185 = vmatprep.subr.bf16.mxu0 0
  %1186 = vmatpush2.bf16.msra.mxu0 0
  %1187 = vmatprep.subr.bf16.mxu0 0
  %1188 = vmatpush2.bf16.msra.mxu0 0
  %1189 = vmatprep.subr.bf16.mxu0 0
  %1190 = vmatpush2.bf16.msra.mxu0 0
  %1191 = vmatprep.mubr.bf16.mxu0 0
  %1192 = vmatmul.mubr.bf16.gmra.mxu0 %v1142
  %v1193 = vpop.f32.mrf.mxu0
  %v1194 = vadd.f32 0.0, %v1193
  %v1195 = vpop.f32.mrf.mxu0
  %v1196 = vpop.f32.mrf.mxu0
  %v1197 = vadd.f32 0.0, %v1196
  %v1198 = vpop.f32.mrf.mxu0
  %1199 = vmatprep.mubr.bf16.mxu0 0
  %1200 = vmatmul.mubr.bf16.gmra.mxu0 %v1145
  %v1201 = vpop.f32.mrf.mxu0
  %v1202 = vadd.f32 0.0, %v1201
  %v1203 = vpop.f32.mrf.mxu0
  %v1204 = vpop.f32.mrf.mxu0
  %v1205 = vadd.f32 0.0, %v1204
  %v1206 = vpop.f32.mrf.mxu0
  %1207 = vmatprep.mubr.bf16.mxu0 0
  %1208 = vmatmul.mubr.bf16.gmra.mxu0 %v1148
  %v1209 = vpop.f32.mrf.mxu0
  %v1210 = vadd.f32 0.0, %v1209
  %v1211 = vpop.f32.mrf.mxu0
  %v1212 = vpop.f32.mrf.mxu0
  %v1213 = vadd.f32 0.0, %v1212
  %v1214 = vpop.f32.mrf.mxu0
  %1215 = vmatprep.mubr.bf16.mxu0 0
  %1216 = vmatmul.mubr.bf16.gmra.mxu0 %v1151
  %v1217 = vpop.f32.mrf.mxu0
  %v1218 = vadd.f32 0.0, %v1217
  %v1219 = vpop.f32.mrf.mxu0
  %v1220 = vpop.f32.mrf.mxu0
  %v1221 = vadd.f32 0.0, %v1220
  %v1222 = vpop.f32.mrf.mxu0
  %1223 = vmatprep.mubr.bf16.mxu0 0
  %1224 = vmatmul.mubr.bf16.gmra.mxu0 %v1154
  %v1225 = vpop.f32.mrf.mxu0
  %v1226 = vadd.f32 0.0, %v1225
  %v1227 = vpop.f32.mrf.mxu0
  %v1228 = vpop.f32.mrf.mxu0
  %v1229 = vpop.f32.mrf.mxu0
  %1230 = vdwg.mxu0
  %v1231 = vadd.f32 %v1112, %v1194
  %v1232 = vadd.f32 %v1113, %v1197
  %v1233 = vadd.f32 %v1114, %v1202
  %v1234 = vadd.f32 %v1115, %v1205
  %v1235 = vadd.f32 %v1116, %v1210
  %v1236 = vadd.f32 %v1117, %v1213
  %v1237 = vadd.f32 %v1118, %v1218
  %v1238 = vadd.f32 %v1119, %v1221
  %v1239 = vadd.f32 %v1120, %v1226
  %v1240 = vadd.f32 %v1231, %v591
  %v1241 = vadd.f32 %v1232, %v591
  %v1242 = vadd.f32 %v1233, %v591
  %v1243 = vadd.f32 %v1234, %v591
  %v1244 = vadd.f32 %v1235, %v591
  %v1245 = vadd.f32 %v1236, %v591
  %v1246 = vadd.f32 %v1237, %v591
  %v1247 = vadd.f32 %v1238, %v591
  %v1248 = vadd.f32 %v1239, %v591
  %vm1249 = vcmp.gt.f32.partialorder %v1240, 0.0
  %vm1250 = vcmp.gt.f32.partialorder %v1241, 0.0
  %vm1251 = vcmp.gt.f32.partialorder %v1242, 0.0
  %vm1252 = vcmp.gt.f32.partialorder %v1243, 0.0
  %vm1253 = vcmp.gt.f32.partialorder %v1244, 0.0
  %vm1254 = vcmp.gt.f32.partialorder %v1245, 0.0
  %vm1255 = vcmp.gt.f32.partialorder %v1246, 0.0
  %vm1256 = vcmp.gt.f32.partialorder %v1247, 0.0
  %vm1257 = vcmp.gt.f32.partialorder %v1248, 0.0
  %v1258 = vmul.f32 %v1240, 0.2
  %v1259 = vmul.f32 %v1241, 0.2
  %v1260 = vmul.f32 %v1242, 0.2
  %v1261 = vmul.f32 %v1243, 0.2
  %v1262 = vmul.f32 %v1244, 0.2
  %v1263 = vmul.f32 %v1245, 0.2
  %v1264 = vmul.f32 %v1246, 0.2
  %v1265 = vmul.f32 %v1247, 0.2
  %v1266 = vmul.f32 %v1248, 0.2
  %v1267 = vsel %vm1249, %v1240, %v1258
  %v1268 = vsel %vm1250, %v1241, %v1259
  %v1269 = vsel %vm1251, %v1242, %v1260
  %v1270 = vsel %vm1252, %v1243, %v1261
  %v1271 = vsel %vm1253, %v1244, %v1262
  %v1272 = vsel %vm1254, %v1245, %v1263
  %v1273 = vsel %vm1255, %v1246, %v1264
  %v1274 = vsel %vm1256, %v1247, %v1265
  %v1275 = vsel %vm1257, %v1248, %v1266
  %v1276 = vpack.c.bf16 %v1268, %v1267
  %v1277 = vpack.c.bf16 %v1270, %v1269
  %v1278 = vpack.c.bf16 %v1272, %v1271
  %v1279 = vpack.c.bf16 %v1274, %v1273
  %v1280 = vpack.c.bf16 %v1275, %v1275
  %v1286 = vunpack.c.l.b16 %v1276
  %v1287 = vunpack.c.h.b16 %v1276
  %v1288 = vunpack.c.l.b16 %v1277
  %v1289 = vunpack.c.h.b16 %v1277
  %v1290 = vunpack.c.l.b16 %v1278
  %v1291 = vunpack.c.h.b16 %v1278
  %v1292 = vunpack.c.l.b16 %v1279
  %v1293 = vunpack.c.h.b16 %v1279
  %v1294 = vunpack.c.l.b16 %v1280
  %v1295 = vpack.c.b16 %v1286, %v1286
  %v1296 = vpack.c.b16 %v1287, %v1287
  %v1297 = vpack.c.b16 %v1288, %v1288
  %v1298 = vpack.c.b16 %v1289, %v1289
  %v1299 = vpack.c.b16 %v1290, %v1290
  %v1300 = vpack.c.b16 %v1291, %v1291
  %v1301 = vpack.c.b16 %v1292, %v1292
  %v1302 = vpack.c.b16 %v1293, %v1293
  %v1303 = vpack.c.b16 %v1294, %v1294
  %s1313 = scalar_lea.vmem %s3, 36
  %1314 = vst [vmem:[%s1313] sm:$0xf] %v1295
  %1315 = vst [vmem:[%s1313 + $0x4] sm:$0xf] %v1296
  %1316 = vst [vmem:[%s1313 + $0x8] sm:$0xf] %v1297
  %1317 = vst [vmem:[%s1313 + $0xc] sm:$0xf] %v1298
  %1318 = vst [vmem:[%s1313 + $0x10] sm:$0xf] %v1299
  %1319 = vst [vmem:[%s1313 + $0x14] sm:$0xf] %v1300
  %1320 = vst [vmem:[%s1313 + $0x18] sm:$0xf] %v1301
  %1321 = vst [vmem:[%s1313 + $0x1c] sm:$0xf] %v1302
  %1322 = vst [vmem:[%s1313 + $0x20] sm:$0xf] %v1303
  // Predicated region
  $region14: #{feature_extractor_forward.4} parent=0 // pred_check
    _
  $region15: #{feature_extractor_forward.4} parent=0 // pred_check_branch
    %1324 = sbr.rel (0) target = $region17
  $region16: #{feature_extractor_forward.4} parent=0 // pred_region
    _
  $region17: #{feature_extractor_forward.4} parent=0 // pred_fallthru
    _
  // Predicated region
  $region18: #{feature_extractor_forward.4} parent=0 // pred_check
    _
  $region19: #{feature_extractor_forward.4} parent=0 // pred_check_branch
    %1326 = sbr.rel (0) target = $region21
  $region20: #{feature_extractor_forward.4} parent=0 // pred_region
    _
  $region21: #{feature_extractor_forward.4} parent=0 // pred_fallthru
    _

// kernel: feature_extractor_forward.6
$region0: #{feature_extractor_forward.6}
  #allocation0 [shape = 'u32[]', space=smem, size = 0x4, offset = 0x4, fixed_abs, tag = 'smem constant byte address 0x4 - core index']
  #allocation1 [shape = 'u32[144,128]{1,0:T(1,128)}', space=vmem, size = 0x12000, scoped, tag = 'internal scratch']
  %s0 = inlined_call_operand.vmem [shape: bf16[2,16,64], index: 0, kind: input, shape index: {}]
  %s1 = inlined_call_operand.vmem [shape: bf16[4,64,128], index: 1, kind: input, shape index: {}]
  %s2 = inlined_call_operand.vmem [shape: f32[1,128], index: 2, kind: input, shape index: {}]
  %s3 = inlined_call_operand.vmem [shape: bf16[2,6,128], index: 3, kind: output, shape index: {}]
  %s4 = sld [smem:[#allocation0]]
  $region22: #{feature_extractor_forward.6} parent=0
    _
  %s6 = ssub.s32 1, %s4
  %s7 = scalar_select 0, %s6, %s4
  // Predicated region
  $region2: #{feature_extractor_forward.6} parent=0 // pred_check
    _
  $region3: #{feature_extractor_forward.6} parent=0 // pred_check_branch
    %9 = sbr.rel (0) target = $region5
  $region4: #{feature_extractor_forward.6} parent=0 // pred_region
    _
  $region5: #{feature_extractor_forward.6} parent=0 // pred_fallthru
    _
  // Predicated region
  $region6: #{feature_extractor_forward.6} parent=0 // pred_check
    _
  $region7: #{feature_extractor_forward.6} parent=0 // pred_check_branch
    %11 = sbr.rel (0) target = $region9
  $region8: #{feature_extractor_forward.6} parent=0 // pred_region
    _
  $region9: #{feature_extractor_forward.6} parent=0 // pred_fallthru
    _
  // Predicated region
  $region10: #{feature_extractor_forward.6} parent=0 // pred_check
    _
  $region11: #{feature_extractor_forward.6} parent=0 // pred_check_branch
    %13 = sbr.rel (0) target = $region13
  $region12: #{feature_extractor_forward.6} parent=0 // pred_region
    _
  $region13: #{feature_extractor_forward.6} parent=0 // pred_fallthru
    _
  %v15 = vld [vmem:[%s2] sm:$0x1]
  %v16 = vld [vmem:[%s0] sm:$0x7]
  %v17 = vld [vmem:[%s1] sm:$0xf]
  %v18 = vld [vmem:[%s1 + $0x4] sm:$0xf]
  %v19 = vld [vmem:[%s1 + $0x8] sm:$0xf]
  %v20 = vld [vmem:[%s1 + $0xc] sm:$0xf]
  %v21 = vld [vmem:[%s1 + $0x10] sm:$0xf]
  %v22 = vld [vmem:[%s1 + $0x14] sm:$0xf]
  %v23 = vld [vmem:[%s1 + $0x18] sm:$0xf]
  %v24 = vld [vmem:[%s1 + $0x1c] sm:$0xf]
  %v25 = vld [vmem:[%s0] sm:$0xf]
  %s26 = scalar_lea.vmem %s1, 32
  %v27 = vld [vmem:[%s26] sm:$0xf]
  %v28 = vld [vmem:[%s26 + $0x4] sm:$0xf]
  %v29 = vld [vmem:[%s26 + $0x8] sm:$0xf]
  %v30 = vld [vmem:[%s26 + $0xc] sm:$0xf]
  %v31 = vld [vmem:[%s26 + $0x10] sm:$0xf]
  %v32 = vld [vmem:[%s26 + $0x14] sm:$0xf]
  %v33 = vld [vmem:[%s26 + $0x18] sm:$0xf]
  %v34 = vld [vmem:[%s26 + $0x1c] sm:$0xf]
  %v36 = vunpack.c.l.b16 %v25
  %v37 = vpack.c.b16 %v36, %v36
  %v39 = vshrl.u32 %v37, 16
  %v41 = vshll.u32 %v37, 16
  %v43 = vrot.slane %v41, 1
  %v44 = vor.u32 %v39, %v43
  %v53 = vunpack.c.l.b16 %v27
  %v54 = vunpack.c.l.b16 %v28
  %v55 = vunpack.c.l.b16 %v29
  %v56 = vunpack.c.l.b16 %v30
  %v57 = vunpack.c.l.b16 %v31
  %v58 = vunpack.c.l.b16 %v32
  %v59 = vunpack.c.l.b16 %v33
  %v60 = vunpack.c.l.b16 %v34
  %v61 = vpack.c.b16 %v54, %v53
  %v62 = vpack.c.b16 %v56, %v55
  %v63 = vpack.c.b16 %v58, %v57
  %v64 = vpack.c.b16 %v60, %v59
  %vm69 = vcmask 523264
  %v71 = vsel %vm69, %v44, 0
  %73 = vmatprep.subr.bf16.mxu0 0
  %74 = vmatpush1.bf16.msra.mxu0 0
  %75 = vmatprep.subr.bf16.mxu0 0
  %76 = vmatpush1.bf16.msra.mxu0 0
  %77 = vmatprep.subr.bf16.mxu0 0
  %78 = vmatpush1.bf16.msra.mxu0 0
  %79 = vmatprep.subr.bf16.mxu0 0
  %80 = vmatpush1.bf16.msra.mxu0 0
  %81 = vmatprep.subr.bf16.mxu0 0
  %82 = vmatpush1.bf16.msra.mxu0 %v64
  %83 = vmatprep.subr.bf16.mxu0 0
  %84 = vmatpush1.bf16.msra.mxu0 %v63
  %85 = vmatprep.subr.bf16.mxu0 0
  %86 = vmatpush1.bf16.msra.mxu0 %v62
  %87 = vmatprep.subr.bf16.mxu0 0
  %88 = vmatpush1.bf16.msra.mxu0 %v61
  %89 = vmatprep.subr.bf16.mxu0 0
  %90 = vmatpush2.bf16.msra.mxu0 0
  %91 = vmatprep.subr.bf16.mxu0 0
  %92 = vmatpush2.bf16.msra.mxu0 0
  %93 = vmatprep.subr.bf16.mxu0 0
  %94 = vmatpush2.bf16.msra.mxu0 0
  %95 = vmatprep.subr.bf16.mxu0 0
  %96 = vmatpush2.bf16.msra.mxu0 0
  %97 = vmatprep.subr.bf16.mxu0 0
  %98 = vmatpush2.bf16.msra.mxu0 0
  %99 = vmatprep.subr.bf16.mxu0 0
  %100 = vmatpush2.bf16.msra.mxu0 0
  %101 = vmatprep.subr.bf16.mxu0 0
  %102 = vmatpush2.bf16.msra.mxu0 0
  %103 = vmatprep.subr.bf16.mxu0 0
  %104 = vmatpush2.bf16.msra.mxu0 0
  %105 = vmatprep.mubr.bf16.mxu0 0
  %106 = vmatmul.mubr.bf16.gmra.mxu0 %v71
  %v107 = vpop.f32.mrf.mxu0
  %v108 = vadd.f32 0.0, %v107
  %v109 = vpop.f32.mrf.mxu0
  %v110 = vpop.f32.mrf.mxu0
  %v111 = vpop.f32.mrf.mxu0
  %112 = vdwg.mxu0
  %v121 = vunpack.c.l.b16 %v17
  %v122 = vunpack.c.l.b16 %v18
  %v123 = vunpack.c.l.b16 %v19
  %v124 = vunpack.c.l.b16 %v20
  %v125 = vunpack.c.l.b16 %v21
  %v126 = vunpack.c.l.b16 %v22
  %v127 = vunpack.c.l.b16 %v23
  %v128 = vunpack.c.l.b16 %v24
  %v129 = vpack.c.b16 %v122, %v121
  %v130 = vpack.c.b16 %v124, %v123
  %v131 = vpack.c.b16 %v126, %v125
  %v132 = vpack.c.b16 %v128, %v127
  %v138 = vsel %vm69, %v16, 0
  %140 = vmatprep.subr.bf16.mxu0 0
  %141 = vmatpush1.bf16.msra.mxu0 0
  %142 = vmatprep.subr.bf16.mxu0 0
  %143 = vmatpush1.bf16.msra.mxu0 0
  %144 = vmatprep.subr.bf16.mxu0 0
  %145 = vmatpush1.bf16.msra.mxu0 0
  %146 = vmatprep.subr.bf16.mxu0 0
  %147 = vmatpush1.bf16.msra.mxu0 0
  %148 = vmatprep.subr.bf16.mxu0 0
  %149 = vmatpush1.bf16.msra.mxu0 %v132
  %150 = vmatprep.subr.bf16.mxu0 0
  %151 = vmatpush1.bf16.msra.mxu0 %v131
  %152 = vmatprep.subr.bf16.mxu0 0
  %153 = vmatpush1.bf16.msra.mxu0 %v130
  %154 = vmatprep.subr.bf16.mxu0 0
  %155 = vmatpush1.bf16.msra.mxu0 %v129
  %156 = vmatprep.subr.bf16.mxu0 0
  %157 = vmatpush2.bf16.msra.mxu0 0
  %158 = vmatprep.subr.bf16.mxu0 0
  %159 = vmatpush2.bf16.msra.mxu0 0
  %160 = vmatprep.subr.bf16.mxu0 0
  %161 = vmatpush2.bf16.msra.mxu0 0
  %162 = vmatprep.subr.bf16.mxu0 0
  %163 = vmatpush2.bf16.msra.mxu0 0
  %164 = vmatprep.subr.bf16.mxu0 0
  %165 = vmatpush2.bf16.msra.mxu0 0
  %166 = vmatprep.subr.bf16.mxu0 0
  %167 = vmatpush2.bf16.msra.mxu0 0
  %168 = vmatprep.subr.bf16.mxu0 0
  %169 = vmatpush2.bf16.msra.mxu0 0
  %170 = vmatprep.subr.bf16.mxu0 0
  %171 = vmatpush2.bf16.msra.mxu0 0
  %172 = vmatprep.mubr.bf16.mxu0 0
  %173 = vmatmul.mubr.bf16.gmra.mxu0 %v138
  %v174 = vpop.f32.mrf.mxu0
  %v175 = vadd.f32 %v108, %v174
  %v176 = vpop.f32.mrf.mxu0
  %v177 = vpop.f32.mrf.mxu0
  %v178 = vpop.f32.mrf.mxu0
  %179 = vdwg.mxu0
  %v180 = vld [vmem:[%s0] sm:$0xe]
  %v181 = vld [vmem:[%s0 + $0x4] sm:$0x1]
  %s182 = scalar_lea.vmem %s1, 64
  %v183 = vld [vmem:[%s182] sm:$0xf]
  %v184 = vld [vmem:[%s182 + $0x4] sm:$0xf]
  %v185 = vld [vmem:[%s182 + $0x8] sm:$0xf]
  %v186 = vld [vmem:[%s182 + $0xc] sm:$0xf]
  %v187 = vld [vmem:[%s182 + $0x10] sm:$0xf]
  %v188 = vld [vmem:[%s182 + $0x14] sm:$0xf]
  %v189 = vld [vmem:[%s182 + $0x18] sm:$0xf]
  %v190 = vld [vmem:[%s182 + $0x1c] sm:$0xf]
  %v193 = vunpack.c.l.b16 %v180
  %v194 = vunpack.c.l.b16 %v181
  %v195 = vpack.c.b16 %v194, %v193
  %v197 = vshrl.u32 %v195, 16
  %v199 = vrot.slane %v197, 1
  %v200 = vshll.u32 %v195, 16
  %v202 = vrot.slane %v200, 2
  %v203 = vor.u32 %v199, %v202
  %v212 = vunpack.c.l.b16 %v183
  %v213 = vunpack.c.l.b16 %v184
  %v214 = vunpack.c.l.b16 %v185
  %v215 = vunpack.c.l.b16 %v186
  %v216 = vunpack.c.l.b16 %v187
  %v217 = vunpack.c.l.b16 %v188
  %v218 = vunpack.c.l.b16 %v189
  %v219 = vunpack.c.l.b16 %v190
  %v220 = vpack.c.b16 %v213, %v212
  %v221 = vpack.c.b16 %v215, %v214
  %v222 = vpack.c.b16 %v217, %v216
  %v223 = vpack.c.b16 %v219, %v218
  %v229 = vsel %vm69, %v203, 0
  %231 = vmatprep.subr.bf16.mxu0 0
  %232 = vmatpush1.bf16.msra.mxu0 0
  %233 = vmatprep.subr.bf16.mxu0 0
  %234 = vmatpush1.bf16.msra.mxu0 0
  %235 = vmatprep.subr.bf16.mxu0 0
  %236 = vmatpush1.bf16.msra.mxu0 0
  %237 = vmatprep.subr.bf16.mxu0 0
  %238 = vmatpush1.bf16.msra.mxu0 0
  %239 = vmatprep.subr.bf16.mxu0 0
  %240 = vmatpush1.bf16.msra.mxu0 %v223
  %241 = vmatprep.subr.bf16.mxu0 0
  %242 = vmatpush1.bf16.msra.mxu0 %v222
  %243 = vmatprep.subr.bf16.mxu0 0
  %244 = vmatpush1.bf16.msra.mxu0 %v221
  %245 = vmatprep.subr.bf16.mxu0 0
  %246 = vmatpush1.bf16.msra.mxu0 %v220
  %247 = vmatprep.subr.bf16.mxu0 0
  %248 = vmatpush2.bf16.msra.mxu0 0
  %249 = vmatprep.subr.bf16.mxu0 0
  %250 = vmatpush2.bf16.msra.mxu0 0
  %251 = vmatprep.subr.bf16.mxu0 0
  %252 = vmatpush2.bf16.msra.mxu0 0
  %253 = vmatprep.subr.bf16.mxu0 0
  %254 = vmatpush2.bf16.msra.mxu0 0
  %255 = vmatprep.subr.bf16.mxu0 0
  %256 = vmatpush2.bf16.msra.mxu0 0
  %257 = vmatprep.subr.bf16.mxu0 0
  %258 = vmatpush2.bf16.msra.mxu0 0
  %259 = vmatprep.subr.bf16.mxu0 0
  %260 = vmatpush2.bf16.msra.mxu0 0
  %261 = vmatprep.subr.bf16.mxu0 0
  %262 = vmatpush2.bf16.msra.mxu0 0
  %263 = vmatprep.mubr.bf16.mxu0 0
  %264 = vmatmul.mubr.bf16.gmra.mxu0 %v229
  %v265 = vpop.f32.mrf.mxu0
  %v266 = vadd.f32 0.0, %v265
  %v267 = vpop.f32.mrf.mxu0
  %v268 = vpop.f32.mrf.mxu0
  %v269 = vpop.f32.mrf.mxu0
  %270 = vdwg.mxu0
  %v271 = vadd.f32 %v175, %v266
  %v272 = vld [vmem:[%s0] sm:$0xc]
  %s273 = scalar_lea.vmem %s1, 96
  %v274 = vld [vmem:[%s273] sm:$0xf]
  %v275 = vld [vmem:[%s273 + $0x4] sm:$0xf]
  %v276 = vld [vmem:[%s273 + $0x8] sm:$0xf]
  %v277 = vld [vmem:[%s273 + $0xc] sm:$0xf]
  %v278 = vld [vmem:[%s273 + $0x10] sm:$0xf]
  %v279 = vld [vmem:[%s273 + $0x14] sm:$0xf]
  %v280 = vld [vmem:[%s273 + $0x18] sm:$0xf]
  %v281 = vld [vmem:[%s273 + $0x1c] sm:$0xf]
  %v283 = vunpack.c.l.b16 %v272
  %v284 = vpack.c.b16 %v194, %v283
  %v285 = vrot.slane %v284, 2
  %v294 = vunpack.c.l.b16 %v274
  %v295 = vunpack.c.l.b16 %v275
  %v296 = vunpack.c.l.b16 %v276
  %v297 = vunpack.c.l.b16 %v277
  %v298 = vunpack.c.l.b16 %v278
  %v299 = vunpack.c.l.b16 %v279
  %v300 = vunpack.c.l.b16 %v280
  %v301 = vunpack.c.l.b16 %v281
  %v302 = vpack.c.b16 %v295, %v294
  %v303 = vpack.c.b16 %v297, %v296
  %v304 = vpack.c.b16 %v299, %v298
  %v305 = vpack.c.b16 %v301, %v300
  %v311 = vsel %vm69, %v285, 0
  %313 = vmatprep.subr.bf16.mxu0 0
  %314 = vmatpush1.bf16.msra.mxu0 0
  %315 = vmatprep.subr.bf16.mxu0 0
  %316 = vmatpush1.bf16.msra.mxu0 0
  %317 = vmatprep.subr.bf16.mxu0 0
  %318 = vmatpush1.bf16.msra.mxu0 0
  %319 = vmatprep.subr.bf16.mxu0 0
  %320 = vmatpush1.bf16.msra.mxu0 0
  %321 = vmatprep.subr.bf16.mxu0 0
  %322 = vmatpush1.bf16.msra.mxu0 %v305
  %323 = vmatprep.subr.bf16.mxu0 0
  %324 = vmatpush1.bf16.msra.mxu0 %v304
  %325 = vmatprep.subr.bf16.mxu0 0
  %326 = vmatpush1.bf16.msra.mxu0 %v303
  %327 = vmatprep.subr.bf16.mxu0 0
  %328 = vmatpush1.bf16.msra.mxu0 %v302
  %329 = vmatprep.subr.bf16.mxu0 0
  %330 = vmatpush2.bf16.msra.mxu0 0
  %331 = vmatprep.subr.bf16.mxu0 0
  %332 = vmatpush2.bf16.msra.mxu0 0
  %333 = vmatprep.subr.bf16.mxu0 0
  %334 = vmatpush2.bf16.msra.mxu0 0
  %335 = vmatprep.subr.bf16.mxu0 0
  %336 = vmatpush2.bf16.msra.mxu0 0
  %337 = vmatprep.subr.bf16.mxu0 0
  %338 = vmatpush2.bf16.msra.mxu0 0
  %339 = vmatprep.subr.bf16.mxu0 0
  %340 = vmatpush2.bf16.msra.mxu0 0
  %341 = vmatprep.subr.bf16.mxu0 0
  %342 = vmatpush2.bf16.msra.mxu0 0
  %343 = vmatprep.subr.bf16.mxu0 0
  %344 = vmatpush2.bf16.msra.mxu0 0
  %345 = vmatprep.mubr.bf16.mxu0 0
  %346 = vmatmul.mubr.bf16.gmra.mxu0 %v311
  %v347 = vpop.f32.mrf.mxu0
  %v348 = vadd.f32 0.0, %v347
  %v349 = vpop.f32.mrf.mxu0
  %v350 = vpop.f32.mrf.mxu0
  %v351 = vpop.f32.mrf.mxu0
  %352 = vdwg.mxu0
  %v353 = vadd.f32 %v271, %v348
  %v355 = vlaneseq
  %v356 = vshrl.u32 %v355, 7
  %v357 = vsub.s32 0, %v356
  %v358 = vrot.slane %v15, %v357
  %v360 = vadd.f32 %v353, %v358
  %vm361 = vcmp.gt.f32.partialorder %v360, 0.0
  %v362 = vmul.f32 %v360, 0.2
  %v363 = vsel %vm361, %v360, %v362
  %v364 = vpack.c.bf16 %v363, %v363
  %365 = vst [vmem:[%s3] sm:$0x7] %v364
  %s366 = scalar_lea.vmem %s0, 8
  %v367 = vld [vmem:[%s366] sm:$0x7]
  %v368 = vld [vmem:[%s1] sm:$0xf]
  %v369 = vld [vmem:[%s1 + $0x4] sm:$0xf]
  %v370 = vld [vmem:[%s1 + $0x8] sm:$0xf]
  %v371 = vld [vmem:[%s1 + $0xc] sm:$0xf]
  %v372 = vld [vmem:[%s1 + $0x10] sm:$0xf]
  %v373 = vld [vmem:[%s1 + $0x14] sm:$0xf]
  %v374 = vld [vmem:[%s1 + $0x18] sm:$0xf]
  %v375 = vld [vmem:[%s1 + $0x1c] sm:$0xf]
  %v376 = vld [vmem:[%s366] sm:$0xf]
  %v377 = vld [vmem:[%s26] sm:$0xf]
  %v378 = vld [vmem:[%s26 + $0x4] sm:$0xf]
  %v379 = vld [vmem:[%s26 + $0x8] sm:$0xf]
  %v380 = vld [vmem:[%s26 + $0xc] sm:$0xf]
  %v381 = vld [vmem:[%s26 + $0x10] sm:$0xf]
  %v382 = vld [vmem:[%s26 + $0x14] sm:$0xf]
  %v383 = vld [vmem:[%s26 + $0x18] sm:$0xf]
  %v384 = vld [vmem:[%s26 + $0x1c] sm:$0xf]
  %v386 = vunpack.c.l.b16 %v376
  %v387 = vpack.c.b16 %v386, %v386
  %v389 = vshrl.u32 %v387, 16
  %v391 = vshll.u32 %v387, 16
  %v393 = vrot.slane %v391, 1
  %v394 = vor.u32 %v389, %v393
  %v403 = vunpack.c.l.b16 %v377
  %v404 = vunpack.c.l.b16 %v378
  %v405 = vunpack.c.l.b16 %v379
  %v406 = vunpack.c.l.b16 %v380
  %v407 = vunpack.c.l.b16 %v381
  %v408 = vunpack.c.l.b16 %v382
  %v409 = vunpack.c.l.b16 %v383
  %v410 = vunpack.c.l.b16 %v384
  %v411 = vpack.c.b16 %v404, %v403
  %v412 = vpack.c.b16 %v406, %v405
  %v413 = vpack.c.b16 %v408, %v407
  %v414 = vpack.c.b16 %v410, %v409
  %v420 = vsel %vm69, %v394, 0
  %422 = vmatprep.subr.bf16.mxu0 0
  %423 = vmatpush1.bf16.msra.mxu0 0
  %424 = vmatprep.subr.bf16.mxu0 0
  %425 = vmatpush1.bf16.msra.mxu0 0
  %426 = vmatprep.subr.bf16.mxu0 0
  %427 = vmatpush1.bf16.msra.mxu0 0
  %428 = vmatprep.subr.bf16.mxu0 0
  %429 = vmatpush1.bf16.msra.mxu0 0
  %430 = vmatprep.subr.bf16.mxu0 0
  %431 = vmatpush1.bf16.msra.mxu0 %v414
  %432 = vmatprep.subr.bf16.mxu0 0
  %433 = vmatpush1.bf16.msra.mxu0 %v413
  %434 = vmatprep.subr.bf16.mxu0 0
  %435 = vmatpush1.bf16.msra.mxu0 %v412
  %436 = vmatprep.subr.bf16.mxu0 0
  %437 = vmatpush1.bf16.msra.mxu0 %v411
  %438 = vmatprep.subr.bf16.mxu0 0
  %439 = vmatpush2.bf16.msra.mxu0 0
  %440 = vmatprep.subr.bf16.mxu0 0
  %441 = vmatpush2.bf16.msra.mxu0 0
  %442 = vmatprep.subr.bf16.mxu0 0
  %443 = vmatpush2.bf16.msra.mxu0 0
  %444 = vmatprep.subr.bf16.mxu0 0
  %445 = vmatpush2.bf16.msra.mxu0 0
  %446 = vmatprep.subr.bf16.mxu0 0
  %447 = vmatpush2.bf16.msra.mxu0 0
  %448 = vmatprep.subr.bf16.mxu0 0
  %449 = vmatpush2.bf16.msra.mxu0 0
  %450 = vmatprep.subr.bf16.mxu0 0
  %451 = vmatpush2.bf16.msra.mxu0 0
  %452 = vmatprep.subr.bf16.mxu0 0
  %453 = vmatpush2.bf16.msra.mxu0 0
  %454 = vmatprep.mubr.bf16.mxu0 0
  %455 = vmatmul.mubr.bf16.gmra.mxu0 %v420
  %v456 = vpop.f32.mrf.mxu0
  %v457 = vadd.f32 0.0, %v456
  %v458 = vpop.f32.mrf.mxu0
  %v459 = vpop.f32.mrf.mxu0
  %v460 = vpop.f32.mrf.mxu0
  %461 = vdwg.mxu0
  %v470 = vunpack.c.l.b16 %v368
  %v471 = vunpack.c.l.b16 %v369
  %v472 = vunpack.c.l.b16 %v370
  %v473 = vunpack.c.l.b16 %v371
  %v474 = vunpack.c.l.b16 %v372
  %v475 = vunpack.c.l.b16 %v373
  %v476 = vunpack.c.l.b16 %v374
  %v477 = vunpack.c.l.b16 %v375
  %v478 = vpack.c.b16 %v471, %v470
  %v479 = vpack.c.b16 %v473, %v472
  %v480 = vpack.c.b16 %v475, %v474
  %v481 = vpack.c.b16 %v477, %v476
  %v487 = vsel %vm69, %v367, 0
  %489 = vmatprep.subr.bf16.mxu0 0
  %490 = vmatpush1.bf16.msra.mxu0 0
  %491 = vmatprep.subr.bf16.mxu0 0
  %492 = vmatpush1.bf16.msra.mxu0 0
  %493 = vmatprep.subr.bf16.mxu0 0
  %494 = vmatpush1.bf16.msra.mxu0 0
  %495 = vmatprep.subr.bf16.mxu0 0
  %496 = vmatpush1.bf16.msra.mxu0 0
  %497 = vmatprep.subr.bf16.mxu0 0
  %498 = vmatpush1.bf16.msra.mxu0 %v481
  %499 = vmatprep.subr.bf16.mxu0 0
  %500 = vmatpush1.bf16.msra.mxu0 %v480
  %501 = vmatprep.subr.bf16.mxu0 0
  %502 = vmatpush1.bf16.msra.mxu0 %v479
  %503 = vmatprep.subr.bf16.mxu0 0
  %504 = vmatpush1.bf16.msra.mxu0 %v478
  %505 = vmatprep.subr.bf16.mxu0 0
  %506 = vmatpush2.bf16.msra.mxu0 0
  %507 = vmatprep.subr.bf16.mxu0 0
  %508 = vmatpush2.bf16.msra.mxu0 0
  %509 = vmatprep.subr.bf16.mxu0 0
  %510 = vmatpush2.bf16.msra.mxu0 0
  %511 = vmatprep.subr.bf16.mxu0 0
  %512 = vmatpush2.bf16.msra.mxu0 0
  %513 = vmatprep.subr.bf16.mxu0 0
  %514 = vmatpush2.bf16.msra.mxu0 0
  %515 = vmatprep.subr.bf16.mxu0 0
  %516 = vmatpush2.bf16.msra.mxu0 0
  %517 = vmatprep.subr.bf16.mxu0 0
  %518 = vmatpush2.bf16.msra.mxu0 0
  %519 = vmatprep.subr.bf16.mxu0 0
  %520 = vmatpush2.bf16.msra.mxu0 0
  %521 = vmatprep.mubr.bf16.mxu0 0
  %522 = vmatmul.mubr.bf16.gmra.mxu0 %v487
  %v523 = vpop.f32.mrf.mxu0
  %v524 = vadd.f32 %v457, %v523
  %v525 = vpop.f32.mrf.mxu0
  %v526 = vpop.f32.mrf.mxu0
  %v527 = vpop.f32.mrf.mxu0
  %528 = vdwg.mxu0
  %v529 = vld [vmem:[%s366] sm:$0xe]
  %v530 = vld [vmem:[%s366 + $0x4] sm:$0x1]
  %v531 = vld [vmem:[%s182] sm:$0xf]
  %v532 = vld [vmem:[%s182 + $0x4] sm:$0xf]
  %v533 = vld [vmem:[%s182 + $0x8] sm:$0xf]
  %v534 = vld [vmem:[%s182 + $0xc] sm:$0xf]
  %v535 = vld [vmem:[%s182 + $0x10] sm:$0xf]
  %v536 = vld [vmem:[%s182 + $0x14] sm:$0xf]
  %v537 = vld [vmem:[%s182 + $0x18] sm:$0xf]
  %v538 = vld [vmem:[%s182 + $0x1c] sm:$0xf]
  %v541 = vunpack.c.l.b16 %v529
  %v542 = vunpack.c.l.b16 %v530
  %v543 = vpack.c.b16 %v542, %v541
  %v545 = vshrl.u32 %v543, 16
  %v547 = vrot.slane %v545, 1
  %v548 = vshll.u32 %v543, 16
  %v550 = vrot.slane %v548, 2
  %v551 = vor.u32 %v547, %v550
  %v560 = vunpack.c.l.b16 %v531
  %v561 = vunpack.c.l.b16 %v532
  %v562 = vunpack.c.l.b16 %v533
  %v563 = vunpack.c.l.b16 %v534
  %v564 = vunpack.c.l.b16 %v535
  %v565 = vunpack.c.l.b16 %v536
  %v566 = vunpack.c.l.b16 %v537
  %v567 = vunpack.c.l.b16 %v538
  %v568 = vpack.c.b16 %v561, %v560
  %v569 = vpack.c.b16 %v563, %v562
  %v570 = vpack.c.b16 %v565, %v564
  %v571 = vpack.c.b16 %v567, %v566
  %v577 = vsel %vm69, %v551, 0
  %579 = vmatprep.subr.bf16.mxu0 0
  %580 = vmatpush1.bf16.msra.mxu0 0
  %581 = vmatprep.subr.bf16.mxu0 0
  %582 = vmatpush1.bf16.msra.mxu0 0
  %583 = vmatprep.subr.bf16.mxu0 0
  %584 = vmatpush1.bf16.msra.mxu0 0
  %585 = vmatprep.subr.bf16.mxu0 0
  %586 = vmatpush1.bf16.msra.mxu0 0
  %587 = vmatprep.subr.bf16.mxu0 0
  %588 = vmatpush1.bf16.msra.mxu0 %v571
  %589 = vmatprep.subr.bf16.mxu0 0
  %590 = vmatpush1.bf16.msra.mxu0 %v570
  %591 = vmatprep.subr.bf16.mxu0 0
  %592 = vmatpush1.bf16.msra.mxu0 %v569
  %593 = vmatprep.subr.bf16.mxu0 0
  %594 = vmatpush1.bf16.msra.mxu0 %v568
  %595 = vmatprep.subr.bf16.mxu0 0
  %596 = vmatpush2.bf16.msra.mxu0 0
  %597 = vmatprep.subr.bf16.mxu0 0
  %598 = vmatpush2.bf16.msra.mxu0 0
  %599 = vmatprep.subr.bf16.mxu0 0
  %600 = vmatpush2.bf16.msra.mxu0 0
  %601 = vmatprep.subr.bf16.mxu0 0
  %602 = vmatpush2.bf16.msra.mxu0 0
  %603 = vmatprep.subr.bf16.mxu0 0
  %604 = vmatpush2.bf16.msra.mxu0 0
  %605 = vmatprep.subr.bf16.mxu0 0
  %606 = vmatpush2.bf16.msra.mxu0 0
  %607 = vmatprep.subr.bf16.mxu0 0
  %608 = vmatpush2.bf16.msra.mxu0 0
  %609 = vmatprep.subr.bf16.mxu0 0
  %610 = vmatpush2.bf16.msra.mxu0 0
  %611 = vmatprep.mubr.bf16.mxu0 0
  %612 = vmatmul.mubr.bf16.gmra.mxu0 %v577
  %v613 = vpop.f32.mrf.mxu0
  %v614 = vadd.f32 0.0, %v613
  %v615 = vpop.f32.mrf.mxu0
  %v616 = vpop.f32.mrf.mxu0
  %v617 = vpop.f32.mrf.mxu0
  %618 = vdwg.mxu0
  %v619 = vadd.f32 %v524, %v614
  %v620 = vld [vmem:[%s366] sm:$0xc]
  %v621 = vld [vmem:[%s273] sm:$0xf]
  %v622 = vld [vmem:[%s273 + $0x4] sm:$0xf]
  %v623 = vld [vmem:[%s273 + $0x8] sm:$0xf]
  %v624 = vld [vmem:[%s273 + $0xc] sm:$0xf]
  %v625 = vld [vmem:[%s273 + $0x10] sm:$0xf]
  %v626 = vld [vmem:[%s273 + $0x14] sm:$0xf]
  %v627 = vld [vmem:[%s273 + $0x18] sm:$0xf]
  %v628 = vld [vmem:[%s273 + $0x1c] sm:$0xf]
  %v630 = vunpack.c.l.b16 %v620
  %v631 = vpack.c.b16 %v542, %v630
  %v632 = vrot.slane %v631, 2
  %v641 = vunpack.c.l.b16 %v621
  %v642 = vunpack.c.l.b16 %v622
  %v643 = vunpack.c.l.b16 %v623
  %v644 = vunpack.c.l.b16 %v624
  %v645 = vunpack.c.l.b16 %v625
  %v646 = vunpack.c.l.b16 %v626
  %v647 = vunpack.c.l.b16 %v627
  %v648 = vunpack.c.l.b16 %v628
  %v649 = vpack.c.b16 %v642, %v641
  %v650 = vpack.c.b16 %v644, %v643
  %v651 = vpack.c.b16 %v646, %v645
  %v652 = vpack.c.b16 %v648, %v647
  %v658 = vsel %vm69, %v632, 0
  %660 = vmatprep.subr.bf16.mxu0 0
  %661 = vmatpush1.bf16.msra.mxu0 0
  %662 = vmatprep.subr.bf16.mxu0 0
  %663 = vmatpush1.bf16.msra.mxu0 0
  %664 = vmatprep.subr.bf16.mxu0 0
  %665 = vmatpush1.bf16.msra.mxu0 0
  %666 = vmatprep.subr.bf16.mxu0 0
  %667 = vmatpush1.bf16.msra.mxu0 0
  %668 = vmatprep.subr.bf16.mxu0 0
  %669 = vmatpush1.bf16.msra.mxu0 %v652
  %670 = vmatprep.subr.bf16.mxu0 0
  %671 = vmatpush1.bf16.msra.mxu0 %v651
  %672 = vmatprep.subr.bf16.mxu0 0
  %673 = vmatpush1.bf16.msra.mxu0 %v650
  %674 = vmatprep.subr.bf16.mxu0 0
  %675 = vmatpush1.bf16.msra.mxu0 %v649
  %676 = vmatprep.subr.bf16.mxu0 0
  %677 = vmatpush2.bf16.msra.mxu0 0
  %678 = vmatprep.subr.bf16.mxu0 0
  %679 = vmatpush2.bf16.msra.mxu0 0
  %680 = vmatprep.subr.bf16.mxu0 0
  %681 = vmatpush2.bf16.msra.mxu0 0
  %682 = vmatprep.subr.bf16.mxu0 0
  %683 = vmatpush2.bf16.msra.mxu0 0
  %684 = vmatprep.subr.bf16.mxu0 0
  %685 = vmatpush2.bf16.msra.mxu0 0
  %686 = vmatprep.subr.bf16.mxu0 0
  %687 = vmatpush2.bf16.msra.mxu0 0
  %688 = vmatprep.subr.bf16.mxu0 0
  %689 = vmatpush2.bf16.msra.mxu0 0
  %690 = vmatprep.subr.bf16.mxu0 0
  %691 = vmatpush2.bf16.msra.mxu0 0
  %692 = vmatprep.mubr.bf16.mxu0 0
  %693 = vmatmul.mubr.bf16.gmra.mxu0 %v658
  %v694 = vpop.f32.mrf.mxu0
  %v695 = vadd.f32 0.0, %v694
  %v696 = vpop.f32.mrf.mxu0
  %v697 = vpop.f32.mrf.mxu0
  %v698 = vpop.f32.mrf.mxu0
  %699 = vdwg.mxu0
  %v700 = vadd.f32 %v619, %v695
  %v701 = vadd.f32 %v700, %v358
  %vm702 = vcmp.gt.f32.partialorder %v701, 0.0
  %v703 = vmul.f32 %v701, 0.2
  %v704 = vsel %vm702, %v701, %v703
  %v705 = vpack.c.bf16 %v704, %v704
  %s706 = scalar_lea.vmem %s3, 4
  %707 = vst [vmem:[%s706] sm:$0x7] %v705
  // Predicated region
  $region14: #{feature_extractor_forward.6} parent=0 // pred_check
    _
  $region15: #{feature_extractor_forward.6} parent=0 // pred_check_branch
    %709 = sbr.rel (0) target = $region17
  $region16: #{feature_extractor_forward.6} parent=0 // pred_region
    _
  $region17: #{feature_extractor_forward.6} parent=0 // pred_fallthru
    _
  // Predicated region
  $region18: #{feature_extractor_forward.6} parent=0 // pred_check
    _
  $region19: #{feature_extractor_forward.6} parent=0 // pred_check_branch
    %711 = sbr.rel (0) target = $region21
  $region20: #{feature_extractor_forward.6} parent=0 // pred_region
    _
  $region21: #{feature_extractor_forward.6} parent=0 // pred_fallthru
    _

// kernel: feature_extractor_forward.7
$region0: #{feature_extractor_forward.7}
  #allocation0 [shape = 'u32[]', space=smem, size = 0x4, offset = 0x4, fixed_abs, tag = 'smem constant byte address 0x4 - core index']
  #allocation1 [shape = 'u32[144,128]{1,0:T(1,128)}', space=vmem, size = 0x12000, scoped, tag = 'internal scratch']
  %s0 = inlined_call_operand.vmem [shape: bf16[2,8,128], index: 0, kind: input, shape index: {}]
  %s1 = inlined_call_operand.vmem [shape: bf16[4,128,128], index: 1, kind: input, shape index: {}]
  %s2 = inlined_call_operand.vmem [shape: f32[1,128], index: 2, kind: input, shape index: {}]
  %s3 = inlined_call_operand.vmem [shape: bf16[2,2,128], index: 3, kind: output, shape index: {}]
  %s4 = sld [smem:[#allocation0]]
  $region22: #{feature_extractor_forward.7} parent=0
    _
  %s6 = ssub.s32 1, %s4
  %s7 = scalar_select 0, %s6, %s4
  // Predicated region
  $region2: #{feature_extractor_forward.7} parent=0 // pred_check
    _
  $region3: #{feature_extractor_forward.7} parent=0 // pred_check_branch
    %9 = sbr.rel (0) target = $region5
  $region4: #{feature_extractor_forward.7} parent=0 // pred_region
    _
  $region5: #{feature_extractor_forward.7} parent=0 // pred_fallthru
    _
  // Predicated region
  $region6: #{feature_extractor_forward.7} parent=0 // pred_check
    _
  $region7: #{feature_extractor_forward.7} parent=0 // pred_check_branch
    %11 = sbr.rel (0) target = $region9
  $region8: #{feature_extractor_forward.7} parent=0 // pred_region
    _
  $region9: #{feature_extractor_forward.7} parent=0 // pred_fallthru
    _
  // Predicated region
  $region10: #{feature_extractor_forward.7} parent=0 // pred_check
    _
  $region11: #{feature_extractor_forward.7} parent=0 // pred_check_branch
    %13 = sbr.rel (0) target = $region13
  $region12: #{feature_extractor_forward.7} parent=0 // pred_region
    _
  $region13: #{feature_extractor_forward.7} parent=0 // pred_fallthru
    _
  %v15 = vld [vmem:[%s2] sm:$0x1]
  %v16 = vld [vmem:[%s0] sm:$0x1]
  %v17 = vld [vmem:[%s1] sm:$0xf]
  %v18 = vld [vmem:[%s1 + $0x4] sm:$0xf]
  %v19 = vld [vmem:[%s1 + $0x8] sm:$0xf]
  %v20 = vld [vmem:[%s1 + $0xc] sm:$0xf]
  %v21 = vld [vmem:[%s1 + $0x10] sm:$0xf]
  %v22 = vld [vmem:[%s1 + $0x14] sm:$0xf]
  %v23 = vld [vmem:[%s1 + $0x18] sm:$0xf]
  %v24 = vld [vmem:[%s1 + $0x1c] sm:$0xf]
  %v25 = vld [vmem:[%s1 + $0x20] sm:$0xf]
  %v26 = vld [vmem:[%s1 + $0x24] sm:$0xf]
  %v27 = vld [vmem:[%s1 + $0x28] sm:$0xf]
  %v28 = vld [vmem:[%s1 + $0x2c] sm:$0xf]
  %v29 = vld [vmem:[%s1 + $0x30] sm:$0xf]
  %v30 = vld [vmem:[%s1 + $0x34] sm:$0xf]
  %v31 = vld [vmem:[%s1 + $0x38] sm:$0xf]
  %v32 = vld [vmem:[%s1 + $0x3c] sm:$0xf]
  %v33 = vld [vmem:[%s0] sm:$0x3]
  %s34 = scalar_lea.vmem %s1, 64
  %v35 = vld [vmem:[%s34] sm:$0xf]
  %v36 = vld [vmem:[%s34 + $0x4] sm:$0xf]
  %v37 = vld [vmem:[%s34 + $0x8] sm:$0xf]
  %v38 = vld [vmem:[%s34 + $0xc] sm:$0xf]
  %v39 = vld [vmem:[%s34 + $0x10] sm:$0xf]
  %v40 = vld [vmem:[%s34 + $0x14] sm:$0xf]
  %v41 = vld [vmem:[%s34 + $0x18] sm:$0xf]
  %v42 = vld [vmem:[%s34 + $0x1c] sm:$0xf]
  %v43 = vld [vmem:[%s34 + $0x20] sm:$0xf]
  %v44 = vld [vmem:[%s34 + $0x24] sm:$0xf]
  %v45 = vld [vmem:[%s34 + $0x28] sm:$0xf]
  %v46 = vld [vmem:[%s34 + $0x2c] sm:$0xf]
  %v47 = vld [vmem:[%s34 + $0x30] sm:$0xf]
  %v48 = vld [vmem:[%s34 + $0x34] sm:$0xf]
  %v49 = vld [vmem:[%s34 + $0x38] sm:$0xf]
  %v50 = vld [vmem:[%s34 + $0x3c] sm:$0xf]
  %v52 = vunpack.c.l.b16 %v33
  %v53 = vpack.c.b16 %v52, %v52
  %v55 = vshrl.u32 %v53, 16
  %v57 = vshll.u32 %v53, 16
  %v59 = vrot.slane %v57, 1
  %v60 = vor.u32 %v55, %v59
  %v78 = vunpack.c.l.b16 %v35
  %v79 = vunpack.c.l.b16 %v36
  %v80 = vunpack.c.l.b16 %v37
  %v81 = vunpack.c.l.b16 %v38
  %v82 = vunpack.c.l.b16 %v39
  %v83 = vunpack.c.l.b16 %v40
  %v84 = vunpack.c.l.b16 %v41
  %v85 = vunpack.c.l.b16 %v42
  %v86 = vunpack.c.l.b16 %v43
  %v87 = vunpack.c.l.b16 %v44
  %v88 = vunpack.c.l.b16 %v45
  %v89 = vunpack.c.l.b16 %v46
  %v90 = vunpack.c.l.b16 %v47
  %v91 = vunpack.c.l.b16 %v48
  %v92 = vunpack.c.l.b16 %v49
  %v93 = vunpack.c.l.b16 %v50
  %v94 = vpack.c.b16 %v79, %v78
  %v95 = vpack.c.b16 %v81, %v80
  %v96 = vpack.c.b16 %v83, %v82
  %v97 = vpack.c.b16 %v85, %v84
  %v98 = vpack.c.b16 %v87, %v86
  %v99 = vpack.c.b16 %v89, %v88
  %v100 = vpack.c.b16 %v91, %v90
  %v101 = vpack.c.b16 %v93, %v92
  %110 = vmatprep.subr.bf16.mxu0 0
  %111 = vmatpush1.bf16.msra.mxu0 %v101
  %112 = vmatprep.subr.bf16.mxu0 0
  %113 = vmatpush1.bf16.msra.mxu0 %v100
  %114 = vmatprep.subr.bf16.mxu0 0
  %115 = vmatpush1.bf16.msra.mxu0 %v99
  %116 = vmatprep.subr.bf16.mxu0 0
  %117 = vmatpush1.bf16.msra.mxu0 %v98
  %118 = vmatprep.subr.bf16.mxu0 0
  %119 = vmatpush1.bf16.msra.mxu0 %v97
  %120 = vmatprep.subr.bf16.mxu0 0
  %121 = vmatpush1.bf16.msra.mxu0 %v96
  %122 = vmatprep.subr.bf16.mxu0 0
  %123 = vmatpush1.bf16.msra.mxu0 %v95
  %124 = vmatprep.subr.bf16.mxu0 0
  %125 = vmatpush1.bf16.msra.mxu0 %v94
  %126 = vmatprep.subr.bf16.mxu0 0
  %127 = vmatpush2.bf16.msra.mxu0 0
  %128 = vmatprep.subr.bf16.mxu0 0
  %129 = vmatpush2.bf16.msra.mxu0 0
  %130 = vmatprep.subr.bf16.mxu0 0
  %131 = vmatpush2.bf16.msra.mxu0 0
  %132 = vmatprep.subr.bf16.mxu0 0
  %133 = vmatpush2.bf16.msra.mxu0 0
  %134 = vmatprep.subr.bf16.mxu0 0
  %135 = vmatpush2.bf16.msra.mxu0 0
  %136 = vmatprep.subr.bf16.mxu0 0
  %137 = vmatpush2.bf16.msra.mxu0 0
  %138 = vmatprep.subr.bf16.mxu0 0
  %139 = vmatpush2.bf16.msra.mxu0 0
  %140 = vmatprep.subr.bf16.mxu0 0
  %141 = vmatpush2.bf16.msra.mxu0 0
  %142 = vmatprep.mubr.bf16.mxu0 0
  %143 = vmatmul.mubr.bf16.gmra.mxu0 %v60
  %v144 = vpop.f32.mrf.mxu0
  %v145 = vadd.f32 0.0, %v144
  %v146 = vpop.f32.mrf.mxu0
  %v147 = vpop.f32.mrf.mxu0
  %v148 = vpop.f32.mrf.mxu0
  %149 = vdwg.mxu0
  %v166 = vunpack.c.l.b16 %v17
  %v167 = vunpack.c.l.b16 %v18
  %v168 = vunpack.c.l.b16 %v19
  %v169 = vunpack.c.l.b16 %v20
  %v170 = vunpack.c.l.b16 %v21
  %v171 = vunpack.c.l.b16 %v22
  %v172 = vunpack.c.l.b16 %v23
  %v173 = vunpack.c.l.b16 %v24
  %v174 = vunpack.c.l.b16 %v25
  %v175 = vunpack.c.l.b16 %v26
  %v176 = vunpack.c.l.b16 %v27
  %v177 = vunpack.c.l.b16 %v28
  %v178 = vunpack.c.l.b16 %v29
  %v179 = vunpack.c.l.b16 %v30
  %v180 = vunpack.c.l.b16 %v31
  %v181 = vunpack.c.l.b16 %v32
  %v182 = vpack.c.b16 %v167, %v166
  %v183 = vpack.c.b16 %v169, %v168
  %v184 = vpack.c.b16 %v171, %v170
  %v185 = vpack.c.b16 %v173, %v172
  %v186 = vpack.c.b16 %v175, %v174
  %v187 = vpack.c.b16 %v177, %v176
  %v188 = vpack.c.b16 %v179, %v178
  %v189 = vpack.c.b16 %v181, %v180
  %198 = vmatprep.subr.bf16.mxu0 0
  %199 = vmatpush1.bf16.msra.mxu0 %v189
  %200 = vmatprep.subr.bf16.mxu0 0
  %201 = vmatpush1.bf16.msra.mxu0 %v188
  %202 = vmatprep.subr.bf16.mxu0 0
  %203 = vmatpush1.bf16.msra.mxu0 %v187
  %204 = vmatprep.subr.bf16.mxu0 0
  %205 = vmatpush1.bf16.msra.mxu0 %v186
  %206 = vmatprep.subr.bf16.mxu0 0
  %207 = vmatpush1.bf16.msra.mxu0 %v185
  %208 = vmatprep.subr.bf16.mxu0 0
  %209 = vmatpush1.bf16.msra.mxu0 %v184
  %210 = vmatprep.subr.bf16.mxu0 0
  %211 = vmatpush1.bf16.msra.mxu0 %v183
  %212 = vmatprep.subr.bf16.mxu0 0
  %213 = vmatpush1.bf16.msra.mxu0 %v182
  %214 = vmatprep.subr.bf16.mxu0 0
  %215 = vmatpush2.bf16.msra.mxu0 0
  %216 = vmatprep.subr.bf16.mxu0 0
  %217 = vmatpush2.bf16.msra.mxu0 0
  %218 = vmatprep.subr.bf16.mxu0 0
  %219 = vmatpush2.bf16.msra.mxu0 0
  %220 = vmatprep.subr.bf16.mxu0 0
  %221 = vmatpush2.bf16.msra.mxu0 0
  %222 = vmatprep.subr.bf16.mxu0 0
  %223 = vmatpush2.bf16.msra.mxu0 0
  %224 = vmatprep.subr.bf16.mxu0 0
  %225 = vmatpush2.bf16.msra.mxu0 0
  %226 = vmatprep.subr.bf16.mxu0 0
  %227 = vmatpush2.bf16.msra.mxu0 0
  %228 = vmatprep.subr.bf16.mxu0 0
  %229 = vmatpush2.bf16.msra.mxu0 0
  %230 = vmatprep.mubr.bf16.mxu0 0
  %231 = vmatmul.mubr.bf16.gmra.mxu0 %v16
  %v232 = vpop.f32.mrf.mxu0
  %v233 = vadd.f32 %v145, %v232
  %v234 = vpop.f32.mrf.mxu0
  %v235 = vpop.f32.mrf.mxu0
  %v236 = vpop.f32.mrf.mxu0
  %237 = vdwg.mxu0
  %v238 = vld [vmem:[%s0] sm:$0x2]
  %s239 = scalar_lea.vmem %s1, 128
  %v240 = vld [vmem:[%s239] sm:$0xf]
  %v241 = vld [vmem:[%s239 + $0x4] sm:$0xf]
  %v242 = vld [vmem:[%s239 + $0x8] sm:$0xf]
  %v243 = vld [vmem:[%s239 + $0xc] sm:$0xf]
  %v244 = vld [vmem:[%s239 + $0x10] sm:$0xf]
  %v245 = vld [vmem:[%s239 + $0x14] sm:$0xf]
  %v246 = vld [vmem:[%s239 + $0x18] sm:$0xf]
  %v247 = vld [vmem:[%s239 + $0x1c] sm:$0xf]
  %v248 = vld [vmem:[%s239 + $0x20] sm:$0xf]
  %v249 = vld [vmem:[%s239 + $0x24] sm:$0xf]
  %v250 = vld [vmem:[%s239 + $0x28] sm:$0xf]
  %v251 = vld [vmem:[%s239 + $0x2c] sm:$0xf]
  %v252 = vld [vmem:[%s239 + $0x30] sm:$0xf]
  %v253 = vld [vmem:[%s239 + $0x34] sm:$0xf]
  %v254 = vld [vmem:[%s239 + $0x38] sm:$0xf]
  %v255 = vld [vmem:[%s239 + $0x3c] sm:$0xf]
  %v257 = vunpack.c.l.b16 %v238
  %v258 = vpack.c.b16 %v257, %v257
  %v259 = vrot.slane %v258, 1
  %v277 = vunpack.c.l.b16 %v240
  %v278 = vunpack.c.l.b16 %v241
  %v279 = vunpack.c.l.b16 %v242
  %v280 = vunpack.c.l.b16 %v243
  %v281 = vunpack.c.l.b16 %v244
  %v282 = vunpack.c.l.b16 %v245
  %v283 = vunpack.c.l.b16 %v246
  %v284 = vunpack.c.l.b16 %v247
  %v285 = vunpack.c.l.b16 %v248
  %v286 = vunpack.c.l.b16 %v249
  %v287 = vunpack.c.l.b16 %v250
  %v288 = vunpack.c.l.b16 %v251
  %v289 = vunpack.c.l.b16 %v252
  %v290 = vunpack.c.l.b16 %v253
  %v291 = vunpack.c.l.b16 %v254
  %v292 = vunpack.c.l.b16 %v255
  %v293 = vpack.c.b16 %v278, %v277
  %v294 = vpack.c.b16 %v280, %v279
  %v295 = vpack.c.b16 %v282, %v281
  %v296 = vpack.c.b16 %v284, %v283
  %v297 = vpack.c.b16 %v286, %v285
  %v298 = vpack.c.b16 %v288, %v287
  %v299 = vpack.c.b16 %v290, %v289
  %v300 = vpack.c.b16 %v292, %v291
  %309 = vmatprep.subr.bf16.mxu0 0
  %310 = vmatpush1.bf16.msra.mxu0 %v300
  %311 = vmatprep.subr.bf16.mxu0 0
  %312 = vmatpush1.bf16.msra.mxu0 %v299
  %313 = vmatprep.subr.bf16.mxu0 0
  %314 = vmatpush1.bf16.msra.mxu0 %v298
  %315 = vmatprep.subr.bf16.mxu0 0
  %316 = vmatpush1.bf16.msra.mxu0 %v297
  %317 = vmatprep.subr.bf16.mxu0 0
  %318 = vmatpush1.bf16.msra.mxu0 %v296
  %319 = vmatprep.subr.bf16.mxu0 0
  %320 = vmatpush1.bf16.msra.mxu0 %v295
  %321 = vmatprep.subr.bf16.mxu0 0
  %322 = vmatpush1.bf16.msra.mxu0 %v294
  %323 = vmatprep.subr.bf16.mxu0 0
  %324 = vmatpush1.bf16.msra.mxu0 %v293
  %325 = vmatprep.subr.bf16.mxu0 0
  %326 = vmatpush2.bf16.msra.mxu0 0
  %327 = vmatprep.subr.bf16.mxu0 0
  %328 = vmatpush2.bf16.msra.mxu0 0
  %329 = vmatprep.subr.bf16.mxu0 0
  %330 = vmatpush2.bf16.msra.mxu0 0
  %331 = vmatprep.subr.bf16.mxu0 0
  %332 = vmatpush2.bf16.msra.mxu0 0
  %333 = vmatprep.subr.bf16.mxu0 0
  %334 = vmatpush2.bf16.msra.mxu0 0
  %335 = vmatprep.subr.bf16.mxu0 0
  %336 = vmatpush2.bf16.msra.mxu0 0
  %337 = vmatprep.subr.bf16.mxu0 0
  %338 = vmatpush2.bf16.msra.mxu0 0
  %339 = vmatprep.subr.bf16.mxu0 0
  %340 = vmatpush2.bf16.msra.mxu0 0
  %341 = vmatprep.mubr.bf16.mxu0 0
  %342 = vmatmul.mubr.bf16.gmra.mxu0 %v259
  %v343 = vpop.f32.mrf.mxu0
  %v344 = vadd.f32 0.0, %v343
  %v345 = vpop.f32.mrf.mxu0
  %v346 = vpop.f32.mrf.mxu0
  %v347 = vpop.f32.mrf.mxu0
  %348 = vdwg.mxu0
  %v349 = vadd.f32 %v233, %v344
  %v350 = vld [vmem:[%s0] sm:$0x6]
  %s351 = scalar_lea.vmem %s1, 192
  %v352 = vld [vmem:[%s351] sm:$0xf]
  %v353 = vld [vmem:[%s351 + $0x4] sm:$0xf]
  %v354 = vld [vmem:[%s351 + $0x8] sm:$0xf]
  %v355 = vld [vmem:[%s351 + $0xc] sm:$0xf]
  %v356 = vld [vmem:[%s351 + $0x10] sm:$0xf]
  %v357 = vld [vmem:[%s351 + $0x14] sm:$0xf]
  %v358 = vld [vmem:[%s351 + $0x18] sm:$0xf]
  %v359 = vld [vmem:[%s351 + $0x1c] sm:$0xf]
  %v360 = vld [vmem:[%s351 + $0x20] sm:$0xf]
  %v361 = vld [vmem:[%s351 + $0x24] sm:$0xf]
  %v362 = vld [vmem:[%s351 + $0x28] sm:$0xf]
  %v363 = vld [vmem:[%s351 + $0x2c] sm:$0xf]
  %v364 = vld [vmem:[%s351 + $0x30] sm:$0xf]
  %v365 = vld [vmem:[%s351 + $0x34] sm:$0xf]
  %v366 = vld [vmem:[%s351 + $0x38] sm:$0xf]
  %v367 = vld [vmem:[%s351 + $0x3c] sm:$0xf]
  %v369 = vunpack.c.l.b16 %v350
  %v370 = vpack.c.b16 %v369, %v369
  %v372 = vshrl.u32 %v370, 16
  %v374 = vrot.slane %v372, 1
  %v375 = vshll.u32 %v370, 16
  %v377 = vrot.slane %v375, 2
  %v378 = vor.u32 %v374, %v377
  %v396 = vunpack.c.l.b16 %v352
  %v397 = vunpack.c.l.b16 %v353
  %v398 = vunpack.c.l.b16 %v354
  %v399 = vunpack.c.l.b16 %v355
  %v400 = vunpack.c.l.b16 %v356
  %v401 = vunpack.c.l.b16 %v357
  %v402 = vunpack.c.l.b16 %v358
  %v403 = vunpack.c.l.b16 %v359
  %v404 = vunpack.c.l.b16 %v360
  %v405 = vunpack.c.l.b16 %v361
  %v406 = vunpack.c.l.b16 %v362
  %v407 = vunpack.c.l.b16 %v363
  %v408 = vunpack.c.l.b16 %v364
  %v409 = vunpack.c.l.b16 %v365
  %v410 = vunpack.c.l.b16 %v366
  %v411 = vunpack.c.l.b16 %v367
  %v412 = vpack.c.b16 %v397, %v396
  %v413 = vpack.c.b16 %v399, %v398
  %v414 = vpack.c.b16 %v401, %v400
  %v415 = vpack.c.b16 %v403, %v402
  %v416 = vpack.c.b16 %v405, %v404
  %v417 = vpack.c.b16 %v407, %v406
  %v418 = vpack.c.b16 %v409, %v408
  %v419 = vpack.c.b16 %v411, %v410
  %428 = vmatprep.subr.bf16.mxu0 0
  %429 = vmatpush1.bf16.msra.mxu0 %v419
  %430 = vmatprep.subr.bf16.mxu0 0
  %431 = vmatpush1.bf16.msra.mxu0 %v418
  %432 = vmatprep.subr.bf16.mxu0 0
  %433 = vmatpush1.bf16.msra.mxu0 %v417
  %434 = vmatprep.subr.bf16.mxu0 0
  %435 = vmatpush1.bf16.msra.mxu0 %v416
  %436 = vmatprep.subr.bf16.mxu0 0
  %437 = vmatpush1.bf16.msra.mxu0 %v415
  %438 = vmatprep.subr.bf16.mxu0 0
  %439 = vmatpush1.bf16.msra.mxu0 %v414
  %440 = vmatprep.subr.bf16.mxu0 0
  %441 = vmatpush1.bf16.msra.mxu0 %v413
  %442 = vmatprep.subr.bf16.mxu0 0
  %443 = vmatpush1.bf16.msra.mxu0 %v412
  %444 = vmatprep.subr.bf16.mxu0 0
  %445 = vmatpush2.bf16.msra.mxu0 0
  %446 = vmatprep.subr.bf16.mxu0 0
  %447 = vmatpush2.bf16.msra.mxu0 0
  %448 = vmatprep.subr.bf16.mxu0 0
  %449 = vmatpush2.bf16.msra.mxu0 0
  %450 = vmatprep.subr.bf16.mxu0 0
  %451 = vmatpush2.bf16.msra.mxu0 0
  %452 = vmatprep.subr.bf16.mxu0 0
  %453 = vmatpush2.bf16.msra.mxu0 0
  %454 = vmatprep.subr.bf16.mxu0 0
  %455 = vmatpush2.bf16.msra.mxu0 0
  %456 = vmatprep.subr.bf16.mxu0 0
  %457 = vmatpush2.bf16.msra.mxu0 0
  %458 = vmatprep.subr.bf16.mxu0 0
  %459 = vmatpush2.bf16.msra.mxu0 0
  %460 = vmatprep.mubr.bf16.mxu0 0
  %461 = vmatmul.mubr.bf16.gmra.mxu0 %v378
  %v462 = vpop.f32.mrf.mxu0
  %v463 = vadd.f32 0.0, %v462
  %v464 = vpop.f32.mrf.mxu0
  %v465 = vpop.f32.mrf.mxu0
  %v466 = vpop.f32.mrf.mxu0
  %467 = vdwg.mxu0
  %v468 = vadd.f32 %v349, %v463
  %v470 = vlaneseq
  %v471 = vshrl.u32 %v470, 7
  %v472 = vsub.s32 0, %v471
  %v473 = vrot.slane %v15, %v472
  %v475 = vadd.f32 %v468, %v473
  %vm476 = vcmp.gt.f32.partialorder %v475, 0.0
  %v477 = vmul.f32 %v475, 0.2
  %v478 = vsel %vm476, %v475, %v477
  %v479 = vpack.c.bf16 %v478, %v478
  %480 = vst [vmem:[%s3] sm:$0x1] %v479
  %s481 = scalar_lea.vmem %s0, 4
  %v482 = vld [vmem:[%s481] sm:$0x1]
  %v483 = vld [vmem:[%s1] sm:$0xf]
  %v484 = vld [vmem:[%s1 + $0x4] sm:$0xf]
  %v485 = vld [vmem:[%s1 + $0x8] sm:$0xf]
  %v486 = vld [vmem:[%s1 + $0xc] sm:$0xf]
  %v487 = vld [vmem:[%s1 + $0x10] sm:$0xf]
  %v488 = vld [vmem:[%s1 + $0x14] sm:$0xf]
  %v489 = vld [vmem:[%s1 + $0x18] sm:$0xf]
  %v490 = vld [vmem:[%s1 + $0x1c] sm:$0xf]
  %v491 = vld [vmem:[%s1 + $0x20] sm:$0xf]
  %v492 = vld [vmem:[%s1 + $0x24] sm:$0xf]
  %v493 = vld [vmem:[%s1 + $0x28] sm:$0xf]
  %v494 = vld [vmem:[%s1 + $0x2c] sm:$0xf]
  %v495 = vld [vmem:[%s1 + $0x30] sm:$0xf]
  %v496 = vld [vmem:[%s1 + $0x34] sm:$0xf]
  %v497 = vld [vmem:[%s1 + $0x38] sm:$0xf]
  %v498 = vld [vmem:[%s1 + $0x3c] sm:$0xf]
  %v499 = vld [vmem:[%s481] sm:$0x3]
  %v500 = vld [vmem:[%s34] sm:$0xf]
  %v501 = vld [vmem:[%s34 + $0x4] sm:$0xf]
  %v502 = vld [vmem:[%s34 + $0x8] sm:$0xf]
  %v503 = vld [vmem:[%s34 + $0xc] sm:$0xf]
  %v504 = vld [vmem:[%s34 + $0x10] sm:$0xf]
  %v505 = vld [vmem:[%s34 + $0x14] sm:$0xf]
  %v506 = vld [vmem:[%s34 + $0x18] sm:$0xf]
  %v507 = vld [vmem:[%s34 + $0x1c] sm:$0xf]
  %v508 = vld [vmem:[%s34 + $0x20] sm:$0xf]
  %v509 = vld [vmem:[%s34 + $0x24] sm:$0xf]
  %v510 = vld [vmem:[%s34 + $0x28] sm:$0xf]
  %v511 = vld [vmem:[%s34 + $0x2c] sm:$0xf]
  %v512 = vld [vmem:[%s34 + $0x30] sm:$0xf]
  %v513 = vld [vmem:[%s34 + $0x34] sm:$0xf]
  %v514 = vld [vmem:[%s34 + $0x38] sm:$0xf]
  %v515 = vld [vmem:[%s34 + $0x3c] sm:$0xf]
  %v517 = vunpack.c.l.b16 %v499
  %v518 = vpack.c.b16 %v517, %v517
  %v520 = vshrl.u32 %v518, 16
  %v522 = vshll.u32 %v518, 16
  %v524 = vrot.slane %v522, 1
  %v525 = vor.u32 %v520, %v524
  %v543 = vunpack.c.l.b16 %v500
  %v544 = vunpack.c.l.b16 %v501
  %v545 = vunpack.c.l.b16 %v502
  %v546 = vunpack.c.l.b16 %v503
  %v547 = vunpack.c.l.b16 %v504
  %v548 = vunpack.c.l.b16 %v505
  %v549 = vunpack.c.l.b16 %v506
  %v550 = vunpack.c.l.b16 %v507
  %v551 = vunpack.c.l.b16 %v508
  %v552 = vunpack.c.l.b16 %v509
  %v553 = vunpack.c.l.b16 %v510
  %v554 = vunpack.c.l.b16 %v511
  %v555 = vunpack.c.l.b16 %v512
  %v556 = vunpack.c.l.b16 %v513
  %v557 = vunpack.c.l.b16 %v514
  %v558 = vunpack.c.l.b16 %v515
  %v559 = vpack.c.b16 %v544, %v543
  %v560 = vpack.c.b16 %v546, %v545
  %v561 = vpack.c.b16 %v548, %v547
  %v562 = vpack.c.b16 %v550, %v549
  %v563 = vpack.c.b16 %v552, %v551
  %v564 = vpack.c.b16 %v554, %v553
  %v565 = vpack.c.b16 %v556, %v555
  %v566 = vpack.c.b16 %v558, %v557
  %575 = vmatprep.subr.bf16.mxu0 0
  %576 = vmatpush1.bf16.msra.mxu0 %v566
  %577 = vmatprep.subr.bf16.mxu0 0
  %578 = vmatpush1.bf16.msra.mxu0 %v565
  %579 = vmatprep.subr.bf16.mxu0 0
  %580 = vmatpush1.bf16.msra.mxu0 %v564
  %581 = vmatprep.subr.bf16.mxu0 0
  %582 = vmatpush1.bf16.msra.mxu0 %v563
  %583 = vmatprep.subr.bf16.mxu0 0
  %584 = vmatpush1.bf16.msra.mxu0 %v562
  %585 = vmatprep.subr.bf16.mxu0 0
  %586 = vmatpush1.bf16.msra.mxu0 %v561
  %587 = vmatprep.subr.bf16.mxu0 0
  %588 = vmatpush1.bf16.msra.mxu0 %v560
  %589 = vmatprep.subr.bf16.mxu0 0
  %590 = vmatpush1.bf16.msra.mxu0 %v559
  %591 = vmatprep.subr.bf16.mxu0 0
  %592 = vmatpush2.bf16.msra.mxu0 0
  %593 = vmatprep.subr.bf16.mxu0 0
  %594 = vmatpush2.bf16.msra.mxu0 0
  %595 = vmatprep.subr.bf16.mxu0 0
  %596 = vmatpush2.bf16.msra.mxu0 0
  %597 = vmatprep.subr.bf16.mxu0 0
  %598 = vmatpush2.bf16.msra.mxu0 0
  %599 = vmatprep.subr.bf16.mxu0 0
  %600 = vmatpush2.bf16.msra.mxu0 0
  %601 = vmatprep.subr.bf16.mxu0 0
  %602 = vmatpush2.bf16.msra.mxu0 0
  %603 = vmatprep.subr.bf16.mxu0 0
  %604 = vmatpush2.bf16.msra.mxu0 0
  %605 = vmatprep.subr.bf16.mxu0 0
  %606 = vmatpush2.bf16.msra.mxu0 0
  %607 = vmatprep.mubr.bf16.mxu0 0
  %608 = vmatmul.mubr.bf16.gmra.mxu0 %v525
  %v609 = vpop.f32.mrf.mxu0
  %v610 = vadd.f32 0.0, %v609
  %v611 = vpop.f32.mrf.mxu0
  %v612 = vpop.f32.mrf.mxu0
  %v613 = vpop.f32.mrf.mxu0
  %614 = vdwg.mxu0
  %v631 = vunpack.c.l.b16 %v483
  %v632 = vunpack.c.l.b16 %v484
  %v633 = vunpack.c.l.b16 %v485
  %v634 = vunpack.c.l.b16 %v486
  %v635 = vunpack.c.l.b16 %v487
  %v636 = vunpack.c.l.b16 %v488
  %v637 = vunpack.c.l.b16 %v489
  %v638 = vunpack.c.l.b16 %v490
  %v639 = vunpack.c.l.b16 %v491
  %v640 = vunpack.c.l.b16 %v492
  %v641 = vunpack.c.l.b16 %v493
  %v642 = vunpack.c.l.b16 %v494
  %v643 = vunpack.c.l.b16 %v495
  %v644 = vunpack.c.l.b16 %v496
  %v645 = vunpack.c.l.b16 %v497
  %v646 = vunpack.c.l.b16 %v498
  %v647 = vpack.c.b16 %v632, %v631
  %v648 = vpack.c.b16 %v634, %v633
  %v649 = vpack.c.b16 %v636, %v635
  %v650 = vpack.c.b16 %v638, %v637
  %v651 = vpack.c.b16 %v640, %v639
  %v652 = vpack.c.b16 %v642, %v641
  %v653 = vpack.c.b16 %v644, %v643
  %v654 = vpack.c.b16 %v646, %v645
  %663 = vmatprep.subr.bf16.mxu0 0
  %664 = vmatpush1.bf16.msra.mxu0 %v654
  %665 = vmatprep.subr.bf16.mxu0 0
  %666 = vmatpush1.bf16.msra.mxu0 %v653
  %667 = vmatprep.subr.bf16.mxu0 0
  %668 = vmatpush1.bf16.msra.mxu0 %v652
  %669 = vmatprep.subr.bf16.mxu0 0
  %670 = vmatpush1.bf16.msra.mxu0 %v651
  %671 = vmatprep.subr.bf16.mxu0 0
  %672 = vmatpush1.bf16.msra.mxu0 %v650
  %673 = vmatprep.subr.bf16.mxu0 0
  %674 = vmatpush1.bf16.msra.mxu0 %v649
  %675 = vmatprep.subr.bf16.mxu0 0
  %676 = vmatpush1.bf16.msra.mxu0 %v648
  %677 = vmatprep.subr.bf16.mxu0 0
  %678 = vmatpush1.bf16.msra.mxu0 %v647
  %679 = vmatprep.subr.bf16.mxu0 0
  %680 = vmatpush2.bf16.msra.mxu0 0
  %681 = vmatprep.subr.bf16.mxu0 0
  %682 = vmatpush2.bf16.msra.mxu0 0
  %683 = vmatprep.subr.bf16.mxu0 0
  %684 = vmatpush2.bf16.msra.mxu0 0
  %685 = vmatprep.subr.bf16.mxu0 0
  %686 = vmatpush2.bf16.msra.mxu0 0
  %687 = vmatprep.subr.bf16.mxu0 0
  %688 = vmatpush2.bf16.msra.mxu0 0
  %689 = vmatprep.subr.bf16.mxu0 0
  %690 = vmatpush2.bf16.msra.mxu0 0
  %691 = vmatprep.subr.bf16.mxu0 0
  %692 = vmatpush2.bf16.msra.mxu0 0
  %693 = vmatprep.subr.bf16.mxu0 0
  %694 = vmatpush2.bf16.msra.mxu0 0
  %695 = vmatprep.mubr.bf16.mxu0 0
  %696 = vmatmul.mubr.bf16.gmra.mxu0 %v482
  %v697 = vpop.f32.mrf.mxu0
  %v698 = vadd.f32 %v610, %v697
  %v699 = vpop.f32.mrf.mxu0
  %v700 = vpop.f32.mrf.mxu0
  %v701 = vpop.f32.mrf.mxu0
  %702 = vdwg.mxu0
  %v703 = vld [vmem:[%s481] sm:$0x2]
  %v704 = vld [vmem:[%s239] sm:$0xf]
  %v705 = vld [vmem:[%s239 + $0x4] sm:$0xf]
  %v706 = vld [vmem:[%s239 + $0x8] sm:$0xf]
  %v707 = vld [vmem:[%s239 + $0xc] sm:$0xf]
  %v708 = vld [vmem:[%s239 + $0x10] sm:$0xf]
  %v709 = vld [vmem:[%s239 + $0x14] sm:$0xf]
  %v710 = vld [vmem:[%s239 + $0x18] sm:$0xf]
  %v711 = vld [vmem:[%s239 + $0x1c] sm:$0xf]
  %v712 = vld [vmem:[%s239 + $0x20] sm:$0xf]
  %v713 = vld [vmem:[%s239 + $0x24] sm:$0xf]
  %v714 = vld [vmem:[%s239 + $0x28] sm:$0xf]
  %v715 = vld [vmem:[%s239 + $0x2c] sm:$0xf]
  %v716 = vld [vmem:[%s239 + $0x30] sm:$0xf]
  %v717 = vld [vmem:[%s239 + $0x34] sm:$0xf]
  %v718 = vld [vmem:[%s239 + $0x38] sm:$0xf]
  %v719 = vld [vmem:[%s239 + $0x3c] sm:$0xf]
  %v721 = vunpack.c.l.b16 %v703
  %v722 = vpack.c.b16 %v721, %v721
  %v723 = vrot.slane %v722, 1
  %v741 = vunpack.c.l.b16 %v704
  %v742 = vunpack.c.l.b16 %v705
  %v743 = vunpack.c.l.b16 %v706
  %v744 = vunpack.c.l.b16 %v707
  %v745 = vunpack.c.l.b16 %v708
  %v746 = vunpack.c.l.b16 %v709
  %v747 = vunpack.c.l.b16 %v710
  %v748 = vunpack.c.l.b16 %v711
  %v749 = vunpack.c.l.b16 %v712
  %v750 = vunpack.c.l.b16 %v713
  %v751 = vunpack.c.l.b16 %v714
  %v752 = vunpack.c.l.b16 %v715
  %v753 = vunpack.c.l.b16 %v716
  %v754 = vunpack.c.l.b16 %v717
  %v755 = vunpack.c.l.b16 %v718
  %v756 = vunpack.c.l.b16 %v719
  %v757 = vpack.c.b16 %v742, %v741
  %v758 = vpack.c.b16 %v744, %v743
  %v759 = vpack.c.b16 %v746, %v745
  %v760 = vpack.c.b16 %v748, %v747
  %v761 = vpack.c.b16 %v750, %v749
  %v762 = vpack.c.b16 %v752, %v751
  %v763 = vpack.c.b16 %v754, %v753
  %v764 = vpack.c.b16 %v756, %v755
  %773 = vmatprep.subr.bf16.mxu0 0
  %774 = vmatpush1.bf16.msra.mxu0 %v764
  %775 = vmatprep.subr.bf16.mxu0 0
  %776 = vmatpush1.bf16.msra.mxu0 %v763
  %777 = vmatprep.subr.bf16.mxu0 0
  %778 = vmatpush1.bf16.msra.mxu0 %v762
  %779 = vmatprep.subr.bf16.mxu0 0
  %780 = vmatpush1.bf16.msra.mxu0 %v761
  %781 = vmatprep.subr.bf16.mxu0 0
  %782 = vmatpush1.bf16.msra.mxu0 %v760
  %783 = vmatprep.subr.bf16.mxu0 0
  %784 = vmatpush1.bf16.msra.mxu0 %v759
  %785 = vmatprep.subr.bf16.mxu0 0
  %786 = vmatpush1.bf16.msra.mxu0 %v758
  %787 = vmatprep.subr.bf16.mxu0 0
  %788 = vmatpush1.bf16.msra.mxu0 %v757
  %789 = vmatprep.subr.bf16.mxu0 0
  %790 = vmatpush2.bf16.msra.mxu0 0
  %791 = vmatprep.subr.bf16.mxu0 0
  %792 = vmatpush2.bf16.msra.mxu0 0
  %793 = vmatprep.subr.bf16.mxu0 0
  %794 = vmatpush2.bf16.msra.mxu0 0
  %795 = vmatprep.subr.bf16.mxu0 0
  %796 = vmatpush2.bf16.msra.mxu0 0
  %797 = vmatprep.subr.bf16.mxu0 0
  %798 = vmatpush2.bf16.msra.mxu0 0
  %799 = vmatprep.subr.bf16.mxu0 0
  %800 = vmatpush2.bf16.msra.mxu0 0
  %801 = vmatprep.subr.bf16.mxu0 0
  %802 = vmatpush2.bf16.msra.mxu0 0
  %803 = vmatprep.subr.bf16.mxu0 0
  %804 = vmatpush2.bf16.msra.mxu0 0
  %805 = vmatprep.mubr.bf16.mxu0 0
  %806 = vmatmul.mubr.bf16.gmra.mxu0 %v723
  %v807 = vpop.f32.mrf.mxu0
  %v808 = vadd.f32 0.0, %v807
  %v809 = vpop.f32.mrf.mxu0
  %v810 = vpop.f32.mrf.mxu0
  %v811 = vpop.f32.mrf.mxu0
  %812 = vdwg.mxu0
  %v813 = vadd.f32 %v698, %v808
  %v814 = vld [vmem:[%s481] sm:$0x6]
  %v815 = vld [vmem:[%s351] sm:$0xf]
  %v816 = vld [vmem:[%s351 + $0x4] sm:$0xf]
  %v817 = vld [vmem:[%s351 + $0x8] sm:$0xf]
  %v818 = vld [vmem:[%s351 + $0xc] sm:$0xf]
  %v819 = vld [vmem:[%s351 + $0x10] sm:$0xf]
  %v820 = vld [vmem:[%s351 + $0x14] sm:$0xf]
  %v821 = vld [vmem:[%s351 + $0x18] sm:$0xf]
  %v822 = vld [vmem:[%s351 + $0x1c] sm:$0xf]
  %v823 = vld [vmem:[%s351 + $0x20] sm:$0xf]
  %v824 = vld [vmem:[%s351 + $0x24] sm:$0xf]
  %v825 = vld [vmem:[%s351 + $0x28] sm:$0xf]
  %v826 = vld [vmem:[%s351 + $0x2c] sm:$0xf]
  %v827 = vld [vmem:[%s351 + $0x30] sm:$0xf]
  %v828 = vld [vmem:[%s351 + $0x34] sm:$0xf]
  %v829 = vld [vmem:[%s351 + $0x38] sm:$0xf]
  %v830 = vld [vmem:[%s351 + $0x3c] sm:$0xf]
  %v832 = vunpack.c.l.b16 %v814
  %v833 = vpack.c.b16 %v832, %v832
  %v835 = vshrl.u32 %v833, 16
  %v837 = vrot.slane %v835, 1
  %v838 = vshll.u32 %v833, 16
  %v840 = vrot.slane %v838, 2
  %v841 = vor.u32 %v837, %v840
  %v859 = vunpack.c.l.b16 %v815
  %v860 = vunpack.c.l.b16 %v816
  %v861 = vunpack.c.l.b16 %v817
  %v862 = vunpack.c.l.b16 %v818
  %v863 = vunpack.c.l.b16 %v819
  %v864 = vunpack.c.l.b16 %v820
  %v865 = vunpack.c.l.b16 %v821
  %v866 = vunpack.c.l.b16 %v822
  %v867 = vunpack.c.l.b16 %v823
  %v868 = vunpack.c.l.b16 %v824
  %v869 = vunpack.c.l.b16 %v825
  %v870 = vunpack.c.l.b16 %v826
  %v871 = vunpack.c.l.b16 %v827
  %v872 = vunpack.c.l.b16 %v828
  %v873 = vunpack.c.l.b16 %v829
  %v874 = vunpack.c.l.b16 %v830
  %v875 = vpack.c.b16 %v860, %v859
  %v876 = vpack.c.b16 %v862, %v861
  %v877 = vpack.c.b16 %v864, %v863
  %v878 = vpack.c.b16 %v866, %v865
  %v879 = vpack.c.b16 %v868, %v867
  %v880 = vpack.c.b16 %v870, %v869
  %v881 = vpack.c.b16 %v872, %v871
  %v882 = vpack.c.b16 %v874, %v873
  %891 = vmatprep.subr.bf16.mxu0 0
  %892 = vmatpush1.bf16.msra.mxu0 %v882
  %893 = vmatprep.subr.bf16.mxu0 0
  %894 = vmatpush1.bf16.msra.mxu0 %v881
  %895 = vmatprep.subr.bf16.mxu0 0
  %896 = vmatpush1.bf16.msra.mxu0 %v880
  %897 = vmatprep.subr.bf16.mxu0 0
  %898 = vmatpush1.bf16.msra.mxu0 %v879
  %899 = vmatprep.subr.bf16.mxu0 0
  %900 = vmatpush1.bf16.msra.mxu0 %v878
  %901 = vmatprep.subr.bf16.mxu0 0
  %902 = vmatpush1.bf16.msra.mxu0 %v877
  %903 = vmatprep.subr.bf16.mxu0 0
  %904 = vmatpush1.bf16.msra.mxu0 %v876
  %905 = vmatprep.subr.bf16.mxu0 0
  %906 = vmatpush1.bf16.msra.mxu0 %v875
  %907 = vmatprep.subr.bf16.mxu0 0
  %908 = vmatpush2.bf16.msra.mxu0 0
  %909 = vmatprep.subr.bf16.mxu0 0
  %910 = vmatpush2.bf16.msra.mxu0 0
  %911 = vmatprep.subr.bf16.mxu0 0
  %912 = vmatpush2.bf16.msra.mxu0 0
  %913 = vmatprep.subr.bf16.mxu0 0
  %914 = vmatpush2.bf16.msra.mxu0 0
  %915 = vmatprep.subr.bf16.mxu0 0
  %916 = vmatpush2.bf16.msra.mxu0 0
  %917 = vmatprep.subr.bf16.mxu0 0
  %918 = vmatpush2.bf16.msra.mxu0 0
  %919 = vmatprep.subr.bf16.mxu0 0
  %920 = vmatpush2.bf16.msra.mxu0 0
  %921 = vmatprep.subr.bf16.mxu0 0
  %922 = vmatpush2.bf16.msra.mxu0 0
  %923 = vmatprep.mubr.bf16.mxu0 0
  %924 = vmatmul.mubr.bf16.gmra.mxu0 %v841
  %v925 = vpop.f32.mrf.mxu0
  %v926 = vadd.f32 0.0, %v925
  %v927 = vpop.f32.mrf.mxu0
  %v928 = vpop.f32.mrf.mxu0
  %v929 = vpop.f32.mrf.mxu0
  %930 = vdwg.mxu0
  %v931 = vadd.f32 %v813, %v926
  %v932 = vadd.f32 %v931, %v473
  %vm933 = vcmp.gt.f32.partialorder %v932, 0.0
  %v934 = vmul.f32 %v932, 0.2
  %v935 = vsel %vm933, %v932, %v934
  %v936 = vpack.c.bf16 %v935, %v935
  %s937 = scalar_lea.vmem %s3, 1
  %938 = vst [vmem:[%s937] sm:$0x1] %v936
  // Predicated region
  $region14: #{feature_extractor_forward.7} parent=0 // pred_check
    _
  $region15: #{feature_extractor_forward.7} parent=0 // pred_check_branch
    %940 = sbr.rel (0) target = $region17
  $region16: #{feature_extractor_forward.7} parent=0 // pred_region
    _
  $region17: #{feature_extractor_forward.7} parent=0 // pred_fallthru
    _
  // Predicated region
  $region18: #{feature_extractor_forward.7} parent=0 // pred_check
    _
  $region19: #{feature_extractor_forward.7} parent=0 // pred_check_branch
    %942 = sbr.rel (0) target = $region21
  $region20: #{feature_extractor_forward.7} parent=0 // pred_region
    _
  $region21: #{feature_extractor_forward.7} parent=0 // pred_fallthru
    _

</llo_original>
